<compile_context>
chip_gen: v7x
topology: tpu7x:2x2x1
jax: 0.10.0
libtpu: 0.0.40
codegen_flags: <defaults>
</compile_context>

<pallas_src>
import functools
import math

import jax
import jax.numpy as jnp
from jax.experimental import pallas as pl
from jax.experimental.pallas import tpu as pltpu


# ----------------------------- small helpers ------------------------------

def _round_up(x, m):
    return (x + m - 1) // m * m


def _m_tiling(M):
    """Pick (tm, Mp): tm multiple of 8, ~<=128, Mp = tm * ntiles >= M, minimal padding."""
    ntiles = -(-M // 128)
    tm = _round_up(-(-M // ntiles), 8)
    return tm, tm * ntiles


def _pad_rows(a, Mp):
    M = a.shape[0]
    return a if M == Mp else jnp.pad(a, ((0, Mp - M), (0, 0)))


# ----------------------------- Pallas kernels ------------------------------

def _mlp_head_kernel(x_ref, w1_ref, b1_ref, w2_ref, b2_ref, o_ref, *, epilogue, n_real):
    """o = epilogue(relu(x @ w1 + b1) @ w2 + b2); epilogue in {none, logsoftmax}."""
    h = jnp.dot(x_ref[...], w1_ref[...], preferred_element_type=jnp.float32)
    h = jnp.maximum(h + b1_ref[...], 0.0)
    z = jnp.dot(h.astype(jnp.bfloat16), w2_ref[...], preferred_element_type=jnp.float32)
    z = z + b2_ref[...]
    if epilogue == "logsoftmax":
        col = jax.lax.broadcasted_iota(jnp.int32, z.shape, 1)
        z = jnp.where(col < n_real, z, -1e30)          # mask lane padding
        m = jnp.max(z, axis=-1, keepdims=True)
        s = z - m
        z = s - jnp.log(jnp.sum(jnp.exp(s), axis=-1, keepdims=True))
    o_ref[...] = z


def _conv_pool_relu_kernel(p00_ref, p01_ref, p10_ref, p11_ref, w_ref, b_ref, o_ref):
    """Fused im2col-conv + 2x2 max pool + ReLU.

    Each p{di}{dj} holds the im2col patches of the conv outputs in pooling
    quadrant (di, dj); max over the 4 matmul results == max pool of the conv.
    """
    w = w_ref[...]

    def mm(p_ref):
        return jnp.dot(p_ref[...], w, preferred_element_type=jnp.float32)

    m = jnp.maximum(jnp.maximum(mm(p00_ref), mm(p01_ref)),
                    jnp.maximum(mm(p10_ref), mm(p11_ref)))
    o_ref[...] = jnp.maximum(m + b_ref[...], 0.0)


def _grid_sample_kernel(xt_ref, idx_ref, wgt_ref, o_ref):
    """4-tap bilinear sample of one image.

    xt_ref : (1, W, H)  image transposed (X^T)
    idx_ref: (1, 4, HW) int32 rows = [y0, y1, x0, x1] (clipped)
    wgt_ref: (1, 4, HW) f32   rows = [wy0, wy1, wx0, wx1] (validity folded in)
    o_ref  : (1, 1, HW)
    """
    xt = xt_ref[0]                      # (W, H)
    idx = idx_ref[0]                    # (4, HW)
    wgt = wgt_ref[0]                    # (4, HW)
    Wd, Hd = xt.shape
    HW = idx.shape[1]

    r_iota = jax.lax.broadcasted_iota(jnp.int32, (Hd, HW), 0)
    c_iota = jax.lax.broadcasted_iota(jnp.int32, (Wd, HW), 0)

    # Row blend: rt[r, p] = wy0[p]*[y0[p]==r] + wy1[p]*[y1[p]==r]
    rt = (wgt[0:1] * (r_iota == idx[0:1]).astype(jnp.float32)
          + wgt[1:2] * (r_iota == idx[1:2]).astype(jnp.float32))      # (H, HW)
    # Col blend: ct[c, p] = wx0[p]*[x0[p]==c] + wx1[p]*[x1[p]==c]
    ct = (wgt[2:3] * (c_iota == idx[2:3]).astype(jnp.float32)
          + wgt[3:4] * (c_iota == idx[3:4]).astype(jnp.float32))      # (W, HW)

    # gt[c, p] = sum_r X[r, c] * rt[r, p]
    gt = jnp.dot(xt, rt, preferred_element_type=jnp.float32)          # (W, HW)
    o_ref[0] = jnp.sum(ct * gt, axis=0, keepdims=True)                # (1, HW)


# ----------------------------- wrappers ------------------------------

def mlp_head(x, w1, b1, w2, b2, epilogue="none"):
    """epilogue(relu(x @ w1.T + b1) @ w2.T + b2); PyTorch (out, in) weight layout."""
    M, K1 = x.shape
    N1 = w1.shape[0]
    N2 = w2.shape[0]
    N1p = _round_up(N1, 128)
    N2p = _round_up(N2, 128)
    tm, Mp = _m_tiling(M)

    a = _pad_rows(x.astype(jnp.float32), Mp).astype(jnp.bfloat16)
    w1m = jnp.pad(w1.T.astype(jnp.float32), ((0, 0), (0, N1p - N1))).astype(jnp.bfloat16)
    b1v = jnp.pad(b1.astype(jnp.float32), (0, N1p - N1)).reshape(1, N1p)
    w2m = jnp.pad(w2.T.astype(jnp.float32),
                  ((0, N1p - N1), (0, N2p - N2))).astype(jnp.bfloat16)
    b2v = jnp.pad(b2.astype(jnp.float32), (0, N2p - N2)).reshape(1, N2p)

    kernel = functools.partial(_mlp_head_kernel, epilogue=epilogue, n_real=N2)
    out = pl.pallas_call(
        kernel,
        out_shape=jax.ShapeDtypeStruct((Mp, N2p), jnp.float32),
        grid=(Mp // tm,),
        in_specs=[pl.BlockSpec((tm, K1), lambda i: (i, 0)),
                  pl.BlockSpec((K1, N1p), lambda i: (0, 0)),
                  pl.BlockSpec((1, N1p), lambda i: (0, 0)),
                  pl.BlockSpec((N1p, N2p), lambda i: (0, 0)),
                  pl.BlockSpec((1, N2p), lambda i: (0, 0))],
        out_specs=pl.BlockSpec((tm, N2p), lambda i: (i, 0)),
        compiler_params=pltpu.CompilerParams(dimension_semantics=("parallel",)),
    )(a, w1m, b1v, w2m, b2v)
    return out[:M, :N2]


def conv_pool_relu(x_nhwc, w_oihw, bias):
    """relu(max_pool2d(conv2d(x), 2)) for NHWC input; stride-1 valid conv."""
    N, H, W, Cin = x_nhwc.shape
    Cout, Cin2, KH, KW = w_oihw.shape
    assert Cin == Cin2
    OH, OW = H - KH + 1, W - KW + 1
    PH, PW = OH // 2, OW // 2
    K = KH * KW * Cin
    M = N * PH * PW

    def quad(di, dj):
        cols = []
        for i in range(KH):
            for j in range(KW):
                cols.append(x_nhwc[:, di + i:di + i + 2 * PH:2,
                                   dj + j:dj + j + 2 * PW:2, :])
        p = jnp.concatenate(cols, axis=-1).reshape(M, K)
        return p.astype(jnp.bfloat16)

    tm, Mp = _m_tiling(M)
    quads = [_pad_rows(quad(di, dj), Mp) for di in (0, 1) for dj in (0, 1)]

    Np = _round_up(Cout, 128)
    wmat = jnp.transpose(w_oihw, (2, 3, 1, 0)).reshape(K, Cout)
    wmat = jnp.pad(wmat.astype(jnp.float32), ((0, 0), (0, Np - Cout))).astype(jnp.bfloat16)
    b2 = jnp.pad(bias.astype(jnp.float32), (0, Np - Cout)).reshape(1, Np)

    a_spec = pl.BlockSpec((tm, K), lambda i: (i, 0))
    out = pl.pallas_call(
        _conv_pool_relu_kernel,
        out_shape=jax.ShapeDtypeStruct((Mp, Np), jnp.float32),
        grid=(Mp // tm,),
        in_specs=[a_spec, a_spec, a_spec, a_spec,
                  pl.BlockSpec((K, Np), lambda i: (0, 0)),
                  pl.BlockSpec((1, Np), lambda i: (0, 0))],
        out_specs=pl.BlockSpec((tm, Np), lambda i: (i, 0)),
        compiler_params=pltpu.CompilerParams(dimension_semantics=("parallel",)),
    )(*quads, wmat, b2)
    return out[:M, :Cout].reshape(N, PH, PW, Cout)


def _bilinear_tap_data(theta, H, W):
    """Per-pixel 4-tap indices/weights for F.affine_grid + F.grid_sample
    (zeros padding, align_corners=False).  Returns idx:(B,4,HW) i32, wgt:(B,4,HW) f32."""
    HW = H * W
    xs = (2.0 * jnp.arange(W, dtype=jnp.float32) + 1.0) / W - 1.0
    ys = (2.0 * jnp.arange(H, dtype=jnp.float32) + 1.0) / H - 1.0
    gy, gx = jnp.meshgrid(ys, xs, indexing="ij")
    base = jnp.stack([gx.ravel(), gy.ravel(), jnp.ones(HW, jnp.float32)], axis=-1)
    src = jnp.einsum("pk,bjk->bpj", base, theta)          # (B,HW,2): [x, y]
    ix = (src[..., 0] + 1.0) * W / 2.0 - 0.5
    iy = (src[..., 1] + 1.0) * H / 2.0 - 0.5
    x0 = jnp.floor(ix)
    y0 = jnp.floor(iy)
    wx1 = ix - x0
    wx0 = 1.0 - wx1
    wy1 = iy - y0
    wy0 = 1.0 - wy1

    def prep(v, w, n):
        valid = (v >= 0) & (v <= n - 1)
        return jnp.clip(v, 0, n - 1).astype(jnp.int32), w * valid.astype(jnp.float32)

    y0c, wy0v = prep(y0, wy0, H)
    y1c, wy1v = prep(y0 + 1.0, wy1, H)
    x0c, wx0v = prep(x0, wx0, W)
    x1c, wx1v = prep(x0 + 1.0, wx1, W)
    idx = jnp.stack([y0c, y1c, x0c, x1c], axis=1)
    wgt = jnp.stack([wy0v, wy1v, wx0v, wx1v], axis=1)
    return idx, wgt


def grid_sample(x_nchw, theta):
    """F.grid_sample(x, F.affine_grid(theta, x.size())) — one pallas_call, grid=(B,)."""
    B, C, H, W = x_nchw.shape
    assert C == 1
    HW = H * W
    idx, wgt = _bilinear_tap_data(theta, H, W)
    xt = jnp.transpose(x_nchw[:, 0], (0, 2, 1)).astype(jnp.float32)   # (B, W, H) = X^T

    out = pl.pallas_call(
        _grid_sample_kernel,
        out_shape=jax.ShapeDtypeStruct((B, 1, HW), jnp.float32),
        grid=(B,),
        in_specs=[pl.BlockSpec((1, W, H), lambda b: (b, 0, 0)),
                  pl.BlockSpec((1, 4, HW), lambda b: (b, 0, 0)),
                  pl.BlockSpec((1, 4, HW), lambda b: (b, 0, 0))],
        out_specs=pl.BlockSpec((1, 1, HW), lambda b: (b, 0, 0)),
        compiler_params=pltpu.CompilerParams(dimension_semantics=("parallel",)),
    )(xt, idx, wgt)
    return out.reshape(B, 1, H, W)


# ----------------------------- the network ------------------------------

def init_params(key):
    ks = jax.random.split(key, 14)

    def uni(k, shape, bound):
        return jax.random.uniform(k, shape, jnp.float32, -bound, bound)

    def conv_init(kw, kb, cout, cin, ksz):
        b = 1.0 / math.sqrt(cin * ksz * ksz)
        return uni(kw, (cout, cin, ksz, ksz), b), uni(kb, (cout,), b)

    def lin_init(kw, kb, out_f, in_f):
        b = 1.0 / math.sqrt(in_f)
        return uni(kw, (out_f, in_f), b), uni(kb, (out_f,), b)

    p = {}
    p["conv1_w"], p["conv1_b"] = conv_init(ks[0], ks[1], 10, 1, 5)
    p["conv2_w"], p["conv2_b"] = conv_init(ks[2], ks[3], 20, 10, 5)
    p["fc1_w"], p["fc1_b"] = lin_init(ks[4], ks[5], 50, 320)
    p["fc2_w"], p["fc2_b"] = lin_init(ks[6], ks[7], 10, 50)
    p["loc1_w"], p["loc1_b"] = conv_init(ks[8], ks[9], 8, 1, 7)
    p["loc2_w"], p["loc2_b"] = conv_init(ks[10], ks[11], 10, 8, 5)
    p["fcloc1_w"], p["fcloc1_b"] = lin_init(ks[12], ks[13], 32, 90)
    # fc_loc[2]: weight zeroed, bias = identity affine (as in the PyTorch __init__)
    p["fcloc2_w"] = jnp.zeros((6, 32), jnp.float32)
    p["fcloc2_b"] = jnp.array([1, 0, 0, 0, 1, 0], jnp.float32)
    return p


def get_theta(params, x_nchw):
    x = jnp.transpose(x_nchw, (0, 2, 3, 1))                          # NHWC (B,28,28,1)
    x = conv_pool_relu(x, params["loc1_w"], params["loc1_b"])        # (B,11,11,8)
    x = conv_pool_relu(x, params["loc2_w"], params["loc2_b"])        # (B,3,3,10)
    B = x.shape[0]
    xs = jnp.transpose(x, (0, 3, 1, 2)).reshape(B, 90)               # NCHW flatten
    t = mlp_head(xs, params["fcloc1_w"], params["fcloc1_b"],
                 params["fcloc2_w"], params["fcloc2_b"], epilogue="none")
    return t.reshape(B, 2, 3)


def net_forward(params, x_nchw):
    # --- spatial transformer ---
    theta = get_theta(params, x_nchw)
    x_nchw = grid_sample(x_nchw, theta)                              # (B,1,28,28)
    # --- main classifier ---
    x = jnp.transpose(x_nchw, (0, 2, 3, 1))                          # NHWC
    x = conv_pool_relu(x, params["conv1_w"], params["conv1_b"])      # (B,12,12,10)
    # Dropout2d is identity in eval mode.
    x = conv_pool_relu(x, params["conv2_w"], params["conv2_b"])      # (B,4,4,20)
    B = x.shape[0]
    x = jnp.transpose(x, (0, 3, 1, 2)).reshape(B, 320)               # NCHW flatten
    # F.dropout is identity in eval mode; fc1+relu+fc2+log_softmax fused.
    return mlp_head(x, params["fc1_w"], params["fc1_b"],
                    params["fc2_w"], params["fc2_b"], epilogue="logsoftmax")  # (B,10)


if __name__ == "__main__":
    key = jax.random.PRNGKey(0)
    pkey, xkey = jax.random.split(key)
    params = init_params(pkey)
    # fc1 expects 320 = 20*4*4 features, which pins the input to 1x28x28.
    x = jax.random.normal(xkey, (2, 1, 28, 28), jnp.float32)

    fwd = jax.jit(lambda inp: net_forward(params, inp))
    out = fwd(x)
    jax.block_until_ready(out)
    assert out.shape == (2, 10)
    assert bool(jnp.all(jnp.isfinite(out)))
    print("KERNEL_OK")
</pallas_src>

<mosaic_0001>
module attributes {stable_mosaic.version = 11 : i64} {
  func.func @_conv_pool_relu_kernel(%arg0: i32, %arg1: memref<128x49xbf16, #tpu.memory_space<vmem>>, %arg2: memref<128x49xbf16, #tpu.memory_space<vmem>>, %arg3: memref<128x49xbf16, #tpu.memory_space<vmem>>, %arg4: memref<128x49xbf16, #tpu.memory_space<vmem>>, %arg5: memref<49x128xbf16, #tpu.memory_space<vmem>>, %arg6: memref<1x128xf32, #tpu.memory_space<vmem>>, %arg7: memref<128x128xf32, #tpu.memory_space<vmem>>) attributes {dimension_semantics = [#tpu.dimension_semantics<parallel>], iteration_bounds = array<i64: 2>, scalar_prefetch = 0 : i64, scratch_operands = 0 : i64, tpu.core_type = #tpu.core_type<tc>, window_params = [{transform_indices = @transform_0, window_bounds = array<i64: 128, 49>}, {transform_indices = @transform_1, window_bounds = array<i64: 128, 49>}, {transform_indices = @transform_2, window_bounds = array<i64: 128, 49>}, {transform_indices = @transform_3, window_bounds = array<i64: 128, 49>}, {pipeline_mode = #tpu.pipeline_mode<synchronous>, transform_indices = @transform_4, window_bounds = array<i64: 49, 128>}, {pipeline_mode = #tpu.pipeline_mode<synchronous>, transform_indices = @transform_5, window_bounds = array<i64: 1, 128>}, {transform_indices = @transform_6, window_bounds = array<i64: 128, 128>}]} {
    %c0 = arith.constant 0 : index
    %c0_0 = arith.constant 0 : index
    %0 = vector.load %arg5[%c0, %c0_0] : memref<49x128xbf16, #tpu.memory_space<vmem>>, vector<49x128xbf16>
    %c0_1 = arith.constant 0 : index
    %c0_2 = arith.constant 0 : index
    %1 = vector.load %arg1[%c0_1, %c0_2] : memref<128x49xbf16, #tpu.memory_space<vmem>>, vector<128x49xbf16>
    %cst = arith.constant dense<0.000000e+00> : vector<128x128xf32>
    %2 = tpu.matmul %1, %0, %cst {dimension_numbers = #tpu.dot_dimension_numbers<[1], [0], [0], [1], [0, 0, 1, 1], [], []>} : vector<128x49xbf16>, vector<49x128xbf16>, vector<128x128xf32> -> vector<128x128xf32>
    %c0_3 = arith.constant 0 : index
    %c0_4 = arith.constant 0 : index
    %3 = vector.load %arg2[%c0_3, %c0_4] : memref<128x49xbf16, #tpu.memory_space<vmem>>, vector<128x49xbf16>
    %cst_5 = arith.constant dense<0.000000e+00> : vector<128x128xf32>
    %4 = tpu.matmul %3, %0, %cst_5 {dimension_numbers = #tpu.dot_dimension_numbers<[1], [0], [0], [1], [0, 0, 1, 1], [], []>} : vector<128x49xbf16>, vector<49x128xbf16>, vector<128x128xf32> -> vector<128x128xf32>
    %5 = arith.maximumf %2, %4 : vector<128x128xf32>
    %c0_6 = arith.constant 0 : index
    %c0_7 = arith.constant 0 : index
    %6 = vector.load %arg3[%c0_6, %c0_7] : memref<128x49xbf16, #tpu.memory_space<vmem>>, vector<128x49xbf16>
    %cst_8 = arith.constant dense<0.000000e+00> : vector<128x128xf32>
    %7 = tpu.matmul %6, %0, %cst_8 {dimension_numbers = #tpu.dot_dimension_numbers<[1], [0], [0], [1], [0, 0, 1, 1], [], []>} : vector<128x49xbf16>, vector<49x128xbf16>, vector<128x128xf32> -> vector<128x128xf32>
    %c0_9 = arith.constant 0 : index
    %c0_10 = arith.constant 0 : index
    %8 = vector.load %arg4[%c0_9, %c0_10] : memref<128x49xbf16, #tpu.memory_space<vmem>>, vector<128x49xbf16>
    %cst_11 = arith.constant dense<0.000000e+00> : vector<128x128xf32>
    %9 = tpu.matmul %8, %0, %cst_11 {dimension_numbers = #tpu.dot_dimension_numbers<[1], [0], [0], [1], [0, 0, 1, 1], [], []>} : vector<128x49xbf16>, vector<49x128xbf16>, vector<128x128xf32> -> vector<128x128xf32>
    %10 = arith.maximumf %7, %9 : vector<128x128xf32>
    %11 = arith.maximumf %5, %10 : vector<128x128xf32>
    %c0_12 = arith.constant 0 : index
    %c0_13 = arith.constant 0 : index
    %12 = vector.load %arg6[%c0_12, %c0_13] : memref<1x128xf32, #tpu.memory_space<vmem>>, vector<1x128xf32>
    %13 = vector.broadcast %12 : vector<1x128xf32> to vector<128x128xf32>
    %14 = arith.addf %11, %13 : vector<128x128xf32>
    %cst_14 = arith.constant 0.000000e+00 : f32
    %15 = vector.broadcast %cst_14 : f32 to vector<128x128xf32>
    %16 = arith.maximumf %14, %15 : vector<128x128xf32>
    %c0_15 = arith.constant 0 : index
    %c0_16 = arith.constant 0 : index
    %17 = vector.load %arg7[%c0_15, %c0_16] : memref<128x128xf32, #tpu.memory_space<vmem>>, vector<128x128xf32>
    tpu.vector_store %arg7[%c0_15, %c0_16], %16 {strides = array<i32>} : memref<128x128xf32, #tpu.memory_space<vmem>>, vector<128x128xf32>,
    return
  }
  func.func @transform_0(%arg0: i32) -> (i32, i32) {
    %c0_i32 = arith.constant 0 : i32
    %c0_i32_0 = arith.constant 0 : i32
    return %arg0, %c0_i32 : i32, i32
  }
  func.func @transform_1(%arg0: i32) -> (i32, i32) {
    %c0_i32 = arith.constant 0 : i32
    %c0_i32_0 = arith.constant 0 : i32
    return %arg0, %c0_i32 : i32, i32
  }
  func.func @transform_2(%arg0: i32) -> (i32, i32) {
    %c0_i32 = arith.constant 0 : i32
    %c0_i32_0 = arith.constant 0 : i32
    return %arg0, %c0_i32 : i32, i32
  }
  func.func @transform_3(%arg0: i32) -> (i32, i32) {
    %c0_i32 = arith.constant 0 : i32
    %c0_i32_0 = arith.constant 0 : i32
    return %arg0, %c0_i32 : i32, i32
  }
  func.func @transform_4(%arg0: i32) -> (i32, i32) {
    %c0_i32 = arith.constant 0 : i32
    %c0_i32_0 = arith.constant 0 : i32
    %c0_i32_1 = arith.constant 0 : i32
    return %c0_i32, %c0_i32_0 : i32, i32
  }
  func.func @transform_5(%arg0: i32) -> (i32, i32) {
    %c0_i32 = arith.constant 0 : i32
    %c0_i32_0 = arith.constant 0 : i32
    %c0_i32_1 = arith.constant 0 : i32
    return %c0_i32, %c0_i32_0 : i32, i32
  }
  func.func @transform_6(%arg0: i32) -> (i32, i32) {
    %c0_i32 = arith.constant 0 : i32
    %c0_i32_0 = arith.constant 0 : i32
    return %arg0, %c0_i32 : i32, i32
  }
}

module attributes {stable_mosaic.version = 11 : i64} {
  func.func @_conv_pool_relu_kernel(%arg0: i32, %arg1: memref<24x200xbf16, #tpu.memory_space<vmem>>, %arg2: memref<24x200xbf16, #tpu.memory_space<vmem>>, %arg3: memref<24x200xbf16, #tpu.memory_space<vmem>>, %arg4: memref<24x200xbf16, #tpu.memory_space<vmem>>, %arg5: memref<200x128xbf16, #tpu.memory_space<vmem>>, %arg6: memref<1x128xf32, #tpu.memory_space<vmem>>, %arg7: memref<24x128xf32, #tpu.memory_space<vmem>>) attributes {dimension_semantics = [#tpu.dimension_semantics<parallel>], iteration_bounds = array<i64: 1>, scalar_prefetch = 0 : i64, scratch_operands = 0 : i64, tpu.core_type = #tpu.core_type<tc>, window_params = [{transform_indices = @transform_0, window_bounds = array<i64: 24, 200>}, {transform_indices = @transform_1, window_bounds = array<i64: 24, 200>}, {transform_indices = @transform_2, window_bounds = array<i64: 24, 200>}, {transform_indices = @transform_3, window_bounds = array<i64: 24, 200>}, {pipeline_mode = #tpu.pipeline_mode<synchronous>, transform_indices = @transform_4, window_bounds = array<i64: 200, 128>}, {pipeline_mode = #tpu.pipeline_mode<synchronous>, transform_indices = @transform_5, window_bounds = array<i64: 1, 128>}, {transform_indices = @transform_6, window_bounds = array<i64: 24, 128>}]} {
    %c0 = arith.constant 0 : index
    %c0_0 = arith.constant 0 : index
    %0 = vector.load %arg5[%c0, %c0_0] : memref<200x128xbf16, #tpu.memory_space<vmem>>, vector<200x128xbf16>
    %c0_1 = arith.constant 0 : index
    %c0_2 = arith.constant 0 : index
    %1 = vector.load %arg1[%c0_1, %c0_2] : memref<24x200xbf16, #tpu.memory_space<vmem>>, vector<24x200xbf16>
    %cst = arith.constant dense<0.000000e+00> : vector<24x128xf32>
    %2 = tpu.matmul %1, %0, %cst {dimension_numbers = #tpu.dot_dimension_numbers<[1], [0], [0], [1], [0, 0, 1, 1], [], []>} : vector<24x200xbf16>, vector<200x128xbf16>, vector<24x128xf32> -> vector<24x128xf32>
    %c0_3 = arith.constant 0 : index
    %c0_4 = arith.constant 0 : index
    %3 = vector.load %arg2[%c0_3, %c0_4] : memref<24x200xbf16, #tpu.memory_space<vmem>>, vector<24x200xbf16>
    %cst_5 = arith.constant dense<0.000000e+00> : vector<24x128xf32>
    %4 = tpu.matmul %3, %0, %cst_5 {dimension_numbers = #tpu.dot_dimension_numbers<[1], [0], [0], [1], [0, 0, 1, 1], [], []>} : vector<24x200xbf16>, vector<200x128xbf16>, vector<24x128xf32> -> vector<24x128xf32>
    %5 = arith.maximumf %2, %4 : vector<24x128xf32>
    %c0_6 = arith.constant 0 : index
    %c0_7 = arith.constant 0 : index
    %6 = vector.load %arg3[%c0_6, %c0_7] : memref<24x200xbf16, #tpu.memory_space<vmem>>, vector<24x200xbf16>
    %cst_8 = arith.constant dense<0.000000e+00> : vector<24x128xf32>
    %7 = tpu.matmul %6, %0, %cst_8 {dimension_numbers = #tpu.dot_dimension_numbers<[1], [0], [0], [1], [0, 0, 1, 1], [], []>} : vector<24x200xbf16>, vector<200x128xbf16>, vector<24x128xf32> -> vector<24x128xf32>
    %c0_9 = arith.constant 0 : index
    %c0_10 = arith.constant 0 : index
    %8 = vector.load %arg4[%c0_9, %c0_10] : memref<24x200xbf16, #tpu.memory_space<vmem>>, vector<24x200xbf16>
    %cst_11 = arith.constant dense<0.000000e+00> : vector<24x128xf32>
    %9 = tpu.matmul %8, %0, %cst_11 {dimension_numbers = #tpu.dot_dimension_numbers<[1], [0], [0], [1], [0, 0, 1, 1], [], []>} : vector<24x200xbf16>, vector<200x128xbf16>, vector<24x128xf32> -> vector<24x128xf32>
    %10 = arith.maximumf %7, %9 : vector<24x128xf32>
    %11 = arith.maximumf %5, %10 : vector<24x128xf32>
    %c0_12 = arith.constant 0 : index
    %c0_13 = arith.constant 0 : index
    %12 = vector.load %arg6[%c0_12, %c0_13] : memref<1x128xf32, #tpu.memory_space<vmem>>, vector<1x128xf32>
    %13 = vector.broadcast %12 : vector<1x128xf32> to vector<24x128xf32>
    %14 = arith.addf %11, %13 : vector<24x128xf32>
    %cst_14 = arith.constant 0.000000e+00 : f32
    %15 = vector.broadcast %cst_14 : f32 to vector<24x128xf32>
    %16 = arith.maximumf %14, %15 : vector<24x128xf32>
    %c0_15 = arith.constant 0 : index
    %c0_16 = arith.constant 0 : index
    %17 = vector.load %arg7[%c0_15, %c0_16] : memref<24x128xf32, #tpu.memory_space<vmem>>, vector<24x128xf32>
    tpu.vector_store %arg7[%c0_15, %c0_16], %16 {strides = array<i32>} : memref<24x128xf32, #tpu.memory_space<vmem>>, vector<24x128xf32>,
    return
  }
  func.func @transform_0(%arg0: i32) -> (i32, i32) {
    %c0_i32 = arith.constant 0 : i32
    %c0_i32_0 = arith.constant 0 : i32
    return %arg0, %c0_i32 : i32, i32
  }
  func.func @transform_1(%arg0: i32) -> (i32, i32) {
    %c0_i32 = arith.constant 0 : i32
    %c0_i32_0 = arith.constant 0 : i32
    return %arg0, %c0_i32 : i32, i32
  }
  func.func @transform_2(%arg0: i32) -> (i32, i32) {
    %c0_i32 = arith.constant 0 : i32
    %c0_i32_0 = arith.constant 0 : i32
    return %arg0, %c0_i32 : i32, i32
  }
  func.func @transform_3(%arg0: i32) -> (i32, i32) {
    %c0_i32 = arith.constant 0 : i32
    %c0_i32_0 = arith.constant 0 : i32
    return %arg0, %c0_i32 : i32, i32
  }
  func.func @transform_4(%arg0: i32) -> (i32, i32) {
    %c0_i32 = arith.constant 0 : i32
    %c0_i32_0 = arith.constant 0 : i32
    %c0_i32_1 = arith.constant 0 : i32
    return %c0_i32, %c0_i32_0 : i32, i32
  }
  func.func @transform_5(%arg0: i32) -> (i32, i32) {
    %c0_i32 = arith.constant 0 : i32
    %c0_i32_0 = arith.constant 0 : i32
    %c0_i32_1 = arith.constant 0 : i32
    return %c0_i32, %c0_i32_0 : i32, i32
  }
  func.func @transform_6(%arg0: i32) -> (i32, i32) {
    %c0_i32 = arith.constant 0 : i32
    %c0_i32_0 = arith.constant 0 : i32
    return %arg0, %c0_i32 : i32, i32
  }
}

module attributes {stable_mosaic.version = 11 : i64} {
  func.func @_mlp_head_kernel(%arg0: i32, %arg1: memref<8x90xbf16, #tpu.memory_space<vmem>>, %arg2: memref<90x128xbf16, #tpu.memory_space<vmem>>, %arg3: memref<1x128xf32, #tpu.memory_space<vmem>>, %arg4: memref<128x128xbf16, #tpu.memory_space<vmem>>, %arg5: memref<1x128xf32, #tpu.memory_space<vmem>>, %arg6: memref<8x128xf32, #tpu.memory_space<vmem>>) attributes {dimension_semantics = [#tpu.dimension_semantics<parallel>], iteration_bounds = array<i64: 1>, scalar_prefetch = 0 : i64, scratch_operands = 0 : i64, tpu.core_type = #tpu.core_type<tc>, window_params = [{transform_indices = @transform_0, window_bounds = array<i64: 8, 90>}, {pipeline_mode = #tpu.pipeline_mode<synchronous>, transform_indices = @transform_1, window_bounds = array<i64: 90, 128>}, {pipeline_mode = #tpu.pipeline_mode<synchronous>, transform_indices = @transform_2, window_bounds = array<i64: 1, 128>}, {pipeline_mode = #tpu.pipeline_mode<synchronous>, transform_indices = @transform_3, window_bounds = array<i64: 128, 128>}, {pipeline_mode = #tpu.pipeline_mode<synchronous>, transform_indices = @transform_4, window_bounds = array<i64: 1, 128>}, {transform_indices = @transform_5, window_bounds = array<i64: 8, 128>}]} {
    %c0 = arith.constant 0 : index
    %c0_0 = arith.constant 0 : index
    %0 = vector.load %arg1[%c0, %c0_0] : memref<8x90xbf16, #tpu.memory_space<vmem>>, vector<8x90xbf16>
    %c0_1 = arith.constant 0 : index
    %c0_2 = arith.constant 0 : index
    %1 = vector.load %arg2[%c0_1, %c0_2] : memref<90x128xbf16, #tpu.memory_space<vmem>>, vector<90x128xbf16>
    %cst = arith.constant dense<0.000000e+00> : vector<8x128xf32>
    %2 = tpu.matmul %0, %1, %cst {dimension_numbers = #tpu.dot_dimension_numbers<[1], [0], [0], [1], [0, 0, 1, 1], [], []>} : vector<8x90xbf16>, vector<90x128xbf16>, vector<8x128xf32> -> vector<8x128xf32>
    %c0_3 = arith.constant 0 : index
    %c0_4 = arith.constant 0 : index
    %3 = vector.load %arg3[%c0_3, %c0_4] : memref<1x128xf32, #tpu.memory_space<vmem>>, vector<1x128xf32>
    %4 = vector.broadcast %3 : vector<1x128xf32> to vector<8x128xf32>
    %5 = arith.addf %2, %4 : vector<8x128xf32>
    %cst_5 = arith.constant 0.000000e+00 : f32
    %6 = vector.broadcast %cst_5 : f32 to vector<8x128xf32>
    %7 = arith.maximumf %5, %6 : vector<8x128xf32>
    %8 = arith.truncf %7 : vector<8x128xf32> to vector<8x128xbf16>
    %c0_6 = arith.constant 0 : index
    %c0_7 = arith.constant 0 : index
    %9 = vector.load %arg4[%c0_6, %c0_7] : memref<128x128xbf16, #tpu.memory_space<vmem>>, vector<128x128xbf16>
    %cst_8 = arith.constant dense<0.000000e+00> : vector<8x128xf32>
    %10 = tpu.matmul %8, %9, %cst_8 {dimension_numbers = #tpu.dot_dimension_numbers<[1], [0], [0], [1], [0, 0, 1, 1], [], []>} : vector<8x128xbf16>, vector<128x128xbf16>, vector<8x128xf32> -> vector<8x128xf32>
    %c0_9 = arith.constant 0 : index
    %c0_10 = arith.constant 0 : index
    %11 = vector.load %arg5[%c0_9, %c0_10] : memref<1x128xf32, #tpu.memory_space<vmem>>, vector<1x128xf32>
    %12 = vector.broadcast %11 : vector<1x128xf32> to vector<8x128xf32>
    %13 = arith.addf %10, %12 : vector<8x128xf32>
    %c0_11 = arith.constant 0 : index
    %c0_12 = arith.constant 0 : index
    %14 = vector.load %arg6[%c0_11, %c0_12] : memref<8x128xf32, #tpu.memory_space<vmem>>, vector<8x128xf32>
    tpu.vector_store %arg6[%c0_11, %c0_12], %13 {strides = array<i32>} : memref<8x128xf32, #tpu.memory_space<vmem>>, vector<8x128xf32>,
    return
  }
  func.func @transform_0(%arg0: i32) -> (i32, i32) {
    %c0_i32 = arith.constant 0 : i32
    %c0_i32_0 = arith.constant 0 : i32
    return %arg0, %c0_i32 : i32, i32
  }
  func.func @transform_1(%arg0: i32) -> (i32, i32) {
    %c0_i32 = arith.constant 0 : i32
    %c0_i32_0 = arith.constant 0 : i32
    %c0_i32_1 = arith.constant 0 : i32
    return %c0_i32, %c0_i32_0 : i32, i32
  }
  func.func @transform_2(%arg0: i32) -> (i32, i32) {
    %c0_i32 = arith.constant 0 : i32
    %c0_i32_0 = arith.constant 0 : i32
    %c0_i32_1 = arith.constant 0 : i32
    return %c0_i32, %c0_i32_0 : i32, i32
  }
  func.func @transform_3(%arg0: i32) -> (i32, i32) {
    %c0_i32 = arith.constant 0 : i32
    %c0_i32_0 = arith.constant 0 : i32
    %c0_i32_1 = arith.constant 0 : i32
    return %c0_i32, %c0_i32_0 : i32, i32
  }
  func.func @transform_4(%arg0: i32) -> (i32, i32) {
    %c0_i32 = arith.constant 0 : i32
    %c0_i32_0 = arith.constant 0 : i32
    %c0_i32_1 = arith.constant 0 : i32
    return %c0_i32, %c0_i32_0 : i32, i32
  }
  func.func @transform_5(%arg0: i32) -> (i32, i32) {
    %c0_i32 = arith.constant 0 : i32
    %c0_i32_0 = arith.constant 0 : i32
    return %arg0, %c0_i32 : i32, i32
  }
}

module attributes {stable_mosaic.version = 11 : i64} {
  func.func @_grid_sample_kernel(%arg0: i32, %arg1: memref<1x28x28xf32, #tpu.memory_space<vmem>>, %arg2: memref<1x4x784xi32, #tpu.memory_space<vmem>>, %arg3: memref<1x4x784xf32, #tpu.memory_space<vmem>>, %arg4: memref<1x1x784xf32, #tpu.memory_space<vmem>>) attributes {dimension_semantics = [#tpu.dimension_semantics<parallel>], iteration_bounds = array<i64: 2>, scalar_prefetch = 0 : i64, scratch_operands = 0 : i64, tpu.core_type = #tpu.core_type<tc>, window_params = [{transform_indices = @transform_0, window_bounds = array<i64: 1, 28, 28>}, {transform_indices = @transform_1, window_bounds = array<i64: 1, 4, 784>}, {transform_indices = @transform_2, window_bounds = array<i64: 1, 4, 784>}, {transform_indices = @transform_3, window_bounds = array<i64: 1, 1, 784>}]} {
    %c0 = arith.constant 0 : index
    %c0_0 = arith.constant 0 : index
    %c0_1 = arith.constant 0 : index
    %0 = vector.load %arg1[%c0, %c0_0, %c0_1] : memref<1x28x28xf32, #tpu.memory_space<vmem>>, vector<1x28x28xf32>
    %1 = vector.shape_cast %0 : vector<1x28x28xf32> to vector<28x28xf32>
    %c0_2 = arith.constant 0 : index
    %c0_3 = arith.constant 0 : index
    %c0_4 = arith.constant 0 : index
    %2 = vector.load %arg2[%c0_2, %c0_3, %c0_4] : memref<1x4x784xi32, #tpu.memory_space<vmem>>, vector<1x4x784xi32>
    %3 = vector.shape_cast %2 : vector<1x4x784xi32> to vector<4x784xi32>
    %c0_5 = arith.constant 0 : index
    %c0_6 = arith.constant 0 : index
    %c0_7 = arith.constant 0 : index
    %4 = vector.load %arg3[%c0_5, %c0_6, %c0_7] : memref<1x4x784xf32, #tpu.memory_space<vmem>>, vector<1x4x784xf32>
    %5 = vector.shape_cast %4 : vector<1x4x784xf32> to vector<4x784xf32>
    %6 = tpu.iota {dimensions = array<i32: 0>} : vector<28x784xi32>
    %7 = tpu.iota {dimensions = array<i32: 0>} : vector<28x784xi32>
    %8 = vector.extract_strided_slice %5 {offsets = [0, 0], sizes = [1, 784], strides = [1, 1]} : vector<4x784xf32> to vector<1x784xf32>
    %9 = vector.extract_strided_slice %3 {offsets = [0, 0], sizes = [1, 784], strides = [1, 1]} : vector<4x784xi32> to vector<1x784xi32>
    %10 = vector.broadcast %9 : vector<1x784xi32> to vector<28x784xi32>
    %11 = arith.cmpi eq, %6, %10 : vector<28x784xi32>
    %12 = arith.extui %11 : vector<28x784xi1> to vector<28x784xi32>
    %13 = arith.sitofp %12 : vector<28x784xi32> to vector<28x784xf32>
    %14 = vector.broadcast %8 : vector<1x784xf32> to vector<28x784xf32>
    %15 = arith.mulf %14, %13 : vector<28x784xf32>
    %16 = vector.extract_strided_slice %5 {offsets = [1, 0], sizes = [1, 784], strides = [1, 1]} : vector<4x784xf32> to vector<1x784xf32>
    %17 = vector.extract_strided_slice %3 {offsets = [1, 0], sizes = [1, 784], strides = [1, 1]} : vector<4x784xi32> to vector<1x784xi32>
    %18 = vector.broadcast %17 : vector<1x784xi32> to vector<28x784xi32>
    %19 = arith.cmpi eq, %6, %18 : vector<28x784xi32>
    %20 = arith.extui %19 : vector<28x784xi1> to vector<28x784xi32>
    %21 = arith.sitofp %20 : vector<28x784xi32> to vector<28x784xf32>
    %22 = vector.broadcast %16 : vector<1x784xf32> to vector<28x784xf32>
    %23 = arith.mulf %22, %21 : vector<28x784xf32>
    %24 = arith.addf %15, %23 : vector<28x784xf32>
    %25 = vector.extract_strided_slice %5 {offsets = [2, 0], sizes = [1, 784], strides = [1, 1]} : vector<4x784xf32> to vector<1x784xf32>
    %26 = vector.extract_strided_slice %3 {offsets = [2, 0], sizes = [1, 784], strides = [1, 1]} : vector<4x784xi32> to vector<1x784xi32>
    %27 = vector.broadcast %26 : vector<1x784xi32> to vector<28x784xi32>
    %28 = arith.cmpi eq, %7, %27 : vector<28x784xi32>
    %29 = arith.extui %28 : vector<28x784xi1> to vector<28x784xi32>
    %30 = arith.sitofp %29 : vector<28x784xi32> to vector<28x784xf32>
    %31 = vector.broadcast %25 : vector<1x784xf32> to vector<28x784xf32>
    %32 = arith.mulf %31, %30 : vector<28x784xf32>
    %33 = vector.extract_strided_slice %5 {offsets = [3, 0], sizes = [1, 784], strides = [1, 1]} : vector<4x784xf32> to vector<1x784xf32>
    %34 = vector.extract_strided_slice %3 {offsets = [3, 0], sizes = [1, 784], strides = [1, 1]} : vector<4x784xi32> to vector<1x784xi32>
    %35 = vector.broadcast %34 : vector<1x784xi32> to vector<28x784xi32>
    %36 = arith.cmpi eq, %7, %35 : vector<28x784xi32>
    %37 = arith.extui %36 : vector<28x784xi1> to vector<28x784xi32>
    %38 = arith.sitofp %37 : vector<28x784xi32> to vector<28x784xf32>
    %39 = vector.broadcast %33 : vector<1x784xf32> to vector<28x784xf32>
    %40 = arith.mulf %39, %38 : vector<28x784xf32>
    %41 = arith.addf %32, %40 : vector<28x784xf32>
    %cst = arith.constant dense<0.000000e+00> : vector<28x784xf32>
    %42 = tpu.matmul %1, %24, %cst {dimension_numbers = #tpu.dot_dimension_numbers<[1], [0], [0], [1], [0, 0, 1, 1], [], []>} : vector<28x28xf32>, vector<28x784xf32>, vector<28x784xf32> -> vector<28x784xf32>
    %43 = arith.mulf %41, %42 : vector<28x784xf32>
    %cst_8 = arith.constant dense<0.000000e+00> : vector<784xf32>
    %44 = vector.multi_reduction <add>, %43, %cst_8 [0] : vector<28x784xf32> to vector<784xf32>
    %45 = vector.shape_cast %44 : vector<784xf32> to vector<1x784xf32>
    %c0_9 = arith.constant 0 : index
    %c0_10 = arith.constant 0 : index
    %c0_11 = arith.constant 0 : index
    %46 = vector.load %arg4[%c0_9, %c0_10, %c0_11] : memref<1x1x784xf32, #tpu.memory_space<vmem>>, vector<1x1x784xf32>
    %47 = vector.shape_cast %46 : vector<1x1x784xf32> to vector<1x784xf32>
    %48 = vector.shape_cast %45 : vector<1x784xf32> to vector<1x1x784xf32>
    tpu.vector_store %arg4[%c0_9, %c0_10, %c0_11], %48 {strides = array<i32>} : memref<1x1x784xf32, #tpu.memory_space<vmem>>, vector<1x1x784xf32>,
    return
  }
  func.func @transform_0(%arg0: i32) -> (i32, i32, i32) {
    %c0_i32 = arith.constant 0 : i32
    %c0_i32_0 = arith.constant 0 : i32
    %c0_i32_1 = arith.constant 0 : i32
    return %arg0, %c0_i32, %c0_i32_0 : i32, i32, i32
  }
  func.func @transform_1(%arg0: i32) -> (i32, i32, i32) {
    %c0_i32 = arith.constant 0 : i32
    %c0_i32_0 = arith.constant 0 : i32
    %c0_i32_1 = arith.constant 0 : i32
    return %arg0, %c0_i32, %c0_i32_0 : i32, i32, i32
  }
  func.func @transform_2(%arg0: i32) -> (i32, i32, i32) {
    %c0_i32 = arith.constant 0 : i32
    %c0_i32_0 = arith.constant 0 : i32
    %c0_i32_1 = arith.constant 0 : i32
    return %arg0, %c0_i32, %c0_i32_0 : i32, i32, i32
  }
  func.func @transform_3(%arg0: i32) -> (i32, i32, i32) {
    %c0_i32 = arith.constant 0 : i32
    %c0_i32_0 = arith.constant 0 : i32
    %c0_i32_1 = arith.constant 0 : i32
    return %arg0, %c0_i32, %c0_i32_0 : i32, i32, i32
  }
}

module attributes {stable_mosaic.version = 11 : i64} {
  func.func @_conv_pool_relu_kernel(%arg0: i32, %arg1: memref<96x25xbf16, #tpu.memory_space<vmem>>, %arg2: memref<96x25xbf16, #tpu.memory_space<vmem>>, %arg3: memref<96x25xbf16, #tpu.memory_space<vmem>>, %arg4: memref<96x25xbf16, #tpu.memory_space<vmem>>, %arg5: memref<25x128xbf16, #tpu.memory_space<vmem>>, %arg6: memref<1x128xf32, #tpu.memory_space<vmem>>, %arg7: memref<96x128xf32, #tpu.memory_space<vmem>>) attributes {dimension_semantics = [#tpu.dimension_semantics<parallel>], iteration_bounds = array<i64: 3>, scalar_prefetch = 0 : i64, scratch_operands = 0 : i64, tpu.core_type = #tpu.core_type<tc>, window_params = [{transform_indices = @transform_0, window_bounds = array<i64: 96, 25>}, {transform_indices = @transform_1, window_bounds = array<i64: 96, 25>}, {transform_indices = @transform_2, window_bounds = array<i64: 96, 25>}, {transform_indices = @transform_3, window_bounds = array<i64: 96, 25>}, {pipeline_mode = #tpu.pipeline_mode<synchronous>, transform_indices = @transform_4, window_bounds = array<i64: 25, 128>}, {pipeline_mode = #tpu.pipeline_mode<synchronous>, transform_indices = @transform_5, window_bounds = array<i64: 1, 128>}, {transform_indices = @transform_6, window_bounds = array<i64: 96, 128>}]} {
    %c0 = arith.constant 0 : index
    %c0_0 = arith.constant 0 : index
    %0 = vector.load %arg5[%c0, %c0_0] : memref<25x128xbf16, #tpu.memory_space<vmem>>, vector<25x128xbf16>
    %c0_1 = arith.constant 0 : index
    %c0_2 = arith.constant 0 : index
    %1 = vector.load %arg1[%c0_1, %c0_2] : memref<96x25xbf16, #tpu.memory_space<vmem>>, vector<96x25xbf16>
    %cst = arith.constant dense<0.000000e+00> : vector<96x128xf32>
    %2 = tpu.matmul %1, %0, %cst {dimension_numbers = #tpu.dot_dimension_numbers<[1], [0], [0], [1], [0, 0, 1, 1], [], []>} : vector<96x25xbf16>, vector<25x128xbf16>, vector<96x128xf32> -> vector<96x128xf32>
    %c0_3 = arith.constant 0 : index
    %c0_4 = arith.constant 0 : index
    %3 = vector.load %arg2[%c0_3, %c0_4] : memref<96x25xbf16, #tpu.memory_space<vmem>>, vector<96x25xbf16>
    %cst_5 = arith.constant dense<0.000000e+00> : vector<96x128xf32>
    %4 = tpu.matmul %3, %0, %cst_5 {dimension_numbers = #tpu.dot_dimension_numbers<[1], [0], [0], [1], [0, 0, 1, 1], [], []>} : vector<96x25xbf16>, vector<25x128xbf16>, vector<96x128xf32> -> vector<96x128xf32>
    %5 = arith.maximumf %2, %4 : vector<96x128xf32>
    %c0_6 = arith.constant 0 : index
    %c0_7 = arith.constant 0 : index
    %6 = vector.load %arg3[%c0_6, %c0_7] : memref<96x25xbf16, #tpu.memory_space<vmem>>, vector<96x25xbf16>
    %cst_8 = arith.constant dense<0.000000e+00> : vector<96x128xf32>
    %7 = tpu.matmul %6, %0, %cst_8 {dimension_numbers = #tpu.dot_dimension_numbers<[1], [0], [0], [1], [0, 0, 1, 1], [], []>} : vector<96x25xbf16>, vector<25x128xbf16>, vector<96x128xf32> -> vector<96x128xf32>
    %c0_9 = arith.constant 0 : index
    %c0_10 = arith.constant 0 : index
    %8 = vector.load %arg4[%c0_9, %c0_10] : memref<96x25xbf16, #tpu.memory_space<vmem>>, vector<96x25xbf16>
    %cst_11 = arith.constant dense<0.000000e+00> : vector<96x128xf32>
    %9 = tpu.matmul %8, %0, %cst_11 {dimension_numbers = #tpu.dot_dimension_numbers<[1], [0], [0], [1], [0, 0, 1, 1], [], []>} : vector<96x25xbf16>, vector<25x128xbf16>, vector<96x128xf32> -> vector<96x128xf32>
    %10 = arith.maximumf %7, %9 : vector<96x128xf32>
    %11 = arith.maximumf %5, %10 : vector<96x128xf32>
    %c0_12 = arith.constant 0 : index
    %c0_13 = arith.constant 0 : index
    %12 = vector.load %arg6[%c0_12, %c0_13] : memref<1x128xf32, #tpu.memory_space<vmem>>, vector<1x128xf32>
    %13 = vector.broadcast %12 : vector<1x128xf32> to vector<96x128xf32>
    %14 = arith.addf %11, %13 : vector<96x128xf32>
    %cst_14 = arith.constant 0.000000e+00 : f32
    %15 = vector.broadcast %cst_14 : f32 to vector<96x128xf32>
    %16 = arith.maximumf %14, %15 : vector<96x128xf32>
    %c0_15 = arith.constant 0 : index
    %c0_16 = arith.constant 0 : index
    %17 = vector.load %arg7[%c0_15, %c0_16] : memref<96x128xf32, #tpu.memory_space<vmem>>, vector<96x128xf32>
    tpu.vector_store %arg7[%c0_15, %c0_16], %16 {strides = array<i32>} : memref<96x128xf32, #tpu.memory_space<vmem>>, vector<96x128xf32>,
    return
  }
  func.func @transform_0(%arg0: i32) -> (i32, i32) {
    %c0_i32 = arith.constant 0 : i32
    %c0_i32_0 = arith.constant 0 : i32
    return %arg0, %c0_i32 : i32, i32
  }
  func.func @transform_1(%arg0: i32) -> (i32, i32) {
    %c0_i32 = arith.constant 0 : i32
    %c0_i32_0 = arith.constant 0 : i32
    return %arg0, %c0_i32 : i32, i32
  }
  func.func @transform_2(%arg0: i32) -> (i32, i32) {
    %c0_i32 = arith.constant 0 : i32
    %c0_i32_0 = arith.constant 0 : i32
    return %arg0, %c0_i32 : i32, i32
  }
  func.func @transform_3(%arg0: i32) -> (i32, i32) {
    %c0_i32 = arith.constant 0 : i32
    %c0_i32_0 = arith.constant 0 : i32
    return %arg0, %c0_i32 : i32, i32
  }
  func.func @transform_4(%arg0: i32) -> (i32, i32) {
    %c0_i32 = arith.constant 0 : i32
    %c0_i32_0 = arith.constant 0 : i32
    %c0_i32_1 = arith.constant 0 : i32
    return %c0_i32, %c0_i32_0 : i32, i32
  }
  func.func @transform_5(%arg0: i32) -> (i32, i32) {
    %c0_i32 = arith.constant 0 : i32
    %c0_i32_0 = arith.constant 0 : i32
    %c0_i32_1 = arith.constant 0 : i32
    return %c0_i32, %c0_i32_0 : i32, i32
  }
  func.func @transform_6(%arg0: i32) -> (i32, i32) {
    %c0_i32 = arith.constant 0 : i32
    %c0_i32_0 = arith.constant 0 : i32
    return %arg0, %c0_i32 : i32, i32
  }
}

module attributes {stable_mosaic.version = 11 : i64} {
  func.func @_conv_pool_relu_kernel(%arg0: i32, %arg1: memref<32x250xbf16, #tpu.memory_space<vmem>>, %arg2: memref<32x250xbf16, #tpu.memory_space<vmem>>, %arg3: memref<32x250xbf16, #tpu.memory_space<vmem>>, %arg4: memref<32x250xbf16, #tpu.memory_space<vmem>>, %arg5: memref<250x128xbf16, #tpu.memory_space<vmem>>, %arg6: memref<1x128xf32, #tpu.memory_space<vmem>>, %arg7: memref<32x128xf32, #tpu.memory_space<vmem>>) attributes {dimension_semantics = [#tpu.dimension_semantics<parallel>], iteration_bounds = array<i64: 1>, scalar_prefetch = 0 : i64, scratch_operands = 0 : i64, tpu.core_type = #tpu.core_type<tc>, window_params = [{transform_indices = @transform_0, window_bounds = array<i64: 32, 250>}, {transform_indices = @transform_1, window_bounds = array<i64: 32, 250>}, {transform_indices = @transform_2, window_bounds = array<i64: 32, 250>}, {transform_indices = @transform_3, window_bounds = array<i64: 32, 250>}, {pipeline_mode = #tpu.pipeline_mode<synchronous>, transform_indices = @transform_4, window_bounds = array<i64: 250, 128>}, {pipeline_mode = #tpu.pipeline_mode<synchronous>, transform_indices = @transform_5, window_bounds = array<i64: 1, 128>}, {transform_indices = @transform_6, window_bounds = array<i64: 32, 128>}]} {
    %c0 = arith.constant 0 : index
    %c0_0 = arith.constant 0 : index
    %0 = vector.load %arg5[%c0, %c0_0] : memref<250x128xbf16, #tpu.memory_space<vmem>>, vector<250x128xbf16>
    %c0_1 = arith.constant 0 : index
    %c0_2 = arith.constant 0 : index
    %1 = vector.load %arg1[%c0_1, %c0_2] : memref<32x250xbf16, #tpu.memory_space<vmem>>, vector<32x250xbf16>
    %cst = arith.constant dense<0.000000e+00> : vector<32x128xf32>
    %2 = tpu.matmul %1, %0, %cst {dimension_numbers = #tpu.dot_dimension_numbers<[1], [0], [0], [1], [0, 0, 1, 1], [], []>} : vector<32x250xbf16>, vector<250x128xbf16>, vector<32x128xf32> -> vector<32x128xf32>
    %c0_3 = arith.constant 0 : index
    %c0_4 = arith.constant 0 : index
    %3 = vector.load %arg2[%c0_3, %c0_4] : memref<32x250xbf16, #tpu.memory_space<vmem>>, vector<32x250xbf16>
    %cst_5 = arith.constant dense<0.000000e+00> : vector<32x128xf32>
    %4 = tpu.matmul %3, %0, %cst_5 {dimension_numbers = #tpu.dot_dimension_numbers<[1], [0], [0], [1], [0, 0, 1, 1], [], []>} : vector<32x250xbf16>, vector<250x128xbf16>, vector<32x128xf32> -> vector<32x128xf32>
    %5 = arith.maximumf %2, %4 : vector<32x128xf32>
    %c0_6 = arith.constant 0 : index
    %c0_7 = arith.constant 0 : index
    %6 = vector.load %arg3[%c0_6, %c0_7] : memref<32x250xbf16, #tpu.memory_space<vmem>>, vector<32x250xbf16>
    %cst_8 = arith.constant dense<0.000000e+00> : vector<32x128xf32>
    %7 = tpu.matmul %6, %0, %cst_8 {dimension_numbers = #tpu.dot_dimension_numbers<[1], [0], [0], [1], [0, 0, 1, 1], [], []>} : vector<32x250xbf16>, vector<250x128xbf16>, vector<32x128xf32> -> vector<32x128xf32>
    %c0_9 = arith.constant 0 : index
    %c0_10 = arith.constant 0 : index
    %8 = vector.load %arg4[%c0_9, %c0_10] : memref<32x250xbf16, #tpu.memory_space<vmem>>, vector<32x250xbf16>
    %cst_11 = arith.constant dense<0.000000e+00> : vector<32x128xf32>
    %9 = tpu.matmul %8, %0, %cst_11 {dimension_numbers = #tpu.dot_dimension_numbers<[1], [0], [0], [1], [0, 0, 1, 1], [], []>} : vector<32x250xbf16>, vector<250x128xbf16>, vector<32x128xf32> -> vector<32x128xf32>
    %10 = arith.maximumf %7, %9 : vector<32x128xf32>
    %11 = arith.maximumf %5, %10 : vector<32x128xf32>
    %c0_12 = arith.constant 0 : index
    %c0_13 = arith.constant 0 : index
    %12 = vector.load %arg6[%c0_12, %c0_13] : memref<1x128xf32, #tpu.memory_space<vmem>>, vector<1x128xf32>
    %13 = vector.broadcast %12 : vector<1x128xf32> to vector<32x128xf32>
    %14 = arith.addf %11, %13 : vector<32x128xf32>
    %cst_14 = arith.constant 0.000000e+00 : f32
    %15 = vector.broadcast %cst_14 : f32 to vector<32x128xf32>
    %16 = arith.maximumf %14, %15 : vector<32x128xf32>
    %c0_15 = arith.constant 0 : index
    %c0_16 = arith.constant 0 : index
    %17 = vector.load %arg7[%c0_15, %c0_16] : memref<32x128xf32, #tpu.memory_space<vmem>>, vector<32x128xf32>
    tpu.vector_store %arg7[%c0_15, %c0_16], %16 {strides = array<i32>} : memref<32x128xf32, #tpu.memory_space<vmem>>, vector<32x128xf32>,
    return
  }
  func.func @transform_0(%arg0: i32) -> (i32, i32) {
    %c0_i32 = arith.constant 0 : i32
    %c0_i32_0 = arith.constant 0 : i32
    return %arg0, %c0_i32 : i32, i32
  }
  func.func @transform_1(%arg0: i32) -> (i32, i32) {
    %c0_i32 = arith.constant 0 : i32
    %c0_i32_0 = arith.constant 0 : i32
    return %arg0, %c0_i32 : i32, i32
  }
  func.func @transform_2(%arg0: i32) -> (i32, i32) {
    %c0_i32 = arith.constant 0 : i32
    %c0_i32_0 = arith.constant 0 : i32
    return %arg0, %c0_i32 : i32, i32
  }
  func.func @transform_3(%arg0: i32) -> (i32, i32) {
    %c0_i32 = arith.constant 0 : i32
    %c0_i32_0 = arith.constant 0 : i32
    return %arg0, %c0_i32 : i32, i32
  }
  func.func @transform_4(%arg0: i32) -> (i32, i32) {
    %c0_i32 = arith.constant 0 : i32
    %c0_i32_0 = arith.constant 0 : i32
    %c0_i32_1 = arith.constant 0 : i32
    return %c0_i32, %c0_i32_0 : i32, i32
  }
  func.func @transform_5(%arg0: i32) -> (i32, i32) {
    %c0_i32 = arith.constant 0 : i32
    %c0_i32_0 = arith.constant 0 : i32
    %c0_i32_1 = arith.constant 0 : i32
    return %c0_i32, %c0_i32_0 : i32, i32
  }
  func.func @transform_6(%arg0: i32) -> (i32, i32) {
    %c0_i32 = arith.constant 0 : i32
    %c0_i32_0 = arith.constant 0 : i32
    return %arg0, %c0_i32 : i32, i32
  }
}

module attributes {stable_mosaic.version = 11 : i64} {
  func.func @_mlp_head_kernel(%arg0: i32, %arg1: memref<8x320xbf16, #tpu.memory_space<vmem>>, %arg2: memref<320x128xbf16, #tpu.memory_space<vmem>>, %arg3: memref<1x128xf32, #tpu.memory_space<vmem>>, %arg4: memref<128x128xbf16, #tpu.memory_space<vmem>>, %arg5: memref<1x128xf32, #tpu.memory_space<vmem>>, %arg6: memref<8x128xf32, #tpu.memory_space<vmem>>) attributes {dimension_semantics = [#tpu.dimension_semantics<parallel>], iteration_bounds = array<i64: 1>, scalar_prefetch = 0 : i64, scratch_operands = 0 : i64, tpu.core_type = #tpu.core_type<tc>, window_params = [{transform_indices = @transform_0, window_bounds = array<i64: 8, 320>}, {pipeline_mode = #tpu.pipeline_mode<synchronous>, transform_indices = @transform_1, window_bounds = array<i64: 320, 128>}, {pipeline_mode = #tpu.pipeline_mode<synchronous>, transform_indices = @transform_2, window_bounds = array<i64: 1, 128>}, {pipeline_mode = #tpu.pipeline_mode<synchronous>, transform_indices = @transform_3, window_bounds = array<i64: 128, 128>}, {pipeline_mode = #tpu.pipeline_mode<synchronous>, transform_indices = @transform_4, window_bounds = array<i64: 1, 128>}, {transform_indices = @transform_5, window_bounds = array<i64: 8, 128>}]} {
    %c0 = arith.constant 0 : index
    %c0_0 = arith.constant 0 : index
    %0 = vector.load %arg1[%c0, %c0_0] : memref<8x320xbf16, #tpu.memory_space<vmem>>, vector<8x320xbf16>
    %c0_1 = arith.constant 0 : index
    %c0_2 = arith.constant 0 : index
    %1 = vector.load %arg2[%c0_1, %c0_2] : memref<320x128xbf16, #tpu.memory_space<vmem>>, vector<320x128xbf16>
    %cst = arith.constant dense<0.000000e+00> : vector<8x128xf32>
    %2 = tpu.matmul %0, %1, %cst {dimension_numbers = #tpu.dot_dimension_numbers<[1], [0], [0], [1], [0, 0, 1, 1], [], []>} : vector<8x320xbf16>, vector<320x128xbf16>, vector<8x128xf32> -> vector<8x128xf32>
    %c0_3 = arith.constant 0 : index
    %c0_4 = arith.constant 0 : index
    %3 = vector.load %arg3[%c0_3, %c0_4] : memref<1x128xf32, #tpu.memory_space<vmem>>, vector<1x128xf32>
    %4 = vector.broadcast %3 : vector<1x128xf32> to vector<8x128xf32>
    %5 = arith.addf %2, %4 : vector<8x128xf32>
    %cst_5 = arith.constant 0.000000e+00 : f32
    %6 = vector.broadcast %cst_5 : f32 to vector<8x128xf32>
    %7 = arith.maximumf %5, %6 : vector<8x128xf32>
    %8 = arith.truncf %7 : vector<8x128xf32> to vector<8x128xbf16>
    %c0_6 = arith.constant 0 : index
    %c0_7 = arith.constant 0 : index
    %9 = vector.load %arg4[%c0_6, %c0_7] : memref<128x128xbf16, #tpu.memory_space<vmem>>, vector<128x128xbf16>
    %cst_8 = arith.constant dense<0.000000e+00> : vector<8x128xf32>
    %10 = tpu.matmul %8, %9, %cst_8 {dimension_numbers = #tpu.dot_dimension_numbers<[1], [0], [0], [1], [0, 0, 1, 1], [], []>} : vector<8x128xbf16>, vector<128x128xbf16>, vector<8x128xf32> -> vector<8x128xf32>
    %c0_9 = arith.constant 0 : index
    %c0_10 = arith.constant 0 : index
    %11 = vector.load %arg5[%c0_9, %c0_10] : memref<1x128xf32, #tpu.memory_space<vmem>>, vector<1x128xf32>
    %12 = vector.broadcast %11 : vector<1x128xf32> to vector<8x128xf32>
    %13 = arith.addf %10, %12 : vector<8x128xf32>
    %14 = tpu.iota {dimensions = array<i32: 1>} : vector<8x128xi32>
    %c10_i32 = arith.constant 10 : i32
    %15 = vector.broadcast %c10_i32 : i32 to vector<8x128xi32>
    %16 = arith.cmpi slt, %14, %15 : vector<8x128xi32>
    %cst_11 = arith.constant -1.000000e+30 : f32
    %17 = vector.broadcast %cst_11 : f32 to vector<8x128xf32>
    %18 = arith.select %16, %13, %17 : vector<8x128xi1>, vector<8x128xf32>
    %cst_12 = arith.constant dense<0xFF800000> : vector<8xf32>
    %19 = vector.multi_reduction <maximumf>, %18, %cst_12 [1] : vector<8x128xf32> to vector<8xf32>
    %20 = vector.shape_cast %19 : vector<8xf32> to vector<8x1xf32>
    %21 = vector.broadcast %20 : vector<8x1xf32> to vector<8x128xf32>
    %22 = arith.subf %18, %21 : vector<8x128xf32>
    %23 = math.exp %22 : vector<8x128xf32>
    %cst_13 = arith.constant dense<0.000000e+00> : vector<8xf32>
    %24 = vector.multi_reduction <add>, %23, %cst_13 [1] : vector<8x128xf32> to vector<8xf32>
    %25 = vector.shape_cast %24 : vector<8xf32> to vector<8x1xf32>
    %26 = math.log %25 : vector<8x1xf32>
    %27 = vector.broadcast %26 : vector<8x1xf32> to vector<8x128xf32>
    %28 = arith.subf %22, %27 : vector<8x128xf32>
    %c0_14 = arith.constant 0 : index
    %c0_15 = arith.constant 0 : index
    %29 = vector.load %arg6[%c0_14, %c0_15] : memref<8x128xf32, #tpu.memory_space<vmem>>, vector<8x128xf32>
    tpu.vector_store %arg6[%c0_14, %c0_15], %28 {strides = array<i32>} : memref<8x128xf32, #tpu.memory_space<vmem>>, vector<8x128xf32>,
    return
  }
  func.func @transform_0(%arg0: i32) -> (i32, i32) {
    %c0_i32 = arith.constant 0 : i32
    %c0_i32_0 = arith.constant 0 : i32
    return %arg0, %c0_i32 : i32, i32
  }
  func.func @transform_1(%arg0: i32) -> (i32, i32) {
    %c0_i32 = arith.constant 0 : i32
    %c0_i32_0 = arith.constant 0 : i32
    %c0_i32_1 = arith.constant 0 : i32
    return %c0_i32, %c0_i32_0 : i32, i32
  }
  func.func @transform_2(%arg0: i32) -> (i32, i32) {
    %c0_i32 = arith.constant 0 : i32
    %c0_i32_0 = arith.constant 0 : i32
    %c0_i32_1 = arith.constant 0 : i32
    return %c0_i32, %c0_i32_0 : i32, i32
  }
  func.func @transform_3(%arg0: i32) -> (i32, i32) {
    %c0_i32 = arith.constant 0 : i32
    %c0_i32_0 = arith.constant 0 : i32
    %c0_i32_1 = arith.constant 0 : i32
    return %c0_i32, %c0_i32_0 : i32, i32
  }
  func.func @transform_4(%arg0: i32) -> (i32, i32) {
    %c0_i32 = arith.constant 0 : i32
    %c0_i32_0 = arith.constant 0 : i32
    %c0_i32_1 = arith.constant 0 : i32
    return %c0_i32, %c0_i32_0 : i32, i32
  }
  func.func @transform_5(%arg0: i32) -> (i32, i32) {
    %c0_i32 = arith.constant 0 : i32
    %c0_i32_0 = arith.constant 0 : i32
    return %arg0, %c0_i32 : i32, i32
  }
}

</mosaic_0001>

<llo_original>
// kernel: _lambda_.7
$region0: #{_lambda_.7}
  #allocation0 [shape = 'u32[]', space=smem, size = 0x4, offset = 0x4, fixed_abs, tag = 'smem constant byte address 0x4 - core index']
  #allocation1 [shape = 'u32[144,128]{1,0:T(1,128)}', space=vmem, size = 0x12000, scoped, tag = 'internal scratch']
  %s0 = inlined_call_operand.vmem [shape: bf16[256,49], index: 0, kind: input, shape index: {}]
  %s1 = inlined_call_operand.vmem [shape: bf16[256,49], index: 1, kind: input, shape index: {}]
  %s2 = inlined_call_operand.vmem [shape: bf16[256,49], index: 2, kind: input, shape index: {}]
  %s3 = inlined_call_operand.vmem [shape: bf16[256,49], index: 3, kind: input, shape index: {}]
  %s4 = inlined_call_operand.vmem [shape: bf16[49,128], index: 4, kind: input, shape index: {}]
  %s5 = inlined_call_operand.vmem [shape: f32[1,128], index: 5, kind: input, shape index: {}]
  %s6 = inlined_call_operand.vmem [shape: f32[256,128], index: 6, kind: output, shape index: {}]
  %s7 = sld [smem:[#allocation0]]
  $region57: #{_lambda_.7} parent=0
    _
  %s9 = ssub.s32 1, %s7
  %s10 = scalar_select 0, %s9, %s7
  loop: start=0, step=1, limit=4
  $region2: #{_lambda_.7} parent=0 // loop_pre_header
    _
  $region3: #{_lambda_.7} parent=0 // loop_header
    %s12 = sphi 0, %s16
    %p13 = scmp.ge.s32.totalorder %s12, 4
    %s22 = sphi 0, %s24
    %s25 = sphi 0, %s22
    %s26 = sphi 0, %s25
    %s42 = sphi 0, %s26
    %s48 = sphi 0, %s50
    %s51 = sphi 0, %s48
    %s52 = sphi 0, %s51
    %s68 = sphi 0, %s52
    %s74 = sphi 0, %s76
    %s77 = sphi 0, %s74
    %s78 = sphi 0, %s77
    %s94 = sphi 0, %s78
    %s100 = sphi 0, %s102
    %s103 = sphi 0, %s100
    %s104 = sphi 0, %s103
    %s120 = sphi 0, %s104
    %s124 = sphi 0, %s124
    %s126 = sphi 0, %s124
    %s127 = sphi 0, %s126
    %s141 = sphi 0, %s127
    %s145 = sphi 0, %s145
    %s147 = sphi 0, %s145
    %s148 = sphi 0, %s147
    %s162 = sphi 0, %s148
    %s168 = sphi 0, %s170
    %s171 = sphi 0, %s168
    %s172 = sphi 0, %s171
    %s188 = sphi 0, %s172
  $region4: #{_lambda_.7} parent=0 // loop_header_branch
    %15 = sbr.rel (%p13) target = $region8
  $region5: #{_lambda_.7} parent=0 // loop_body
    %s17 = ssub.s32 %s12, 1
    %s18 = ssub.s32 %s12, 2
    %s19 = sadd.s32 %s12, 1
    %s20 = ssub.s32 %s12, %s19
    %p21 = scmp.eq.s32.totalorder %s20, 0
    %s23 = sadd.s32 %s22, 1
    %s24 = scalar_select %p21, %s22, %s23
    %p27 = pneg %p21
    %p28 = scmp.eq.s32.totalorder %s12, 1
    %p29 = por %p27, %p28
    %p30 = scmp.ne.s32.totalorder %s22, %s25
    %p31 = scmp.eq.s32.totalorder %s12, 0
    %p32 = por %p30, %p31
    %p33 = scmp.ne.s32.totalorder %s22, %s25
    %p34 = scmp.eq.s32.totalorder %s17, 1
    %p35 = por %p33, %p34
    %p36 = scmp.ne.s32.totalorder %s25, %s26
    %p37 = scmp.eq.s32.totalorder %s17, 0
    %p38 = por %p36, %p37
    %p39 = scmp.ne.s32.totalorder %s25, %s26
    %p40 = scmp.eq.s32.totalorder %s18, 1
    %p41 = por %p39, %p40
    %p43 = scmp.ne.s32.totalorder %s26, %s42
    %p44 = scmp.eq.s32.totalorder %s18, 0
    %p45 = por %p43, %p44
    %s46 = ssub.s32 %s12, %s19
    %p47 = scmp.eq.s32.totalorder %s46, 0
    %s49 = sadd.s32 %s48, 1
    %s50 = scalar_select %p47, %s48, %s49
    %p53 = pneg %p47
    %p54 = scmp.eq.s32.totalorder %s12, 1
    %p55 = por %p53, %p54
    %p56 = scmp.ne.s32.totalorder %s48, %s51
    %p57 = scmp.eq.s32.totalorder %s12, 0
    %p58 = por %p56, %p57
    %p59 = scmp.ne.s32.totalorder %s48, %s51
    %p60 = scmp.eq.s32.totalorder %s17, 1
    %p61 = por %p59, %p60
    %p62 = scmp.ne.s32.totalorder %s51, %s52
    %p63 = scmp.eq.s32.totalorder %s17, 0
    %p64 = por %p62, %p63
    %p65 = scmp.ne.s32.totalorder %s51, %s52
    %p66 = scmp.eq.s32.totalorder %s18, 1
    %p67 = por %p65, %p66
    %p69 = scmp.ne.s32.totalorder %s52, %s68
    %p70 = scmp.eq.s32.totalorder %s18, 0
    %p71 = por %p69, %p70
    %s72 = ssub.s32 %s12, %s19
    %p73 = scmp.eq.s32.totalorder %s72, 0
    %s75 = sadd.s32 %s74, 1
    %s76 = scalar_select %p73, %s74, %s75
    %p79 = pneg %p73
    %p80 = scmp.eq.s32.totalorder %s12, 1
    %p81 = por %p79, %p80
    %p82 = scmp.ne.s32.totalorder %s74, %s77
    %p83 = scmp.eq.s32.totalorder %s12, 0
    %p84 = por %p82, %p83
    %p85 = scmp.ne.s32.totalorder %s74, %s77
    %p86 = scmp.eq.s32.totalorder %s17, 1
    %p87 = por %p85, %p86
    %p88 = scmp.ne.s32.totalorder %s77, %s78
    %p89 = scmp.eq.s32.totalorder %s17, 0
    %p90 = por %p88, %p89
    %p91 = scmp.ne.s32.totalorder %s77, %s78
    %p92 = scmp.eq.s32.totalorder %s18, 1
    %p93 = por %p91, %p92
    %p95 = scmp.ne.s32.totalorder %s78, %s94
    %p96 = scmp.eq.s32.totalorder %s18, 0
    %p97 = por %p95, %p96
    %s98 = ssub.s32 %s12, %s19
    %p99 = scmp.eq.s32.totalorder %s98, 0
    %s101 = sadd.s32 %s100, 1
    %s102 = scalar_select %p99, %s100, %s101
    %p105 = pneg %p99
    %p106 = scmp.eq.s32.totalorder %s12, 1
    %p107 = por %p105, %p106
    %p108 = scmp.ne.s32.totalorder %s100, %s103
    %p109 = scmp.eq.s32.totalorder %s12, 0
    %p110 = por %p108, %p109
    %p111 = scmp.ne.s32.totalorder %s100, %s103
    %p112 = scmp.eq.s32.totalorder %s17, 1
    %p113 = por %p111, %p112
    %p114 = scmp.ne.s32.totalorder %s103, %s104
    %p115 = scmp.eq.s32.totalorder %s17, 0
    %p116 = por %p114, %p115
    %p117 = scmp.ne.s32.totalorder %s103, %s104
    %p118 = scmp.eq.s32.totalorder %s18, 1
    %p119 = por %p117, %p118
    %p121 = scmp.ne.s32.totalorder %s104, %s120
    %p122 = scmp.eq.s32.totalorder %s18, 0
    %p123 = por %p121, %p122
    %s125 = sadd.s32 %s124, 1
    %p128 = scmp.eq.s32.totalorder %s12, 1
    %p129 = scmp.ne.s32.totalorder %s124, %s126
    %p130 = scmp.eq.s32.totalorder %s12, 0
    %p131 = por %p129, %p130
    %p132 = scmp.ne.s32.totalorder %s124, %s126
    %p133 = scmp.eq.s32.totalorder %s17, 1
    %p134 = por %p132, %p133
    %p135 = scmp.ne.s32.totalorder %s126, %s127
    %p136 = scmp.eq.s32.totalorder %s17, 0
    %p137 = por %p135, %p136
    %p138 = scmp.ne.s32.totalorder %s126, %s127
    %p139 = scmp.eq.s32.totalorder %s18, 1
    %p140 = por %p138, %p139
    %p142 = scmp.ne.s32.totalorder %s127, %s141
    %p143 = scmp.eq.s32.totalorder %s18, 0
    %p144 = por %p142, %p143
    %s146 = sadd.s32 %s145, 1
    %p149 = scmp.eq.s32.totalorder %s12, 1
    %p150 = scmp.ne.s32.totalorder %s145, %s147
    %p151 = scmp.eq.s32.totalorder %s12, 0
    %p152 = por %p150, %p151
    %p153 = scmp.ne.s32.totalorder %s145, %s147
    %p154 = scmp.eq.s32.totalorder %s17, 1
    %p155 = por %p153, %p154
    %p156 = scmp.ne.s32.totalorder %s147, %s148
    %p157 = scmp.eq.s32.totalorder %s17, 0
    %p158 = por %p156, %p157
    %p159 = scmp.ne.s32.totalorder %s147, %s148
    %p160 = scmp.eq.s32.totalorder %s18, 1
    %p161 = por %p159, %p160
    %p163 = scmp.ne.s32.totalorder %s148, %s162
    %p164 = scmp.eq.s32.totalorder %s18, 0
    %p165 = por %p163, %p164
    %s166 = ssub.s32 %s12, %s19
    %p167 = scmp.eq.s32.totalorder %s166, 0
    %s169 = sadd.s32 %s168, 1
    %s170 = scalar_select %p167, %s168, %s169
    %p173 = pneg %p167
    %p174 = scmp.eq.s32.totalorder %s12, 1
    %p175 = por %p173, %p174
    %p176 = scmp.ne.s32.totalorder %s168, %s171
    %p177 = scmp.eq.s32.totalorder %s12, 0
    %p178 = por %p176, %p177
    %p179 = scmp.ne.s32.totalorder %s168, %s171
    %p180 = scmp.eq.s32.totalorder %s17, 1
    %p181 = por %p179, %p180
    %p182 = scmp.ne.s32.totalorder %s171, %s172
    %p183 = scmp.eq.s32.totalorder %s17, 0
    %p184 = por %p182, %p183
    %p185 = scmp.ne.s32.totalorder %s171, %s172
    %p186 = scmp.eq.s32.totalorder %s18, 1
    %p187 = por %p185, %p186
    %p189 = scmp.ne.s32.totalorder %s172, %s188
    %p190 = scmp.eq.s32.totalorder %s18, 0
    %p191 = por %p189, %p190
    %p192 = scmp.le.s32.totalorder 1, %s12
    %p193 = scmp.lt.s32.totalorder %s12, 3
    %p194 = pnand %p192, %p193
    %p195 = pneg %p194
    // Predicated region
    $region9: #{_lambda_.7} parent=5 // pred_check
      _
    $region10: #{_lambda_.7} parent=5 // pred_check_branch
      %197 = sbr.rel (%p194) target = $region12
    $region11: #{_lambda_.7} parent=5 // pred_region
      %s198 = ssub.s32 %s12, 1
      // Predicated region
      $region13: #{_lambda_.7} parent=11 // pred_check
        %p199 = pneg %p137
      $region14: #{_lambda_.7} parent=11 // pred_check_branch
        %201 = sbr.rel (%p199) target = $region16
      $region15: #{_lambda_.7} parent=11 // pred_region
        _
      $region16: #{_lambda_.7} parent=11 // pred_fallthru
        _
      // Predicated region
      $region17: #{_lambda_.7} parent=11 // pred_check
        %p202 = pneg %p158
      $region18: #{_lambda_.7} parent=11 // pred_check_branch
        %204 = sbr.rel (%p202) target = $region20
      $region19: #{_lambda_.7} parent=11 // pred_region
        _
      $region20: #{_lambda_.7} parent=11 // pred_fallthru
        _
    $region12: #{_lambda_.7} parent=5 // pred_fallthru
      _
    %p205 = scmp.lt.s32.totalorder %s12, 2
    // Predicated region
    $region21: #{_lambda_.7} parent=5 // pred_check
      %p206 = pneg %p205
    $region22: #{_lambda_.7} parent=5 // pred_check_branch
      %208 = sbr.rel (%p206) target = $region24
    $region23: #{_lambda_.7} parent=5 // pred_region
      // Predicated region
      $region25: #{_lambda_.7} parent=23 // pred_check
        %p209 = pneg %p32
      $region26: #{_lambda_.7} parent=23 // pred_check_branch
        %211 = sbr.rel (%p209) target = $region28
      $region27: #{_lambda_.7} parent=23 // pred_region
        %s212 = smul.u32 16, %s12
        %p213 = scmp.lt.s32.totalorder %s212, 31
        %s214 = scalar_select %p213, %s212, 31
        %s215 = smul.addr %s214, 4
        %s216 = scalar_lea.vmem %s0, %s215
        %s217 = smul.u32 16, %s12
      $region28: #{_lambda_.7} parent=23 // pred_fallthru
        _
      // Predicated region
      $region29: #{_lambda_.7} parent=23 // pred_check
        %p218 = pneg %p58
      $region30: #{_lambda_.7} parent=23 // pred_check_branch
        %220 = sbr.rel (%p218) target = $region32
      $region31: #{_lambda_.7} parent=23 // pred_region
        %s221 = smul.u32 16, %s12
        %p222 = scmp.lt.s32.totalorder %s221, 31
        %s223 = scalar_select %p222, %s221, 31
        %s224 = smul.addr %s223, 4
        %s225 = scalar_lea.vmem %s1, %s224
        %s226 = smul.u32 16, %s12
      $region32: #{_lambda_.7} parent=23 // pred_fallthru
        _
      // Predicated region
      $region33: #{_lambda_.7} parent=23 // pred_check
        %p227 = pneg %p84
      $region34: #{_lambda_.7} parent=23 // pred_check_branch
        %229 = sbr.rel (%p227) target = $region36
      $region35: #{_lambda_.7} parent=23 // pred_region
        %s230 = smul.u32 16, %s12
        %p231 = scmp.lt.s32.totalorder %s230, 31
        %s232 = scalar_select %p231, %s230, 31
        %s233 = smul.addr %s232, 4
        %s234 = scalar_lea.vmem %s2, %s233
        %s235 = smul.u32 16, %s12
      $region36: #{_lambda_.7} parent=23 // pred_fallthru
        _
      // Predicated region
      $region37: #{_lambda_.7} parent=23 // pred_check
        %p236 = pneg %p110
      $region38: #{_lambda_.7} parent=23 // pred_check_branch
        %238 = sbr.rel (%p236) target = $region40
      $region39: #{_lambda_.7} parent=23 // pred_region
        %s239 = smul.u32 16, %s12
        %p240 = scmp.lt.s32.totalorder %s239, 31
        %s241 = scalar_select %p240, %s239, 31
        %s242 = smul.addr %s241, 4
        %s243 = scalar_lea.vmem %s3, %s242
        %s244 = smul.u32 16, %s12
      $region40: #{_lambda_.7} parent=23 // pred_fallthru
        _
    $region24: #{_lambda_.7} parent=5 // pred_fallthru
      _
    %p245 = scmp.le.s32.totalorder 1, %s12
    %p246 = scmp.lt.s32.totalorder %s12, 3
    %p247 = pnand %p245, %p246
    %p248 = pneg %p247
    // Predicated region
    $region41: #{_lambda_.7} parent=5 // pred_check
      _
    $region42: #{_lambda_.7} parent=5 // pred_check_branch
      %250 = sbr.rel (%p247) target = $region44
    $region43: #{_lambda_.7} parent=5 // pred_region
      %s251 = ssub.s32 %s12, 1
      %s252 = smul.u32 16, %s17
      %p253 = scmp.lt.s32.totalorder %s252, 31
      %s254 = scalar_select %p253, %s252, 31
      %s255 = smul.addr %s254, 4
      %s256 = scalar_lea.vmem %s0, %s255
      %p257 = pneg %p38
      %p258 = pneg %p35
      %s259 = smul.u32 16, %s17
      %p260 = scmp.lt.s32.totalorder %s259, 31
      %s261 = scalar_select %p260, %s259, 31
      %s262 = smul.addr %s261, 4
      %s263 = scalar_lea.vmem %s1, %s262
      %p264 = pneg %p64
      %p265 = pneg %p61
      %s266 = smul.u32 16, %s17
      %p267 = scmp.lt.s32.totalorder %s266, 31
      %s268 = scalar_select %p267, %s266, 31
      %s269 = smul.addr %s268, 4
      %s270 = scalar_lea.vmem %s2, %s269
      %p271 = pneg %p90
      %p272 = pneg %p87
      %s273 = smul.u32 16, %s17
      %p274 = scmp.lt.s32.totalorder %s273, 31
      %s275 = scalar_select %p274, %s273, 31
      %s276 = smul.addr %s275, 4
      %s277 = scalar_lea.vmem %s3, %s276
      %p278 = pneg %p116
      %p279 = pneg %p113
      %p280 = pneg %p137
      %p281 = pneg %p134
      %p282 = pneg %p158
      %p283 = pneg %p155
      %p284 = pneg %p184
      %p285 = pneg %p181
      %s286 = smul.u32 16, %s17
      %p287 = scmp.lt.s32.totalorder %s286, 31
      %s288 = scalar_select %p287, %s286, 31
      %s289 = smul.addr %s288, 8
      %s290 = scalar_lea.vmem %s6, %s289
      %s291 = smul.u32 16, %s17
      %p292 = scmp.lt.s32.totalorder %s291, 31
      %s293 = scalar_select %p292, %s291, 31
      %s294 = smul.addr %s293, 4
      %s295 = scalar_lea.vmem %s0, %s294
      %s296 = smul.u32 16, %s17
      %s297 = smul.u32 16, %s17
      %p298 = scmp.lt.s32.totalorder %s297, 31
      %s299 = scalar_select %p298, %s297, 31
      %s300 = smul.addr %s299, 4
      %s301 = scalar_lea.vmem %s1, %s300
      %s302 = smul.u32 16, %s17
      %s303 = smul.u32 16, %s17
      %p304 = scmp.lt.s32.totalorder %s303, 31
      %s305 = scalar_select %p304, %s303, 31
      %s306 = smul.addr %s305, 4
      %s307 = scalar_lea.vmem %s2, %s306
      %s308 = smul.u32 16, %s17
      %s309 = smul.u32 16, %s17
      %p310 = scmp.lt.s32.totalorder %s309, 31
      %s311 = scalar_select %p310, %s309, 31
      %s312 = smul.addr %s311, 4
      %s313 = scalar_lea.vmem %s3, %s312
      %s314 = smul.u32 16, %s17
      %s315 = smul.u32 16, %s17
      %p316 = scmp.lt.s32.totalorder %s315, 31
      %s317 = scalar_select %p316, %s315, 31
      %s318 = smul.addr %s317, 8
      %s319 = scalar_lea.vmem %s6, %s318
      %s320 = smul.u32 16, %s17
      %v322 = vld [vmem:[%s4] sm:$0xf]
      %v323 = vld [vmem:[%s4 + $0x4] sm:$0xf]
      %v324 = vld [vmem:[%s4 + $0x8] sm:$0xf]
      %v325 = vld [vmem:[%s4 + $0xc] sm:$0xf]
      %v326 = vld [vmem:[%s4 + $0x10] sm:$0xf]
      %v327 = vld [vmem:[%s4 + $0x14] sm:$0xf]
      %v328 = vld [vmem:[%s4 + $0x18] sm:$0x1]
      %v329 = vld [vmem:[%s295] sm:$0xf]
      %v330 = vld [vmem:[%s295 + $0x4] sm:$0xf]
      %v331 = vld [vmem:[%s295 + $0x8] sm:$0xf]
      %v332 = vld [vmem:[%s295 + $0xc] sm:$0xf]
      %v333 = vld [vmem:[%s295 + $0x10] sm:$0xf]
      %v334 = vld [vmem:[%s295 + $0x14] sm:$0xf]
      %v335 = vld [vmem:[%s295 + $0x18] sm:$0xf]
      %v336 = vld [vmem:[%s295 + $0x1c] sm:$0xf]
      %v337 = vld [vmem:[%s295 + $0x20] sm:$0xf]
      %v338 = vld [vmem:[%s295 + $0x24] sm:$0xf]
      %v339 = vld [vmem:[%s295 + $0x28] sm:$0xf]
      %v340 = vld [vmem:[%s295 + $0x2c] sm:$0xf]
      %v341 = vld [vmem:[%s295 + $0x30] sm:$0xf]
      %v342 = vld [vmem:[%s295 + $0x34] sm:$0xf]
      %v343 = vld [vmem:[%s295 + $0x38] sm:$0xf]
      %v344 = vld [vmem:[%s295 + $0x3c] sm:$0xf]
      %v361 = vunpack.c.l.b16 %v329
      %v362 = vunpack.c.l.b16 %v330
      %v363 = vunpack.c.l.b16 %v331
      %v364 = vunpack.c.l.b16 %v332
      %v365 = vunpack.c.l.b16 %v333
      %v366 = vunpack.c.l.b16 %v334
      %v367 = vunpack.c.l.b16 %v335
      %v368 = vunpack.c.l.b16 %v336
      %v369 = vunpack.c.l.b16 %v337
      %v370 = vunpack.c.l.b16 %v338
      %v371 = vunpack.c.l.b16 %v339
      %v372 = vunpack.c.l.b16 %v340
      %v373 = vunpack.c.l.b16 %v341
      %v374 = vunpack.c.l.b16 %v342
      %v375 = vunpack.c.l.b16 %v343
      %v376 = vunpack.c.l.b16 %v344
      %v377 = vpack.c.b16 %v362, %v361
      %v378 = vpack.c.b16 %v364, %v363
      %v379 = vpack.c.b16 %v366, %v365
      %v380 = vpack.c.b16 %v368, %v367
      %v381 = vpack.c.b16 %v370, %v369
      %v382 = vpack.c.b16 %v372, %v371
      %v383 = vpack.c.b16 %v374, %v373
      %v384 = vpack.c.b16 %v376, %v375
      %v392 = vunpack.c.l.b16 %v322
      %v393 = vunpack.c.l.b16 %v323
      %v394 = vunpack.c.l.b16 %v324
      %v395 = vunpack.c.l.b16 %v325
      %v396 = vunpack.c.l.b16 %v326
      %v397 = vunpack.c.l.b16 %v327
      %v398 = vunpack.c.l.b16 %v328
      %v399 = vpack.c.b16 %v393, %v392
      %v400 = vpack.c.b16 %v395, %v394
      %v401 = vpack.c.b16 %v397, %v396
      %v402 = vpack.c.b16 %v398, %v398
      %vm406 = vcmask 400384
      %v408 = vsel %vm406, %v377, 0
      %v411 = vsel %vm406, %v378, 0
      %v414 = vsel %vm406, %v379, 0
      %v417 = vsel %vm406, %v380, 0
      %v420 = vsel %vm406, %v381, 0
      %v423 = vsel %vm406, %v382, 0
      %v426 = vsel %vm406, %v383, 0
      %v429 = vsel %vm406, %v384, 0
      %vm431 = vcmask 1040384
      %v432 = vsel 0, 4294967295, 65535
      %v433 = vsel %vm431, %v432, 0
      %v435 = vand.u32 %v402, %v433
      %437 = vmatprep.subr.bf16.mxu0 0
      %438 = vmatpush1.bf16.msra.mxu0 %v399
      %439 = vmatprep.subr.bf16.mxu0 0
      %440 = vmatpush1.bf16.msra.mxu0 %v400
      %441 = vmatprep.subr.bf16.mxu0 0
      %442 = vmatpush1.bf16.msra.mxu0 %v401
      %443 = vmatprep.subr.bf16.mxu0 0
      %444 = vmatpush1.bf16.msra.mxu0 %v435
      %445 = vmatprep.subr.bf16.mxu0 0
      %446 = vmatpush1.bf16.msra.mxu0 0
      %447 = vmatprep.subr.bf16.mxu0 0
      %448 = vmatpush1.bf16.msra.mxu0 0
      %449 = vmatprep.subr.bf16.mxu0 0
      %450 = vmatpush1.bf16.msra.mxu0 0
      %451 = vmatprep.subr.bf16.mxu0 0
      %452 = vmatpush1.bf16.msra.mxu0 0
      %453 = vmatprep.subr.bf16.mxu0 0
      %454 = vmatpush1.bf16.msra.mxu0 0
      %455 = vmatprep.subr.bf16.mxu0 0
      %456 = vmatpush1.bf16.msra.mxu0 0
      %457 = vmatprep.subr.bf16.mxu0 0
      %458 = vmatpush1.bf16.msra.mxu0 0
      %459 = vmatprep.subr.bf16.mxu0 0
      %460 = vmatpush1.bf16.msra.mxu0 0
      %461 = vmatprep.subr.bf16.mxu0 0
      %462 = vmatpush1.bf16.msra.mxu0 0
      %463 = vmatprep.subr.bf16.mxu0 0
      %464 = vmatpush1.bf16.msra.mxu0 0
      %465 = vmatprep.subr.bf16.mxu0 0
      %466 = vmatpush1.bf16.msra.mxu0 0
      %467 = vmatprep.subr.bf16.mxu0 0
      %468 = vmatpush1.bf16.msra.mxu0 0
      %469 = vmatprep.mubr.bf16.mxu0 0
      %470 = vmatmul.mubr.bf16.gmra.mrb[0].mxu0 %v408
      %v471 = vpop.f32.mrb[0].mxu0
      %v472 = vadd.f32 0.0, %v471
      %v473 = vpop.f32.mrb[0].mxu0
      %v474 = vpop.f32.mrb[0].mxu0
      %v475 = vadd.f32 0.0, %v474
      %v476 = vpop.f32.mrb[0].mxu0
      %477 = vmatprep.mubr.bf16.mxu0 0
      %478 = vmatmul.mubr.bf16.gmra.mrb[0].mxu0 %v411
      %v479 = vpop.f32.mrb[0].mxu0
      %v480 = vadd.f32 0.0, %v479
      %v481 = vpop.f32.mrb[0].mxu0
      %v482 = vpop.f32.mrb[0].mxu0
      %v483 = vadd.f32 0.0, %v482
      %v484 = vpop.f32.mrb[0].mxu0
      %485 = vmatprep.mubr.bf16.mxu0 0
      %486 = vmatmul.mubr.bf16.gmra.mrb[0].mxu0 %v414
      %v487 = vpop.f32.mrb[0].mxu0
      %v488 = vadd.f32 0.0, %v487
      %v489 = vpop.f32.mrb[0].mxu0
      %v490 = vpop.f32.mrb[0].mxu0
      %v491 = vadd.f32 0.0, %v490
      %v492 = vpop.f32.mrb[0].mxu0
      %493 = vmatprep.mubr.bf16.mxu0 0
      %494 = vmatmul.mubr.bf16.gmra.mrb[0].mxu0 %v417
      %v495 = vpop.f32.mrb[0].mxu0
      %v496 = vadd.f32 0.0, %v495
      %v497 = vpop.f32.mrb[0].mxu0
      %v498 = vpop.f32.mrb[0].mxu0
      %v499 = vadd.f32 0.0, %v498
      %v500 = vpop.f32.mrb[0].mxu0
      %501 = vmatprep.mubr.bf16.mxu0 0
      %502 = vmatmul.mubr.bf16.gmra.mrb[0].mxu0 %v420
      %v503 = vpop.f32.mrb[0].mxu0
      %v504 = vadd.f32 0.0, %v503
      %v505 = vpop.f32.mrb[0].mxu0
      %v506 = vpop.f32.mrb[0].mxu0
      %v507 = vadd.f32 0.0, %v506
      %v508 = vpop.f32.mrb[0].mxu0
      %509 = vmatprep.mubr.bf16.mxu0 0
      %510 = vmatmul.mubr.bf16.gmra.mrb[0].mxu0 %v423
      %v511 = vpop.f32.mrb[0].mxu0
      %v512 = vadd.f32 0.0, %v511
      %v513 = vpop.f32.mrb[0].mxu0
      %v514 = vpop.f32.mrb[0].mxu0
      %v515 = vadd.f32 0.0, %v514
      %v516 = vpop.f32.mrb[0].mxu0
      %517 = vmatprep.mubr.bf16.mxu0 0
      %518 = vmatmul.mubr.bf16.gmra.mrb[0].mxu0 %v426
      %v519 = vpop.f32.mrb[0].mxu0
      %v520 = vadd.f32 0.0, %v519
      %v521 = vpop.f32.mrb[0].mxu0
      %v522 = vpop.f32.mrb[0].mxu0
      %v523 = vadd.f32 0.0, %v522
      %v524 = vpop.f32.mrb[0].mxu0
      %525 = vmatprep.mubr.bf16.mxu0 0
      %526 = vmatmul.mubr.bf16.gmra.mrb[0].mxu0 %v429
      %v527 = vpop.f32.mrb[0].mxu0
      %v528 = vadd.f32 0.0, %v527
      %v529 = vpop.f32.mrb[0].mxu0
      %v530 = vpop.f32.mrb[0].mxu0
      %v531 = vadd.f32 0.0, %v530
      %v532 = vpop.f32.mrb[0].mxu0
      %533 = vdwg.mxu0
      %v534 = vld [vmem:[%s301] sm:$0xf]
      %v535 = vld [vmem:[%s301 + $0x4] sm:$0xf]
      %v536 = vld [vmem:[%s301 + $0x8] sm:$0xf]
      %v537 = vld [vmem:[%s301 + $0xc] sm:$0xf]
      %v538 = vld [vmem:[%s301 + $0x10] sm:$0xf]
      %v539 = vld [vmem:[%s301 + $0x14] sm:$0xf]
      %v540 = vld [vmem:[%s301 + $0x18] sm:$0xf]
      %v541 = vld [vmem:[%s301 + $0x1c] sm:$0xf]
      %v542 = vld [vmem:[%s301 + $0x20] sm:$0xf]
      %v543 = vld [vmem:[%s301 + $0x24] sm:$0xf]
      %v544 = vld [vmem:[%s301 + $0x28] sm:$0xf]
      %v545 = vld [vmem:[%s301 + $0x2c] sm:$0xf]
      %v546 = vld [vmem:[%s301 + $0x30] sm:$0xf]
      %v547 = vld [vmem:[%s301 + $0x34] sm:$0xf]
      %v548 = vld [vmem:[%s301 + $0x38] sm:$0xf]
      %v549 = vld [vmem:[%s301 + $0x3c] sm:$0xf]
      %v566 = vunpack.c.l.b16 %v534
      %v567 = vunpack.c.l.b16 %v535
      %v568 = vunpack.c.l.b16 %v536
      %v569 = vunpack.c.l.b16 %v537
      %v570 = vunpack.c.l.b16 %v538
      %v571 = vunpack.c.l.b16 %v539
      %v572 = vunpack.c.l.b16 %v540
      %v573 = vunpack.c.l.b16 %v541
      %v574 = vunpack.c.l.b16 %v542
      %v575 = vunpack.c.l.b16 %v543
      %v576 = vunpack.c.l.b16 %v544
      %v577 = vunpack.c.l.b16 %v545
      %v578 = vunpack.c.l.b16 %v546
      %v579 = vunpack.c.l.b16 %v547
      %v580 = vunpack.c.l.b16 %v548
      %v581 = vunpack.c.l.b16 %v549
      %v582 = vpack.c.b16 %v567, %v566
      %v583 = vpack.c.b16 %v569, %v568
      %v584 = vpack.c.b16 %v571, %v570
      %v585 = vpack.c.b16 %v573, %v572
      %v586 = vpack.c.b16 %v575, %v574
      %v587 = vpack.c.b16 %v577, %v576
      %v588 = vpack.c.b16 %v579, %v578
      %v589 = vpack.c.b16 %v581, %v580
      %v591 = vsel %vm406, %v582, 0
      %v594 = vsel %vm406, %v583, 0
      %v597 = vsel %vm406, %v584, 0
      %v600 = vsel %vm406, %v585, 0
      %v603 = vsel %vm406, %v586, 0
      %v606 = vsel %vm406, %v587, 0
      %v609 = vsel %vm406, %v588, 0
      %v612 = vsel %vm406, %v589, 0
      %614 = vmatprep.subr.bf16.mxu0 0
      %615 = vmatpush1.bf16.msra.mxu0 %v399
      %616 = vmatprep.subr.bf16.mxu0 0
      %617 = vmatpush1.bf16.msra.mxu0 %v400
      %618 = vmatprep.subr.bf16.mxu0 0
      %619 = vmatpush1.bf16.msra.mxu0 %v401
      %620 = vmatprep.subr.bf16.mxu0 0
      %621 = vmatpush1.bf16.msra.mxu0 %v435
      %622 = vmatprep.subr.bf16.mxu0 0
      %623 = vmatpush1.bf16.msra.mxu0 0
      %624 = vmatprep.subr.bf16.mxu0 0
      %625 = vmatpush1.bf16.msra.mxu0 0
      %626 = vmatprep.subr.bf16.mxu0 0
      %627 = vmatpush1.bf16.msra.mxu0 0
      %628 = vmatprep.subr.bf16.mxu0 0
      %629 = vmatpush1.bf16.msra.mxu0 0
      %630 = vmatprep.subr.bf16.mxu0 0
      %631 = vmatpush1.bf16.msra.mxu0 0
      %632 = vmatprep.subr.bf16.mxu0 0
      %633 = vmatpush1.bf16.msra.mxu0 0
      %634 = vmatprep.subr.bf16.mxu0 0
      %635 = vmatpush1.bf16.msra.mxu0 0
      %636 = vmatprep.subr.bf16.mxu0 0
      %637 = vmatpush1.bf16.msra.mxu0 0
      %638 = vmatprep.subr.bf16.mxu0 0
      %639 = vmatpush1.bf16.msra.mxu0 0
      %640 = vmatprep.subr.bf16.mxu0 0
      %641 = vmatpush1.bf16.msra.mxu0 0
      %642 = vmatprep.subr.bf16.mxu0 0
      %643 = vmatpush1.bf16.msra.mxu0 0
      %644 = vmatprep.subr.bf16.mxu0 0
      %645 = vmatpush1.bf16.msra.mxu0 0
      %646 = vmatprep.mubr.bf16.mxu0 0
      %647 = vmatmul.mubr.bf16.gmra.mrb[0].mxu0 %v591
      %v648 = vpop.f32.mrb[0].mxu0
      %v649 = vadd.f32 0.0, %v648
      %v650 = vpop.f32.mrb[0].mxu0
      %v651 = vpop.f32.mrb[0].mxu0
      %v652 = vadd.f32 0.0, %v651
      %v653 = vpop.f32.mrb[0].mxu0
      %654 = vmatprep.mubr.bf16.mxu0 0
      %655 = vmatmul.mubr.bf16.gmra.mrb[0].mxu0 %v594
      %v656 = vpop.f32.mrb[0].mxu0
      %v657 = vadd.f32 0.0, %v656
      %v658 = vpop.f32.mrb[0].mxu0
      %v659 = vpop.f32.mrb[0].mxu0
      %v660 = vadd.f32 0.0, %v659
      %v661 = vpop.f32.mrb[0].mxu0
      %662 = vmatprep.mubr.bf16.mxu0 0
      %663 = vmatmul.mubr.bf16.gmra.mrb[0].mxu0 %v597
      %v664 = vpop.f32.mrb[0].mxu0
      %v665 = vadd.f32 0.0, %v664
      %v666 = vpop.f32.mrb[0].mxu0
      %v667 = vpop.f32.mrb[0].mxu0
      %v668 = vadd.f32 0.0, %v667
      %v669 = vpop.f32.mrb[0].mxu0
      %670 = vmatprep.mubr.bf16.mxu0 0
      %671 = vmatmul.mubr.bf16.gmra.mrb[0].mxu0 %v600
      %v672 = vpop.f32.mrb[0].mxu0
      %v673 = vadd.f32 0.0, %v672
      %v674 = vpop.f32.mrb[0].mxu0
      %v675 = vpop.f32.mrb[0].mxu0
      %v676 = vadd.f32 0.0, %v675
      %v677 = vpop.f32.mrb[0].mxu0
      %678 = vmatprep.mubr.bf16.mxu0 0
      %679 = vmatmul.mubr.bf16.gmra.mrb[0].mxu0 %v603
      %v680 = vpop.f32.mrb[0].mxu0
      %v681 = vadd.f32 0.0, %v680
      %v682 = vpop.f32.mrb[0].mxu0
      %v683 = vpop.f32.mrb[0].mxu0
      %v684 = vadd.f32 0.0, %v683
      %v685 = vpop.f32.mrb[0].mxu0
      %686 = vmatprep.mubr.bf16.mxu0 0
      %687 = vmatmul.mubr.bf16.gmra.mrb[0].mxu0 %v606
      %v688 = vpop.f32.mrb[0].mxu0
      %v689 = vadd.f32 0.0, %v688
      %v690 = vpop.f32.mrb[0].mxu0
      %v691 = vpop.f32.mrb[0].mxu0
      %v692 = vadd.f32 0.0, %v691
      %v693 = vpop.f32.mrb[0].mxu0
      %694 = vmatprep.mubr.bf16.mxu0 0
      %695 = vmatmul.mubr.bf16.gmra.mrb[0].mxu0 %v609
      %v696 = vpop.f32.mrb[0].mxu0
      %v697 = vadd.f32 0.0, %v696
      %v698 = vpop.f32.mrb[0].mxu0
      %v699 = vpop.f32.mrb[0].mxu0
      %v700 = vadd.f32 0.0, %v699
      %v701 = vpop.f32.mrb[0].mxu0
      %702 = vmatprep.mubr.bf16.mxu0 0
      %703 = vmatmul.mubr.bf16.gmra.mrb[0].mxu0 %v612
      %v704 = vpop.f32.mrb[0].mxu0
      %v705 = vadd.f32 0.0, %v704
      %v706 = vpop.f32.mrb[0].mxu0
      %v707 = vpop.f32.mrb[0].mxu0
      %v708 = vadd.f32 0.0, %v707
      %v709 = vpop.f32.mrb[0].mxu0
      %710 = vdwg.mxu0
      %v711 = vmax.f32 %v472, %v649
      %v712 = vmax.f32 %v475, %v652
      %v713 = vmax.f32 %v480, %v657
      %v714 = vmax.f32 %v483, %v660
      %v715 = vmax.f32 %v488, %v665
      %v716 = vmax.f32 %v491, %v668
      %v717 = vmax.f32 %v496, %v673
      %v718 = vmax.f32 %v499, %v676
      %v719 = vmax.f32 %v504, %v681
      %v720 = vmax.f32 %v507, %v684
      %v721 = vmax.f32 %v512, %v689
      %v722 = vmax.f32 %v515, %v692
      %v723 = vmax.f32 %v520, %v697
      %v724 = vmax.f32 %v523, %v700
      %v725 = vmax.f32 %v528, %v705
      %v726 = vmax.f32 %v531, %v708
      %v727 = vld [vmem:[%s307] sm:$0xf]
      %v728 = vld [vmem:[%s307 + $0x4] sm:$0xf]
      %v729 = vld [vmem:[%s307 + $0x8] sm:$0xf]
      %v730 = vld [vmem:[%s307 + $0xc] sm:$0xf]
      %v731 = vld [vmem:[%s307 + $0x10] sm:$0xf]
      %v732 = vld [vmem:[%s307 + $0x14] sm:$0xf]
      %v733 = vld [vmem:[%s307 + $0x18] sm:$0xf]
      %v734 = vld [vmem:[%s307 + $0x1c] sm:$0xf]
      %v735 = vld [vmem:[%s307 + $0x20] sm:$0xf]
      %v736 = vld [vmem:[%s307 + $0x24] sm:$0xf]
      %v737 = vld [vmem:[%s307 + $0x28] sm:$0xf]
      %v738 = vld [vmem:[%s307 + $0x2c] sm:$0xf]
      %v739 = vld [vmem:[%s307 + $0x30] sm:$0xf]
      %v740 = vld [vmem:[%s307 + $0x34] sm:$0xf]
      %v741 = vld [vmem:[%s307 + $0x38] sm:$0xf]
      %v742 = vld [vmem:[%s307 + $0x3c] sm:$0xf]
      %v759 = vunpack.c.l.b16 %v727
      %v760 = vunpack.c.l.b16 %v728
      %v761 = vunpack.c.l.b16 %v729
      %v762 = vunpack.c.l.b16 %v730
      %v763 = vunpack.c.l.b16 %v731
      %v764 = vunpack.c.l.b16 %v732
      %v765 = vunpack.c.l.b16 %v733
      %v766 = vunpack.c.l.b16 %v734
      %v767 = vunpack.c.l.b16 %v735
      %v768 = vunpack.c.l.b16 %v736
      %v769 = vunpack.c.l.b16 %v737
      %v770 = vunpack.c.l.b16 %v738
      %v771 = vunpack.c.l.b16 %v739
      %v772 = vunpack.c.l.b16 %v740
      %v773 = vunpack.c.l.b16 %v741
      %v774 = vunpack.c.l.b16 %v742
      %v775 = vpack.c.b16 %v760, %v759
      %v776 = vpack.c.b16 %v762, %v761
      %v777 = vpack.c.b16 %v764, %v763
      %v778 = vpack.c.b16 %v766, %v765
      %v779 = vpack.c.b16 %v768, %v767
      %v780 = vpack.c.b16 %v770, %v769
      %v781 = vpack.c.b16 %v772, %v771
      %v782 = vpack.c.b16 %v774, %v773
      %v784 = vsel %vm406, %v775, 0
      %v787 = vsel %vm406, %v776, 0
      %v790 = vsel %vm406, %v777, 0
      %v793 = vsel %vm406, %v778, 0
      %v796 = vsel %vm406, %v779, 0
      %v799 = vsel %vm406, %v780, 0
      %v802 = vsel %vm406, %v781, 0
      %v805 = vsel %vm406, %v782, 0
      %807 = vmatprep.subr.bf16.mxu0 0
      %808 = vmatpush1.bf16.msra.mxu0 %v399
      %809 = vmatprep.subr.bf16.mxu0 0
      %810 = vmatpush1.bf16.msra.mxu0 %v400
      %811 = vmatprep.subr.bf16.mxu0 0
      %812 = vmatpush1.bf16.msra.mxu0 %v401
      %813 = vmatprep.subr.bf16.mxu0 0
      %814 = vmatpush1.bf16.msra.mxu0 %v435
      %815 = vmatprep.subr.bf16.mxu0 0
      %816 = vmatpush1.bf16.msra.mxu0 0
      %817 = vmatprep.subr.bf16.mxu0 0
      %818 = vmatpush1.bf16.msra.mxu0 0
      %819 = vmatprep.subr.bf16.mxu0 0
      %820 = vmatpush1.bf16.msra.mxu0 0
      %821 = vmatprep.subr.bf16.mxu0 0
      %822 = vmatpush1.bf16.msra.mxu0 0
      %823 = vmatprep.subr.bf16.mxu0 0
      %824 = vmatpush1.bf16.msra.mxu0 0
      %825 = vmatprep.subr.bf16.mxu0 0
      %826 = vmatpush1.bf16.msra.mxu0 0
      %827 = vmatprep.subr.bf16.mxu0 0
      %828 = vmatpush1.bf16.msra.mxu0 0
      %829 = vmatprep.subr.bf16.mxu0 0
      %830 = vmatpush1.bf16.msra.mxu0 0
      %831 = vmatprep.subr.bf16.mxu0 0
      %832 = vmatpush1.bf16.msra.mxu0 0
      %833 = vmatprep.subr.bf16.mxu0 0
      %834 = vmatpush1.bf16.msra.mxu0 0
      %835 = vmatprep.subr.bf16.mxu0 0
      %836 = vmatpush1.bf16.msra.mxu0 0
      %837 = vmatprep.subr.bf16.mxu0 0
      %838 = vmatpush1.bf16.msra.mxu0 0
      %839 = vmatprep.mubr.bf16.mxu0 0
      %840 = vmatmul.mubr.bf16.gmra.mrb[0].mxu0 %v784
      %v841 = vpop.f32.mrb[0].mxu0
      %v842 = vadd.f32 0.0, %v841
      %v843 = vpop.f32.mrb[0].mxu0
      %v844 = vpop.f32.mrb[0].mxu0
      %v845 = vadd.f32 0.0, %v844
      %v846 = vpop.f32.mrb[0].mxu0
      %847 = vmatprep.mubr.bf16.mxu0 0
      %848 = vmatmul.mubr.bf16.gmra.mrb[0].mxu0 %v787
      %v849 = vpop.f32.mrb[0].mxu0
      %v850 = vadd.f32 0.0, %v849
      %v851 = vpop.f32.mrb[0].mxu0
      %v852 = vpop.f32.mrb[0].mxu0
      %v853 = vadd.f32 0.0, %v852
      %v854 = vpop.f32.mrb[0].mxu0
      %855 = vmatprep.mubr.bf16.mxu0 0
      %856 = vmatmul.mubr.bf16.gmra.mrb[0].mxu0 %v790
      %v857 = vpop.f32.mrb[0].mxu0
      %v858 = vadd.f32 0.0, %v857
      %v859 = vpop.f32.mrb[0].mxu0
      %v860 = vpop.f32.mrb[0].mxu0
      %v861 = vadd.f32 0.0, %v860
      %v862 = vpop.f32.mrb[0].mxu0
      %863 = vmatprep.mubr.bf16.mxu0 0
      %864 = vmatmul.mubr.bf16.gmra.mrb[0].mxu0 %v793
      %v865 = vpop.f32.mrb[0].mxu0
      %v866 = vadd.f32 0.0, %v865
      %v867 = vpop.f32.mrb[0].mxu0
      %v868 = vpop.f32.mrb[0].mxu0
      %v869 = vadd.f32 0.0, %v868
      %v870 = vpop.f32.mrb[0].mxu0
      %871 = vmatprep.mubr.bf16.mxu0 0
      %872 = vmatmul.mubr.bf16.gmra.mrb[0].mxu0 %v796
      %v873 = vpop.f32.mrb[0].mxu0
      %v874 = vadd.f32 0.0, %v873
      %v875 = vpop.f32.mrb[0].mxu0
      %v876 = vpop.f32.mrb[0].mxu0
      %v877 = vadd.f32 0.0, %v876
      %v878 = vpop.f32.mrb[0].mxu0
      %879 = vmatprep.mubr.bf16.mxu0 0
      %880 = vmatmul.mubr.bf16.gmra.mrb[0].mxu0 %v799
      %v881 = vpop.f32.mrb[0].mxu0
      %v882 = vadd.f32 0.0, %v881
      %v883 = vpop.f32.mrb[0].mxu0
      %v884 = vpop.f32.mrb[0].mxu0
      %v885 = vadd.f32 0.0, %v884
      %v886 = vpop.f32.mrb[0].mxu0
      %887 = vmatprep.mubr.bf16.mxu0 0
      %888 = vmatmul.mubr.bf16.gmra.mrb[0].mxu0 %v802
      %v889 = vpop.f32.mrb[0].mxu0
      %v890 = vadd.f32 0.0, %v889
      %v891 = vpop.f32.mrb[0].mxu0
      %v892 = vpop.f32.mrb[0].mxu0
      %v893 = vadd.f32 0.0, %v892
      %v894 = vpop.f32.mrb[0].mxu0
      %895 = vmatprep.mubr.bf16.mxu0 0
      %896 = vmatmul.mubr.bf16.gmra.mrb[0].mxu0 %v805
      %v897 = vpop.f32.mrb[0].mxu0
      %v898 = vadd.f32 0.0, %v897
      %v899 = vpop.f32.mrb[0].mxu0
      %v900 = vpop.f32.mrb[0].mxu0
      %v901 = vadd.f32 0.0, %v900
      %v902 = vpop.f32.mrb[0].mxu0
      %903 = vdwg.mxu0
      %v904 = vld [vmem:[%s313] sm:$0xf]
      %v905 = vld [vmem:[%s313 + $0x4] sm:$0xf]
      %v906 = vld [vmem:[%s313 + $0x8] sm:$0xf]
      %v907 = vld [vmem:[%s313 + $0xc] sm:$0xf]
      %v908 = vld [vmem:[%s313 + $0x10] sm:$0xf]
      %v909 = vld [vmem:[%s313 + $0x14] sm:$0xf]
      %v910 = vld [vmem:[%s313 + $0x18] sm:$0xf]
      %v911 = vld [vmem:[%s313 + $0x1c] sm:$0xf]
      %v912 = vld [vmem:[%s313 + $0x20] sm:$0xf]
      %v913 = vld [vmem:[%s313 + $0x24] sm:$0xf]
      %v914 = vld [vmem:[%s313 + $0x28] sm:$0xf]
      %v915 = vld [vmem:[%s313 + $0x2c] sm:$0xf]
      %v916 = vld [vmem:[%s313 + $0x30] sm:$0xf]
      %v917 = vld [vmem:[%s313 + $0x34] sm:$0xf]
      %v918 = vld [vmem:[%s313 + $0x38] sm:$0xf]
      %v919 = vld [vmem:[%s313 + $0x3c] sm:$0xf]
      %v936 = vunpack.c.l.b16 %v904
      %v937 = vunpack.c.l.b16 %v905
      %v938 = vunpack.c.l.b16 %v906
      %v939 = vunpack.c.l.b16 %v907
      %v940 = vunpack.c.l.b16 %v908
      %v941 = vunpack.c.l.b16 %v909
      %v942 = vunpack.c.l.b16 %v910
      %v943 = vunpack.c.l.b16 %v911
      %v944 = vunpack.c.l.b16 %v912
      %v945 = vunpack.c.l.b16 %v913
      %v946 = vunpack.c.l.b16 %v914
      %v947 = vunpack.c.l.b16 %v915
      %v948 = vunpack.c.l.b16 %v916
      %v949 = vunpack.c.l.b16 %v917
      %v950 = vunpack.c.l.b16 %v918
      %v951 = vunpack.c.l.b16 %v919
      %v952 = vpack.c.b16 %v937, %v936
      %v953 = vpack.c.b16 %v939, %v938
      %v954 = vpack.c.b16 %v941, %v940
      %v955 = vpack.c.b16 %v943, %v942
      %v956 = vpack.c.b16 %v945, %v944
      %v957 = vpack.c.b16 %v947, %v946
      %v958 = vpack.c.b16 %v949, %v948
      %v959 = vpack.c.b16 %v951, %v950
      %v961 = vsel %vm406, %v952, 0
      %v964 = vsel %vm406, %v953, 0
      %v967 = vsel %vm406, %v954, 0
      %v970 = vsel %vm406, %v955, 0
      %v973 = vsel %vm406, %v956, 0
      %v976 = vsel %vm406, %v957, 0
      %v979 = vsel %vm406, %v958, 0
      %v982 = vsel %vm406, %v959, 0
      %984 = vmatprep.subr.bf16.mxu0 0
      %985 = vmatpush1.bf16.msra.mxu0 %v399
      %986 = vmatprep.subr.bf16.mxu0 0
      %987 = vmatpush1.bf16.msra.mxu0 %v400
      %988 = vmatprep.subr.bf16.mxu0 0
      %989 = vmatpush1.bf16.msra.mxu0 %v401
      %990 = vmatprep.subr.bf16.mxu0 0
      %991 = vmatpush1.bf16.msra.mxu0 %v435
      %992 = vmatprep.subr.bf16.mxu0 0
      %993 = vmatpush1.bf16.msra.mxu0 0
      %994 = vmatprep.subr.bf16.mxu0 0
      %995 = vmatpush1.bf16.msra.mxu0 0
      %996 = vmatprep.subr.bf16.mxu0 0
      %997 = vmatpush1.bf16.msra.mxu0 0
      %998 = vmatprep.subr.bf16.mxu0 0
      %999 = vmatpush1.bf16.msra.mxu0 0
      %1000 = vmatprep.subr.bf16.mxu0 0
      %1001 = vmatpush1.bf16.msra.mxu0 0
      %1002 = vmatprep.subr.bf16.mxu0 0
      %1003 = vmatpush1.bf16.msra.mxu0 0
      %1004 = vmatprep.subr.bf16.mxu0 0
      %1005 = vmatpush1.bf16.msra.mxu0 0
      %1006 = vmatprep.subr.bf16.mxu0 0
      %1007 = vmatpush1.bf16.msra.mxu0 0
      %1008 = vmatprep.subr.bf16.mxu0 0
      %1009 = vmatpush1.bf16.msra.mxu0 0
      %1010 = vmatprep.subr.bf16.mxu0 0
      %1011 = vmatpush1.bf16.msra.mxu0 0
      %1012 = vmatprep.subr.bf16.mxu0 0
      %1013 = vmatpush1.bf16.msra.mxu0 0
      %1014 = vmatprep.subr.bf16.mxu0 0
      %1015 = vmatpush1.bf16.msra.mxu0 0
      %1016 = vmatprep.mubr.bf16.mxu0 0
      %1017 = vmatmul.mubr.bf16.gmra.mrb[0].mxu0 %v961
      %v1018 = vpop.f32.mrb[0].mxu0
      %v1019 = vadd.f32 0.0, %v1018
      %v1020 = vpop.f32.mrb[0].mxu0
      %v1021 = vpop.f32.mrb[0].mxu0
      %v1022 = vadd.f32 0.0, %v1021
      %v1023 = vpop.f32.mrb[0].mxu0
      %1024 = vmatprep.mubr.bf16.mxu0 0
      %1025 = vmatmul.mubr.bf16.gmra.mrb[0].mxu0 %v964
      %v1026 = vpop.f32.mrb[0].mxu0
      %v1027 = vadd.f32 0.0, %v1026
      %v1028 = vpop.f32.mrb[0].mxu0
      %v1029 = vpop.f32.mrb[0].mxu0
      %v1030 = vadd.f32 0.0, %v1029
      %v1031 = vpop.f32.mrb[0].mxu0
      %1032 = vmatprep.mubr.bf16.mxu0 0
      %1033 = vmatmul.mubr.bf16.gmra.mrb[0].mxu0 %v967
      %v1034 = vpop.f32.mrb[0].mxu0
      %v1035 = vadd.f32 0.0, %v1034
      %v1036 = vpop.f32.mrb[0].mxu0
      %v1037 = vpop.f32.mrb[0].mxu0
      %v1038 = vadd.f32 0.0, %v1037
      %v1039 = vpop.f32.mrb[0].mxu0
      %1040 = vmatprep.mubr.bf16.mxu0 0
      %1041 = vmatmul.mubr.bf16.gmra.mrb[0].mxu0 %v970
      %v1042 = vpop.f32.mrb[0].mxu0
      %v1043 = vadd.f32 0.0, %v1042
      %v1044 = vpop.f32.mrb[0].mxu0
      %v1045 = vpop.f32.mrb[0].mxu0
      %v1046 = vadd.f32 0.0, %v1045
      %v1047 = vpop.f32.mrb[0].mxu0
      %1048 = vmatprep.mubr.bf16.mxu0 0
      %1049 = vmatmul.mubr.bf16.gmra.mrb[0].mxu0 %v973
      %v1050 = vpop.f32.mrb[0].mxu0
      %v1051 = vadd.f32 0.0, %v1050
      %v1052 = vpop.f32.mrb[0].mxu0
      %v1053 = vpop.f32.mrb[0].mxu0
      %v1054 = vadd.f32 0.0, %v1053
      %v1055 = vpop.f32.mrb[0].mxu0
      %1056 = vmatprep.mubr.bf16.mxu0 0
      %1057 = vmatmul.mubr.bf16.gmra.mrb[0].mxu0 %v976
      %v1058 = vpop.f32.mrb[0].mxu0
      %v1059 = vadd.f32 0.0, %v1058
      %v1060 = vpop.f32.mrb[0].mxu0
      %v1061 = vpop.f32.mrb[0].mxu0
      %v1062 = vadd.f32 0.0, %v1061
      %v1063 = vpop.f32.mrb[0].mxu0
      %1064 = vmatprep.mubr.bf16.mxu0 0
      %1065 = vmatmul.mubr.bf16.gmra.mrb[0].mxu0 %v979
      %v1066 = vpop.f32.mrb[0].mxu0
      %v1067 = vadd.f32 0.0, %v1066
      %v1068 = vpop.f32.mrb[0].mxu0
      %v1069 = vpop.f32.mrb[0].mxu0
      %v1070 = vadd.f32 0.0, %v1069
      %v1071 = vpop.f32.mrb[0].mxu0
      %1072 = vmatprep.mubr.bf16.mxu0 0
      %1073 = vmatmul.mubr.bf16.gmra.mrb[0].mxu0 %v982
      %v1074 = vpop.f32.mrb[0].mxu0
      %v1075 = vadd.f32 0.0, %v1074
      %v1076 = vpop.f32.mrb[0].mxu0
      %v1077 = vpop.f32.mrb[0].mxu0
      %v1078 = vadd.f32 0.0, %v1077
      %v1079 = vpop.f32.mrb[0].mxu0
      %1080 = vdwg.mxu0
      %v1081 = vmax.f32 %v842, %v1019
      %v1082 = vmax.f32 %v845, %v1022
      %v1083 = vmax.f32 %v850, %v1027
      %v1084 = vmax.f32 %v853, %v1030
      %v1085 = vmax.f32 %v858, %v1035
      %v1086 = vmax.f32 %v861, %v1038
      %v1087 = vmax.f32 %v866, %v1043
      %v1088 = vmax.f32 %v869, %v1046
      %v1089 = vmax.f32 %v874, %v1051
      %v1090 = vmax.f32 %v877, %v1054
      %v1091 = vmax.f32 %v882, %v1059
      %v1092 = vmax.f32 %v885, %v1062
      %v1093 = vmax.f32 %v890, %v1067
      %v1094 = vmax.f32 %v893, %v1070
      %v1095 = vmax.f32 %v898, %v1075
      %v1096 = vmax.f32 %v901, %v1078
      %v1097 = vmax.f32 %v711, %v1081
      %v1098 = vmax.f32 %v712, %v1082
      %v1099 = vmax.f32 %v713, %v1083
      %v1100 = vmax.f32 %v714, %v1084
      %v1101 = vmax.f32 %v715, %v1085
      %v1102 = vmax.f32 %v716, %v1086
      %v1103 = vmax.f32 %v717, %v1087
      %v1104 = vmax.f32 %v718, %v1088
      %v1105 = vmax.f32 %v719, %v1089
      %v1106 = vmax.f32 %v720, %v1090
      %v1107 = vmax.f32 %v721, %v1091
      %v1108 = vmax.f32 %v722, %v1092
      %v1109 = vmax.f32 %v723, %v1093
      %v1110 = vmax.f32 %v724, %v1094
      %v1111 = vmax.f32 %v725, %v1095
      %v1112 = vmax.f32 %v726, %v1096
      %v1113 = vld [vmem:[%s5] sm:$0x1]
      %v1115 = vlaneseq
      %v1116 = vshrl.u32 %v1115, 7
      %v1117 = vsub.s32 0, %v1116
      %v1118 = vrot.slane %v1113, %v1117
      %v1120 = vadd.f32 %v1097, %v1118
      %v1121 = vadd.f32 %v1098, %v1118
      %v1122 = vadd.f32 %v1099, %v1118
      %v1123 = vadd.f32 %v1100, %v1118
      %v1124 = vadd.f32 %v1101, %v1118
      %v1125 = vadd.f32 %v1102, %v1118
      %v1126 = vadd.f32 %v1103, %v1118
      %v1127 = vadd.f32 %v1104, %v1118
      %v1128 = vadd.f32 %v1105, %v1118
      %v1129 = vadd.f32 %v1106, %v1118
      %v1130 = vadd.f32 %v1107, %v1118
      %v1131 = vadd.f32 %v1108, %v1118
      %v1132 = vadd.f32 %v1109, %v1118
      %v1133 = vadd.f32 %v1110, %v1118
      %v1134 = vadd.f32 %v1111, %v1118
      %v1135 = vadd.f32 %v1112, %v1118
      %v1136 = vmax.f32 %v1120, 0.0
      %v1137 = vmax.f32 %v1121, 0.0
      %v1138 = vmax.f32 %v1122, 0.0
      %v1139 = vmax.f32 %v1123, 0.0
      %v1140 = vmax.f32 %v1124, 0.0
      %v1141 = vmax.f32 %v1125, 0.0
      %v1142 = vmax.f32 %v1126, 0.0
      %v1143 = vmax.f32 %v1127, 0.0
      %v1144 = vmax.f32 %v1128, 0.0
      %v1145 = vmax.f32 %v1129, 0.0
      %v1146 = vmax.f32 %v1130, 0.0
      %v1147 = vmax.f32 %v1131, 0.0
      %v1148 = vmax.f32 %v1132, 0.0
      %v1149 = vmax.f32 %v1133, 0.0
      %v1150 = vmax.f32 %v1134, 0.0
      %v1151 = vmax.f32 %v1135, 0.0
      %1152 = vst [vmem:[%s319] sm:$0xff] %v1136
      %1153 = vst [vmem:[%s319 + $0x8] sm:$0xff] %v1137
      %1154 = vst [vmem:[%s319 + $0x10] sm:$0xff] %v1138
      %1155 = vst [vmem:[%s319 + $0x18] sm:$0xff] %v1139
      %1156 = vst [vmem:[%s319 + $0x20] sm:$0xff] %v1140
      %1157 = vst [vmem:[%s319 + $0x28] sm:$0xff] %v1141
      %1158 = vst [vmem:[%s319 + $0x30] sm:$0xff] %v1142
      %1159 = vst [vmem:[%s319 + $0x38] sm:$0xff] %v1143
      %1160 = vst [vmem:[%s319 + $0x40] sm:$0xff] %v1144
      %1161 = vst [vmem:[%s319 + $0x48] sm:$0xff] %v1145
      %1162 = vst [vmem:[%s319 + $0x50] sm:$0xff] %v1146
      %1163 = vst [vmem:[%s319 + $0x58] sm:$0xff] %v1147
      %1164 = vst [vmem:[%s319 + $0x60] sm:$0xff] %v1148
      %1165 = vst [vmem:[%s319 + $0x68] sm:$0xff] %v1149
      %1166 = vst [vmem:[%s319 + $0x70] sm:$0xff] %v1150
      %1167 = vst [vmem:[%s319 + $0x78] sm:$0xff] %v1151
      %s1168 = smul.u32 16, %s17
      %p1169 = scmp.lt.s32.totalorder %s1168, 31
      %s1170 = scalar_select %p1169, %s1168, 31
      %s1171 = smul.addr %s1170, 8
      %s1172 = scalar_lea.vmem %s6, %s1171
      // Predicated region
      $region45: #{_lambda_.7} parent=43 // pred_check
        %p1173 = pneg %p181
      $region46: #{_lambda_.7} parent=43 // pred_check_branch
        %1175 = sbr.rel (%p1173) target = $region48
      $region47: #{_lambda_.7} parent=43 // pred_region
        %s1176 = smul.u32 16, %s17
      $region48: #{_lambda_.7} parent=43 // pred_fallthru
        _
    $region44: #{_lambda_.7} parent=5 // pred_fallthru
      _
    %p1177 = scmp.le.s32.totalorder 2, %s12
    // Predicated region
    $region49: #{_lambda_.7} parent=5 // pred_check
      %p1178 = pneg %p1177
    $region50: #{_lambda_.7} parent=5 // pred_check_branch
      %1180 = sbr.rel (%p1178) target = $region52
    $region51: #{_lambda_.7} parent=5 // pred_region
      %s1181 = ssub.s32 %s12, 2
      // Predicated region
      $region53: #{_lambda_.7} parent=51 // pred_check
        %p1182 = pneg %p187
      $region54: #{_lambda_.7} parent=51 // pred_check_branch
        %1184 = sbr.rel (%p1182) target = $region56
      $region55: #{_lambda_.7} parent=51 // pred_region
        %s1185 = smul.u32 16, %s18
        %p1186 = scmp.lt.s32.totalorder %s1185, 31
        %s1187 = scalar_select %p1186, %s1185, 31
        %s1188 = smul.addr %s1187, 8
        %s1189 = scalar_lea.vmem %s6, %s1188
      $region56: #{_lambda_.7} parent=51 // pred_fallthru
        _
    $region52: #{_lambda_.7} parent=5 // pred_fallthru
      _
  $region6: #{_lambda_.7} parent=0 // loop_footer
    %s16 = sadd.s32 1, %s12
  $region7: #{_lambda_.7} parent=0 // loop_footer_branch
    %11 = sbr.rel target = $region3
  $region8: #{_lambda_.7} parent=0 // loop_exit
    _

// kernel: _lambda_.8
$region0: #{_lambda_.8}
  #allocation0 [shape = 'u32[]', space=smem, size = 0x4, offset = 0x4, fixed_abs, tag = 'smem constant byte address 0x4 - core index']
  #allocation1 [shape = 'u32[144,128]{1,0:T(1,128)}', space=vmem, size = 0x12000, scoped, tag = 'internal scratch']
  %s0 = inlined_call_operand.vmem [shape: bf16[24,200], index: 0, kind: input, shape index: {}]
  %s1 = inlined_call_operand.vmem [shape: bf16[24,200], index: 1, kind: input, shape index: {}]
  %s2 = inlined_call_operand.vmem [shape: bf16[24,200], index: 2, kind: input, shape index: {}]
  %s3 = inlined_call_operand.vmem [shape: bf16[24,200], index: 3, kind: input, shape index: {}]
  %s4 = inlined_call_operand.vmem [shape: bf16[200,128], index: 4, kind: input, shape index: {}]
  %s5 = inlined_call_operand.vmem [shape: f32[1,128], index: 5, kind: input, shape index: {}]
  %s6 = inlined_call_operand.vmem [shape: f32[24,128], index: 6, kind: output, shape index: {}]
  %s7 = sld [smem:[#allocation0]]
  $region34: #{_lambda_.8} parent=0
    _
  %s9 = ssub.s32 1, %s7
  %s10 = scalar_select 0, %s9, %s7
  // Predicated region
  $region2: #{_lambda_.8} parent=0 // pred_check
    _
  $region3: #{_lambda_.8} parent=0 // pred_check_branch
    %12 = sbr.rel (0) target = $region5
  $region4: #{_lambda_.8} parent=0 // pred_region
    _
  $region5: #{_lambda_.8} parent=0 // pred_fallthru
    _
  // Predicated region
  $region6: #{_lambda_.8} parent=0 // pred_check
    _
  $region7: #{_lambda_.8} parent=0 // pred_check_branch
    %14 = sbr.rel (0) target = $region9
  $region8: #{_lambda_.8} parent=0 // pred_region
    _
  $region9: #{_lambda_.8} parent=0 // pred_fallthru
    _
  // Predicated region
  $region10: #{_lambda_.8} parent=0 // pred_check
    _
  $region11: #{_lambda_.8} parent=0 // pred_check_branch
    %16 = sbr.rel (0) target = $region13
  $region12: #{_lambda_.8} parent=0 // pred_region
    _
  $region13: #{_lambda_.8} parent=0 // pred_fallthru
    _
  // Predicated region
  $region14: #{_lambda_.8} parent=0 // pred_check
    _
  $region15: #{_lambda_.8} parent=0 // pred_check_branch
    %18 = sbr.rel (0) target = $region17
  $region16: #{_lambda_.8} parent=0 // pred_region
    _
  $region17: #{_lambda_.8} parent=0 // pred_fallthru
    _
  // Predicated region
  $region18: #{_lambda_.8} parent=0 // pred_check
    _
  $region19: #{_lambda_.8} parent=0 // pred_check_branch
    %20 = sbr.rel (0) target = $region21
  $region20: #{_lambda_.8} parent=0 // pred_region
    _
  $region21: #{_lambda_.8} parent=0 // pred_fallthru
    _
  // Predicated region
  $region22: #{_lambda_.8} parent=0 // pred_check
    _
  $region23: #{_lambda_.8} parent=0 // pred_check_branch
    %22 = sbr.rel (0) target = $region25
  $region24: #{_lambda_.8} parent=0 // pred_region
    _
  $region25: #{_lambda_.8} parent=0 // pred_fallthru
    _
  %v24 = vld [vmem:[%s4] sm:$0xf]
  %v25 = vld [vmem:[%s4 + $0x4] sm:$0xf]
  %v26 = vld [vmem:[%s4 + $0x8] sm:$0xf]
  %v27 = vld [vmem:[%s4 + $0xc] sm:$0xf]
  %v28 = vld [vmem:[%s4 + $0x10] sm:$0xf]
  %v29 = vld [vmem:[%s4 + $0x14] sm:$0xf]
  %v30 = vld [vmem:[%s4 + $0x18] sm:$0xf]
  %v31 = vld [vmem:[%s4 + $0x1c] sm:$0xf]
  %v32 = vld [vmem:[%s4 + $0x20] sm:$0xf]
  %v33 = vld [vmem:[%s4 + $0x24] sm:$0xf]
  %v34 = vld [vmem:[%s4 + $0x28] sm:$0xf]
  %v35 = vld [vmem:[%s4 + $0x2c] sm:$0xf]
  %v36 = vld [vmem:[%s4 + $0x30] sm:$0xf]
  %v37 = vld [vmem:[%s4 + $0x34] sm:$0xf]
  %v38 = vld [vmem:[%s4 + $0x38] sm:$0xf]
  %v39 = vld [vmem:[%s4 + $0x3c] sm:$0xf]
  %v40 = vld [vmem:[%s4 + $0x40] sm:$0xf]
  %v41 = vld [vmem:[%s4 + $0x44] sm:$0xf]
  %v42 = vld [vmem:[%s4 + $0x48] sm:$0xf]
  %v43 = vld [vmem:[%s4 + $0x4c] sm:$0xf]
  %v44 = vld [vmem:[%s4 + $0x50] sm:$0xf]
  %v45 = vld [vmem:[%s4 + $0x54] sm:$0xf]
  %v46 = vld [vmem:[%s4 + $0x58] sm:$0xf]
  %v47 = vld [vmem:[%s4 + $0x5c] sm:$0xf]
  %v48 = vld [vmem:[%s4 + $0x60] sm:$0xf]
  %v49 = vld [vmem:[%s0] sm:$0xff]
  %v50 = vld [vmem:[%s0 + $0x8] sm:$0xff]
  %v51 = vld [vmem:[%s0 + $0x10] sm:$0xff]
  %v55 = vunpack.c.l.b16 %v49
  %v56 = vunpack.c.h.b16 %v49
  %v57 = vunpack.c.l.b16 %v50
  %v58 = vunpack.c.h.b16 %v50
  %v59 = vunpack.c.l.b16 %v51
  %v60 = vunpack.c.h.b16 %v51
  %v61 = vpack.c.b16 %v57, %v55
  %v62 = vpack.c.b16 %v58, %v56
  %v63 = vpack.c.b16 %v59, %v59
  %v64 = vpack.c.b16 %v60, %v60
  %v92 = vunpack.c.l.b16 %v24
  %v93 = vunpack.c.l.b16 %v25
  %v94 = vunpack.c.l.b16 %v26
  %v95 = vunpack.c.l.b16 %v27
  %v96 = vunpack.c.l.b16 %v28
  %v97 = vunpack.c.l.b16 %v29
  %v98 = vunpack.c.l.b16 %v30
  %v99 = vunpack.c.l.b16 %v31
  %v100 = vunpack.c.l.b16 %v32
  %v101 = vunpack.c.l.b16 %v33
  %v102 = vunpack.c.l.b16 %v34
  %v103 = vunpack.c.l.b16 %v35
  %v104 = vunpack.c.l.b16 %v36
  %v105 = vunpack.c.l.b16 %v37
  %v106 = vunpack.c.l.b16 %v38
  %v107 = vunpack.c.l.b16 %v39
  %v108 = vunpack.c.l.b16 %v40
  %v109 = vunpack.c.l.b16 %v41
  %v110 = vunpack.c.l.b16 %v42
  %v111 = vunpack.c.l.b16 %v43
  %v112 = vunpack.c.l.b16 %v44
  %v113 = vunpack.c.l.b16 %v45
  %v114 = vunpack.c.l.b16 %v46
  %v115 = vunpack.c.l.b16 %v47
  %v116 = vunpack.c.l.b16 %v48
  %v117 = vpack.c.b16 %v93, %v92
  %v118 = vpack.c.b16 %v95, %v94
  %v119 = vpack.c.b16 %v97, %v96
  %v120 = vpack.c.b16 %v99, %v98
  %v121 = vpack.c.b16 %v101, %v100
  %v122 = vpack.c.b16 %v103, %v102
  %v123 = vpack.c.b16 %v105, %v104
  %v124 = vpack.c.b16 %v107, %v106
  %v125 = vpack.c.b16 %v109, %v108
  %v126 = vpack.c.b16 %v111, %v110
  %v127 = vpack.c.b16 %v113, %v112
  %v128 = vpack.c.b16 %v115, %v114
  %v129 = vpack.c.b16 %v116, %v116
  %vm142 = vcmask 588800
  %v144 = vsel %vm142, %v62, 0
  %v147 = vsel %vm142, %v64, 0
  %vm149 = vcmask 1043456
  %v151 = vsel %vm149, %v129, 0
  %153 = vmatprep.subr.bf16.mxu0 0
  %154 = vmatpush1.bf16.msra.mxu0 %v117
  %155 = vmatprep.subr.bf16.mxu0 0
  %156 = vmatpush1.bf16.msra.mxu0 %v118
  %157 = vmatprep.subr.bf16.mxu0 0
  %158 = vmatpush1.bf16.msra.mxu0 %v119
  %159 = vmatprep.subr.bf16.mxu0 0
  %160 = vmatpush1.bf16.msra.mxu0 %v120
  %161 = vmatprep.subr.bf16.mxu0 0
  %162 = vmatpush1.bf16.msra.mxu0 %v121
  %163 = vmatprep.subr.bf16.mxu0 0
  %164 = vmatpush1.bf16.msra.mxu0 %v122
  %165 = vmatprep.subr.bf16.mxu0 0
  %166 = vmatpush1.bf16.msra.mxu0 %v123
  %167 = vmatprep.subr.bf16.mxu0 0
  %168 = vmatpush1.bf16.msra.mxu0 %v124
  %169 = vmatprep.subr.bf16.mxu0 0
  %170 = vmatpush1.bf16.msra.mxu0 %v125
  %171 = vmatprep.subr.bf16.mxu0 0
  %172 = vmatpush1.bf16.msra.mxu0 %v126
  %173 = vmatprep.subr.bf16.mxu0 0
  %174 = vmatpush1.bf16.msra.mxu0 %v127
  %175 = vmatprep.subr.bf16.mxu0 0
  %176 = vmatpush1.bf16.msra.mxu0 %v128
  %177 = vmatprep.subr.bf16.mxu0 0
  %178 = vmatpush1.bf16.msra.mxu0 %v151
  %179 = vmatprep.subr.bf16.mxu0 0
  %180 = vmatpush1.bf16.msra.mxu0 0
  %181 = vmatprep.subr.bf16.mxu0 0
  %182 = vmatpush1.bf16.msra.mxu0 0
  %183 = vmatprep.subr.bf16.mxu0 0
  %184 = vmatpush1.bf16.msra.mxu0 0
  %185 = vmatprep.mubr.bf16.mxu0 %v144
  %186 = vmatmul.mubr.bf16.gmra.mrb[0].mxu0 %v61
  %v187 = vpop.f32.mrb[0].mxu0
  %v188 = vadd.f32 0.0, %v187
  %v189 = vpop.f32.mrb[0].mxu0
  %v190 = vpop.f32.mrb[0].mxu0
  %v191 = vadd.f32 0.0, %v190
  %v192 = vpop.f32.mrb[0].mxu0
  %193 = vmatprep.mubr.bf16.mxu0 %v147
  %194 = vmatmul.mubr.bf16.gmra.mrb[0].mxu0 %v63
  %v195 = vpop.f32.mrb[0].mxu0
  %v196 = vadd.f32 0.0, %v195
  %v197 = vpop.f32.mrb[0].mxu0
  %v198 = vpop.f32.mrb[0].mxu0
  %v199 = vpop.f32.mrb[0].mxu0
  %200 = vdwg.mxu0
  %v201 = vld [vmem:[%s1] sm:$0xff]
  %v202 = vld [vmem:[%s1 + $0x8] sm:$0xff]
  %v203 = vld [vmem:[%s1 + $0x10] sm:$0xff]
  %v207 = vunpack.c.l.b16 %v201
  %v208 = vunpack.c.h.b16 %v201
  %v209 = vunpack.c.l.b16 %v202
  %v210 = vunpack.c.h.b16 %v202
  %v211 = vunpack.c.l.b16 %v203
  %v212 = vunpack.c.h.b16 %v203
  %v213 = vpack.c.b16 %v209, %v207
  %v214 = vpack.c.b16 %v210, %v208
  %v215 = vpack.c.b16 %v211, %v211
  %v216 = vpack.c.b16 %v212, %v212
  %v220 = vsel %vm142, %v214, 0
  %v223 = vsel %vm142, %v216, 0
  %225 = vmatprep.subr.bf16.mxu0 0
  %226 = vmatpush1.bf16.msra.mxu0 %v117
  %227 = vmatprep.subr.bf16.mxu0 0
  %228 = vmatpush1.bf16.msra.mxu0 %v118
  %229 = vmatprep.subr.bf16.mxu0 0
  %230 = vmatpush1.bf16.msra.mxu0 %v119
  %231 = vmatprep.subr.bf16.mxu0 0
  %232 = vmatpush1.bf16.msra.mxu0 %v120
  %233 = vmatprep.subr.bf16.mxu0 0
  %234 = vmatpush1.bf16.msra.mxu0 %v121
  %235 = vmatprep.subr.bf16.mxu0 0
  %236 = vmatpush1.bf16.msra.mxu0 %v122
  %237 = vmatprep.subr.bf16.mxu0 0
  %238 = vmatpush1.bf16.msra.mxu0 %v123
  %239 = vmatprep.subr.bf16.mxu0 0
  %240 = vmatpush1.bf16.msra.mxu0 %v124
  %241 = vmatprep.subr.bf16.mxu0 0
  %242 = vmatpush1.bf16.msra.mxu0 %v125
  %243 = vmatprep.subr.bf16.mxu0 0
  %244 = vmatpush1.bf16.msra.mxu0 %v126
  %245 = vmatprep.subr.bf16.mxu0 0
  %246 = vmatpush1.bf16.msra.mxu0 %v127
  %247 = vmatprep.subr.bf16.mxu0 0
  %248 = vmatpush1.bf16.msra.mxu0 %v128
  %249 = vmatprep.subr.bf16.mxu0 0
  %250 = vmatpush1.bf16.msra.mxu0 %v151
  %251 = vmatprep.subr.bf16.mxu0 0
  %252 = vmatpush1.bf16.msra.mxu0 0
  %253 = vmatprep.subr.bf16.mxu0 0
  %254 = vmatpush1.bf16.msra.mxu0 0
  %255 = vmatprep.subr.bf16.mxu0 0
  %256 = vmatpush1.bf16.msra.mxu0 0
  %257 = vmatprep.mubr.bf16.mxu0 %v220
  %258 = vmatmul.mubr.bf16.gmra.mrb[0].mxu0 %v213
  %v259 = vpop.f32.mrb[0].mxu0
  %v260 = vadd.f32 0.0, %v259
  %v261 = vpop.f32.mrb[0].mxu0
  %v262 = vpop.f32.mrb[0].mxu0
  %v263 = vadd.f32 0.0, %v262
  %v264 = vpop.f32.mrb[0].mxu0
  %265 = vmatprep.mubr.bf16.mxu0 %v223
  %266 = vmatmul.mubr.bf16.gmra.mrb[0].mxu0 %v215
  %v267 = vpop.f32.mrb[0].mxu0
  %v268 = vadd.f32 0.0, %v267
  %v269 = vpop.f32.mrb[0].mxu0
  %v270 = vpop.f32.mrb[0].mxu0
  %v271 = vpop.f32.mrb[0].mxu0
  %272 = vdwg.mxu0
  %v273 = vmax.f32 %v188, %v260
  %v274 = vmax.f32 %v191, %v263
  %v275 = vmax.f32 %v196, %v268
  %v276 = vld [vmem:[%s2] sm:$0xff]
  %v277 = vld [vmem:[%s2 + $0x8] sm:$0xff]
  %v278 = vld [vmem:[%s2 + $0x10] sm:$0xff]
  %v282 = vunpack.c.l.b16 %v276
  %v283 = vunpack.c.h.b16 %v276
  %v284 = vunpack.c.l.b16 %v277
  %v285 = vunpack.c.h.b16 %v277
  %v286 = vunpack.c.l.b16 %v278
  %v287 = vunpack.c.h.b16 %v278
  %v288 = vpack.c.b16 %v284, %v282
  %v289 = vpack.c.b16 %v285, %v283
  %v290 = vpack.c.b16 %v286, %v286
  %v291 = vpack.c.b16 %v287, %v287
  %v295 = vsel %vm142, %v289, 0
  %v298 = vsel %vm142, %v291, 0
  %300 = vmatprep.subr.bf16.mxu0 0
  %301 = vmatpush1.bf16.msra.mxu0 %v117
  %302 = vmatprep.subr.bf16.mxu0 0
  %303 = vmatpush1.bf16.msra.mxu0 %v118
  %304 = vmatprep.subr.bf16.mxu0 0
  %305 = vmatpush1.bf16.msra.mxu0 %v119
  %306 = vmatprep.subr.bf16.mxu0 0
  %307 = vmatpush1.bf16.msra.mxu0 %v120
  %308 = vmatprep.subr.bf16.mxu0 0
  %309 = vmatpush1.bf16.msra.mxu0 %v121
  %310 = vmatprep.subr.bf16.mxu0 0
  %311 = vmatpush1.bf16.msra.mxu0 %v122
  %312 = vmatprep.subr.bf16.mxu0 0
  %313 = vmatpush1.bf16.msra.mxu0 %v123
  %314 = vmatprep.subr.bf16.mxu0 0
  %315 = vmatpush1.bf16.msra.mxu0 %v124
  %316 = vmatprep.subr.bf16.mxu0 0
  %317 = vmatpush1.bf16.msra.mxu0 %v125
  %318 = vmatprep.subr.bf16.mxu0 0
  %319 = vmatpush1.bf16.msra.mxu0 %v126
  %320 = vmatprep.subr.bf16.mxu0 0
  %321 = vmatpush1.bf16.msra.mxu0 %v127
  %322 = vmatprep.subr.bf16.mxu0 0
  %323 = vmatpush1.bf16.msra.mxu0 %v128
  %324 = vmatprep.subr.bf16.mxu0 0
  %325 = vmatpush1.bf16.msra.mxu0 %v151
  %326 = vmatprep.subr.bf16.mxu0 0
  %327 = vmatpush1.bf16.msra.mxu0 0
  %328 = vmatprep.subr.bf16.mxu0 0
  %329 = vmatpush1.bf16.msra.mxu0 0
  %330 = vmatprep.subr.bf16.mxu0 0
  %331 = vmatpush1.bf16.msra.mxu0 0
  %332 = vmatprep.mubr.bf16.mxu0 %v295
  %333 = vmatmul.mubr.bf16.gmra.mrb[0].mxu0 %v288
  %v334 = vpop.f32.mrb[0].mxu0
  %v335 = vadd.f32 0.0, %v334
  %v336 = vpop.f32.mrb[0].mxu0
  %v337 = vpop.f32.mrb[0].mxu0
  %v338 = vadd.f32 0.0, %v337
  %v339 = vpop.f32.mrb[0].mxu0
  %340 = vmatprep.mubr.bf16.mxu0 %v298
  %341 = vmatmul.mubr.bf16.gmra.mrb[0].mxu0 %v290
  %v342 = vpop.f32.mrb[0].mxu0
  %v343 = vadd.f32 0.0, %v342
  %v344 = vpop.f32.mrb[0].mxu0
  %v345 = vpop.f32.mrb[0].mxu0
  %v346 = vpop.f32.mrb[0].mxu0
  %347 = vdwg.mxu0
  %v348 = vld [vmem:[%s3] sm:$0xff]
  %v349 = vld [vmem:[%s3 + $0x8] sm:$0xff]
  %v350 = vld [vmem:[%s3 + $0x10] sm:$0xff]
  %v354 = vunpack.c.l.b16 %v348
  %v355 = vunpack.c.h.b16 %v348
  %v356 = vunpack.c.l.b16 %v349
  %v357 = vunpack.c.h.b16 %v349
  %v358 = vunpack.c.l.b16 %v350
  %v359 = vunpack.c.h.b16 %v350
  %v360 = vpack.c.b16 %v356, %v354
  %v361 = vpack.c.b16 %v357, %v355
  %v362 = vpack.c.b16 %v358, %v358
  %v363 = vpack.c.b16 %v359, %v359
  %v367 = vsel %vm142, %v361, 0
  %v370 = vsel %vm142, %v363, 0
  %372 = vmatprep.subr.bf16.mxu0 0
  %373 = vmatpush1.bf16.msra.mxu0 %v117
  %374 = vmatprep.subr.bf16.mxu0 0
  %375 = vmatpush1.bf16.msra.mxu0 %v118
  %376 = vmatprep.subr.bf16.mxu0 0
  %377 = vmatpush1.bf16.msra.mxu0 %v119
  %378 = vmatprep.subr.bf16.mxu0 0
  %379 = vmatpush1.bf16.msra.mxu0 %v120
  %380 = vmatprep.subr.bf16.mxu0 0
  %381 = vmatpush1.bf16.msra.mxu0 %v121
  %382 = vmatprep.subr.bf16.mxu0 0
  %383 = vmatpush1.bf16.msra.mxu0 %v122
  %384 = vmatprep.subr.bf16.mxu0 0
  %385 = vmatpush1.bf16.msra.mxu0 %v123
  %386 = vmatprep.subr.bf16.mxu0 0
  %387 = vmatpush1.bf16.msra.mxu0 %v124
  %388 = vmatprep.subr.bf16.mxu0 0
  %389 = vmatpush1.bf16.msra.mxu0 %v125
  %390 = vmatprep.subr.bf16.mxu0 0
  %391 = vmatpush1.bf16.msra.mxu0 %v126
  %392 = vmatprep.subr.bf16.mxu0 0
  %393 = vmatpush1.bf16.msra.mxu0 %v127
  %394 = vmatprep.subr.bf16.mxu0 0
  %395 = vmatpush1.bf16.msra.mxu0 %v128
  %396 = vmatprep.subr.bf16.mxu0 0
  %397 = vmatpush1.bf16.msra.mxu0 %v151
  %398 = vmatprep.subr.bf16.mxu0 0
  %399 = vmatpush1.bf16.msra.mxu0 0
  %400 = vmatprep.subr.bf16.mxu0 0
  %401 = vmatpush1.bf16.msra.mxu0 0
  %402 = vmatprep.subr.bf16.mxu0 0
  %403 = vmatpush1.bf16.msra.mxu0 0
  %404 = vmatprep.mubr.bf16.mxu0 %v367
  %405 = vmatmul.mubr.bf16.gmra.mrb[0].mxu0 %v360
  %v406 = vpop.f32.mrb[0].mxu0
  %v407 = vadd.f32 0.0, %v406
  %v408 = vpop.f32.mrb[0].mxu0
  %v409 = vpop.f32.mrb[0].mxu0
  %v410 = vadd.f32 0.0, %v409
  %v411 = vpop.f32.mrb[0].mxu0
  %412 = vmatprep.mubr.bf16.mxu0 %v370
  %413 = vmatmul.mubr.bf16.gmra.mrb[0].mxu0 %v362
  %v414 = vpop.f32.mrb[0].mxu0
  %v415 = vadd.f32 0.0, %v414
  %v416 = vpop.f32.mrb[0].mxu0
  %v417 = vpop.f32.mrb[0].mxu0
  %v418 = vpop.f32.mrb[0].mxu0
  %419 = vdwg.mxu0
  %v420 = vmax.f32 %v335, %v407
  %v421 = vmax.f32 %v338, %v410
  %v422 = vmax.f32 %v343, %v415
  %v423 = vmax.f32 %v273, %v420
  %v424 = vmax.f32 %v274, %v421
  %v425 = vmax.f32 %v275, %v422
  %v426 = vld [vmem:[%s5] sm:$0x1]
  %v428 = vlaneseq
  %v429 = vshrl.u32 %v428, 7
  %v430 = vsub.s32 0, %v429
  %v431 = vrot.slane %v426, %v430
  %v433 = vadd.f32 %v423, %v431
  %v434 = vadd.f32 %v424, %v431
  %v435 = vadd.f32 %v425, %v431
  %v436 = vmax.f32 %v433, 0.0
  %v437 = vmax.f32 %v434, 0.0
  %v438 = vmax.f32 %v435, 0.0
  %439 = vst [vmem:[%s6] sm:$0xff] %v436
  %440 = vst [vmem:[%s6 + $0x8] sm:$0xff] %v437
  %441 = vst [vmem:[%s6 + $0x10] sm:$0xff] %v438
  // Predicated region
  $region26: #{_lambda_.8} parent=0 // pred_check
    _
  $region27: #{_lambda_.8} parent=0 // pred_check_branch
    %443 = sbr.rel (0) target = $region29
  $region28: #{_lambda_.8} parent=0 // pred_region
    _
  $region29: #{_lambda_.8} parent=0 // pred_fallthru
    _
  // Predicated region
  $region30: #{_lambda_.8} parent=0 // pred_check
    _
  $region31: #{_lambda_.8} parent=0 // pred_check_branch
    %445 = sbr.rel (0) target = $region33
  $region32: #{_lambda_.8} parent=0 // pred_region
    _
  $region33: #{_lambda_.8} parent=0 // pred_fallthru
    _

// kernel: _lambda_.9
$region0: #{_lambda_.9}
  #allocation0 [shape = 'u32[]', space=smem, size = 0x4, offset = 0x4, fixed_abs, tag = 'smem constant byte address 0x4 - core index']
  #allocation1 [shape = 'u32[144,128]{1,0:T(1,128)}', space=vmem, size = 0x12000, scoped, tag = 'internal scratch']
  %s0 = inlined_call_operand.vmem [shape: bf16[8,90], index: 0, kind: input, shape index: {}]
  %s1 = inlined_call_operand.vmem [shape: bf16[90,128], index: 1, kind: input, shape index: {}]
  %s2 = inlined_call_operand.vmem [shape: f32[1,128], index: 2, kind: input, shape index: {}]
  %s3 = inlined_call_operand.vmem [shape: bf16[128,128], index: 3, kind: input, shape index: {}]
  %s4 = inlined_call_operand.vmem [shape: f32[1,128], index: 4, kind: input, shape index: {}]
  %s5 = inlined_call_operand.vmem [shape: f32[8,128], index: 5, kind: output, shape index: {}]
  %s6 = sld [smem:[#allocation0]]
  $region30: #{_lambda_.9} parent=0
    _
  %s8 = ssub.s32 1, %s6
  %s9 = scalar_select 0, %s8, %s6
  // Predicated region
  $region2: #{_lambda_.9} parent=0 // pred_check
    _
  $region3: #{_lambda_.9} parent=0 // pred_check_branch
    %11 = sbr.rel (0) target = $region5
  $region4: #{_lambda_.9} parent=0 // pred_region
    _
  $region5: #{_lambda_.9} parent=0 // pred_fallthru
    _
  // Predicated region
  $region6: #{_lambda_.9} parent=0 // pred_check
    _
  $region7: #{_lambda_.9} parent=0 // pred_check_branch
    %13 = sbr.rel (0) target = $region9
  $region8: #{_lambda_.9} parent=0 // pred_region
    _
  $region9: #{_lambda_.9} parent=0 // pred_fallthru
    _
  // Predicated region
  $region10: #{_lambda_.9} parent=0 // pred_check
    _
  $region11: #{_lambda_.9} parent=0 // pred_check_branch
    %15 = sbr.rel (0) target = $region13
  $region12: #{_lambda_.9} parent=0 // pred_region
    _
  $region13: #{_lambda_.9} parent=0 // pred_fallthru
    _
  // Predicated region
  $region14: #{_lambda_.9} parent=0 // pred_check
    _
  $region15: #{_lambda_.9} parent=0 // pred_check_branch
    %17 = sbr.rel (0) target = $region17
  $region16: #{_lambda_.9} parent=0 // pred_region
    _
  $region17: #{_lambda_.9} parent=0 // pred_fallthru
    _
  // Predicated region
  $region18: #{_lambda_.9} parent=0 // pred_check
    _
  $region19: #{_lambda_.9} parent=0 // pred_check_branch
    %19 = sbr.rel (0) target = $region21
  $region20: #{_lambda_.9} parent=0 // pred_region
    _
  $region21: #{_lambda_.9} parent=0 // pred_fallthru
    _
  %v21 = vld [vmem:[%s0] sm:$0xf]
  %v22 = vld [vmem:[%s1] sm:$0xf]
  %v23 = vld [vmem:[%s1 + $0x4] sm:$0xf]
  %v24 = vld [vmem:[%s1 + $0x8] sm:$0xf]
  %v25 = vld [vmem:[%s1 + $0xc] sm:$0xf]
  %v26 = vld [vmem:[%s1 + $0x10] sm:$0xf]
  %v27 = vld [vmem:[%s1 + $0x14] sm:$0xf]
  %v28 = vld [vmem:[%s1 + $0x18] sm:$0xf]
  %v29 = vld [vmem:[%s1 + $0x1c] sm:$0xf]
  %v30 = vld [vmem:[%s1 + $0x20] sm:$0xf]
  %v31 = vld [vmem:[%s1 + $0x24] sm:$0xf]
  %v32 = vld [vmem:[%s1 + $0x28] sm:$0xf]
  %v33 = vld [vmem:[%s1 + $0x2c] sm:$0x1]
  %v34 = vld [vmem:[%s2] sm:$0x1]
  %v36 = vlaneseq
  %v37 = vshrl.u32 %v36, 7
  %v38 = vsub.s32 0, %v37
  %v39 = vrot.slane %v34, %v38
  %v53 = vunpack.c.l.b16 %v22
  %v54 = vunpack.c.l.b16 %v23
  %v55 = vunpack.c.l.b16 %v24
  %v56 = vunpack.c.l.b16 %v25
  %v57 = vunpack.c.l.b16 %v26
  %v58 = vunpack.c.l.b16 %v27
  %v59 = vunpack.c.l.b16 %v28
  %v60 = vunpack.c.l.b16 %v29
  %v61 = vunpack.c.l.b16 %v30
  %v62 = vunpack.c.l.b16 %v31
  %v63 = vunpack.c.l.b16 %v32
  %v64 = vunpack.c.l.b16 %v33
  %v65 = vpack.c.b16 %v54, %v53
  %v66 = vpack.c.b16 %v56, %v55
  %v67 = vpack.c.b16 %v58, %v57
  %v68 = vpack.c.b16 %v60, %v59
  %v69 = vpack.c.b16 %v62, %v61
  %v70 = vpack.c.b16 %v64, %v63
  %vm76 = vcmask 736256
  %v78 = vsel %vm76, %v21, 0
  %vm80 = vcmask 1044480
  %v82 = vsel %vm80, %v70, 0
  %84 = vmatprep.subr.bf16.mxu0 0
  %85 = vmatpush1.bf16.msra.mxu0 %v65
  %86 = vmatprep.subr.bf16.mxu0 0
  %87 = vmatpush1.bf16.msra.mxu0 %v66
  %88 = vmatprep.subr.bf16.mxu0 0
  %89 = vmatpush1.bf16.msra.mxu0 %v67
  %90 = vmatprep.subr.bf16.mxu0 0
  %91 = vmatpush1.bf16.msra.mxu0 %v68
  %92 = vmatprep.subr.bf16.mxu0 0
  %93 = vmatpush1.bf16.msra.mxu0 %v69
  %94 = vmatprep.subr.bf16.mxu0 0
  %95 = vmatpush1.bf16.msra.mxu0 %v82
  %96 = vmatprep.subr.bf16.mxu0 0
  %97 = vmatpush1.bf16.msra.mxu0 0
  %98 = vmatprep.subr.bf16.mxu0 0
  %99 = vmatpush1.bf16.msra.mxu0 0
  %100 = vmatprep.subr.bf16.mxu0 0
  %101 = vmatpush1.bf16.msra.mxu0 0
  %102 = vmatprep.subr.bf16.mxu0 0
  %103 = vmatpush1.bf16.msra.mxu0 0
  %104 = vmatprep.subr.bf16.mxu0 0
  %105 = vmatpush1.bf16.msra.mxu0 0
  %106 = vmatprep.subr.bf16.mxu0 0
  %107 = vmatpush1.bf16.msra.mxu0 0
  %108 = vmatprep.subr.bf16.mxu0 0
  %109 = vmatpush1.bf16.msra.mxu0 0
  %110 = vmatprep.subr.bf16.mxu0 0
  %111 = vmatpush1.bf16.msra.mxu0 0
  %112 = vmatprep.subr.bf16.mxu0 0
  %113 = vmatpush1.bf16.msra.mxu0 0
  %114 = vmatprep.subr.bf16.mxu0 0
  %115 = vmatpush1.bf16.msra.mxu0 0
  %116 = vmatprep.mubr.bf16.mxu0 0
  %117 = vmatmul.mubr.bf16.gmra.mrb[0].mxu0 %v78
  %v118 = vpop.f32.mrb[0].mxu0
  %v119 = vadd.f32 %v39, %v118
  %v120 = vpop.f32.mrb[0].mxu0
  %v121 = vpop.f32.mrb[0].mxu0
  %v122 = vpop.f32.mrb[0].mxu0
  %123 = vdwg.mxu0
  %v124 = vmax.f32 %v119, 0.0
  %v125 = vpack.c.bf16 %v124, %v124
  %v126 = vld [vmem:[%s3] sm:$0xf]
  %v127 = vld [vmem:[%s3 + $0x4] sm:$0xf]
  %v128 = vld [vmem:[%s3 + $0x8] sm:$0xf]
  %v129 = vld [vmem:[%s3 + $0xc] sm:$0xf]
  %v130 = vld [vmem:[%s3 + $0x10] sm:$0xf]
  %v131 = vld [vmem:[%s3 + $0x14] sm:$0xf]
  %v132 = vld [vmem:[%s3 + $0x18] sm:$0xf]
  %v133 = vld [vmem:[%s3 + $0x1c] sm:$0xf]
  %v134 = vld [vmem:[%s3 + $0x20] sm:$0xf]
  %v135 = vld [vmem:[%s3 + $0x24] sm:$0xf]
  %v136 = vld [vmem:[%s3 + $0x28] sm:$0xf]
  %v137 = vld [vmem:[%s3 + $0x2c] sm:$0xf]
  %v138 = vld [vmem:[%s3 + $0x30] sm:$0xf]
  %v139 = vld [vmem:[%s3 + $0x34] sm:$0xf]
  %v140 = vld [vmem:[%s3 + $0x38] sm:$0xf]
  %v141 = vld [vmem:[%s3 + $0x3c] sm:$0xf]
  %v142 = vld [vmem:[%s4] sm:$0x1]
  %v144 = vlaneseq
  %v145 = vshrl.u32 %v144, 7
  %v146 = vsub.s32 0, %v145
  %v147 = vrot.slane %v142, %v146
  %v165 = vunpack.c.l.b16 %v126
  %v166 = vunpack.c.l.b16 %v127
  %v167 = vunpack.c.l.b16 %v128
  %v168 = vunpack.c.l.b16 %v129
  %v169 = vunpack.c.l.b16 %v130
  %v170 = vunpack.c.l.b16 %v131
  %v171 = vunpack.c.l.b16 %v132
  %v172 = vunpack.c.l.b16 %v133
  %v173 = vunpack.c.l.b16 %v134
  %v174 = vunpack.c.l.b16 %v135
  %v175 = vunpack.c.l.b16 %v136
  %v176 = vunpack.c.l.b16 %v137
  %v177 = vunpack.c.l.b16 %v138
  %v178 = vunpack.c.l.b16 %v139
  %v179 = vunpack.c.l.b16 %v140
  %v180 = vunpack.c.l.b16 %v141
  %v181 = vpack.c.b16 %v166, %v165
  %v182 = vpack.c.b16 %v168, %v167
  %v183 = vpack.c.b16 %v170, %v169
  %v184 = vpack.c.b16 %v172, %v171
  %v185 = vpack.c.b16 %v174, %v173
  %v186 = vpack.c.b16 %v176, %v175
  %v187 = vpack.c.b16 %v178, %v177
  %v188 = vpack.c.b16 %v180, %v179
  %197 = vmatprep.subr.bf16.mxu0 0
  %198 = vmatpush1.bf16.msra.mxu0 %v181
  %199 = vmatprep.subr.bf16.mxu0 0
  %200 = vmatpush1.bf16.msra.mxu0 %v182
  %201 = vmatprep.subr.bf16.mxu0 0
  %202 = vmatpush1.bf16.msra.mxu0 %v183
  %203 = vmatprep.subr.bf16.mxu0 0
  %204 = vmatpush1.bf16.msra.mxu0 %v184
  %205 = vmatprep.subr.bf16.mxu0 0
  %206 = vmatpush1.bf16.msra.mxu0 %v185
  %207 = vmatprep.subr.bf16.mxu0 0
  %208 = vmatpush1.bf16.msra.mxu0 %v186
  %209 = vmatprep.subr.bf16.mxu0 0
  %210 = vmatpush1.bf16.msra.mxu0 %v187
  %211 = vmatprep.subr.bf16.mxu0 0
  %212 = vmatpush1.bf16.msra.mxu0 %v188
  %213 = vmatprep.subr.bf16.mxu0 0
  %214 = vmatpush1.bf16.msra.mxu0 0
  %215 = vmatprep.subr.bf16.mxu0 0
  %216 = vmatpush1.bf16.msra.mxu0 0
  %217 = vmatprep.subr.bf16.mxu0 0
  %218 = vmatpush1.bf16.msra.mxu0 0
  %219 = vmatprep.subr.bf16.mxu0 0
  %220 = vmatpush1.bf16.msra.mxu0 0
  %221 = vmatprep.subr.bf16.mxu0 0
  %222 = vmatpush1.bf16.msra.mxu0 0
  %223 = vmatprep.subr.bf16.mxu0 0
  %224 = vmatpush1.bf16.msra.mxu0 0
  %225 = vmatprep.subr.bf16.mxu0 0
  %226 = vmatpush1.bf16.msra.mxu0 0
  %227 = vmatprep.subr.bf16.mxu0 0
  %228 = vmatpush1.bf16.msra.mxu0 0
  %229 = vmatprep.mubr.bf16.mxu0 0
  %230 = vmatmul.mubr.bf16.gmra.mrb[0].mxu0 %v125
  %v231 = vpop.f32.mrb[0].mxu0
  %v232 = vadd.f32 %v147, %v231
  %v233 = vpop.f32.mrb[0].mxu0
  %v234 = vpop.f32.mrb[0].mxu0
  %v235 = vpop.f32.mrb[0].mxu0
  %236 = vdwg.mxu0
  %237 = vst [vmem:[%s5] sm:$0xff] %v232
  // Predicated region
  $region22: #{_lambda_.9} parent=0 // pred_check
    _
  $region23: #{_lambda_.9} parent=0 // pred_check_branch
    %239 = sbr.rel (0) target = $region25
  $region24: #{_lambda_.9} parent=0 // pred_region
    _
  $region25: #{_lambda_.9} parent=0 // pred_fallthru
    _
  // Predicated region
  $region26: #{_lambda_.9} parent=0 // pred_check
    _
  $region27: #{_lambda_.9} parent=0 // pred_check_branch
    %241 = sbr.rel (0) target = $region29
  $region28: #{_lambda_.9} parent=0 // pred_region
    _
  $region29: #{_lambda_.9} parent=0 // pred_fallthru
    _

// kernel: _lambda_.10
$region0: #{_lambda_.10}
  #allocation0 [shape = 'u32[]', space=smem, size = 0x4, offset = 0x4, fixed_abs, tag = 'smem constant byte address 0x4 - core index']
  #allocation1 [shape = 'u32[144,128]{1,0:T(1,128)}', space=vmem, size = 0x12000, scoped, tag = 'internal scratch']
  %s0 = inlined_call_operand.vmem [shape: f32[2,28,28], index: 0, kind: input, shape index: {}]
  %s1 = inlined_call_operand.vmem [shape: s32[2,4,784], index: 1, kind: input, shape index: {}]
  %s2 = inlined_call_operand.vmem [shape: f32[2,4,784], index: 2, kind: input, shape index: {}]
  %s3 = inlined_call_operand.vmem [shape: f32[2,1,784], index: 3, kind: output, shape index: {}]
  %s4 = sld [smem:[#allocation0]]
  $region45: #{_lambda_.10} parent=0
    _
  %s6 = ssub.s32 1, %s4
  %s7 = scalar_select 0, %s6, %s4
  loop: start=0, step=1, limit=4
  $region2: #{_lambda_.10} parent=0 // loop_pre_header
    _
  $region3: #{_lambda_.10} parent=0 // loop_header
    %s9 = sphi 0, %s13
    %p10 = scmp.ge.s32.totalorder %s9, 4
    %s19 = sphi 0, %s21
    %s22 = sphi 0, %s19
    %s23 = sphi 0, %s22
    %s39 = sphi 0, %s23
    %s45 = sphi 0, %s47
    %s48 = sphi 0, %s45
    %s49 = sphi 0, %s48
    %s65 = sphi 0, %s49
    %s71 = sphi 0, %s73
    %s74 = sphi 0, %s71
    %s75 = sphi 0, %s74
    %s91 = sphi 0, %s75
    %s97 = sphi 0, %s99
    %s100 = sphi 0, %s97
    %s101 = sphi 0, %s100
    %s117 = sphi 0, %s101
  $region4: #{_lambda_.10} parent=0 // loop_header_branch
    %12 = sbr.rel (%p10) target = $region8
  $region5: #{_lambda_.10} parent=0 // loop_body
    %s14 = ssub.s32 %s9, 1
    %s15 = ssub.s32 %s9, 2
    %s16 = sadd.s32 %s9, 1
    %s17 = ssub.s32 %s9, %s16
    %p18 = scmp.eq.s32.totalorder %s17, 0
    %s20 = sadd.s32 %s19, 1
    %s21 = scalar_select %p18, %s19, %s20
    %p24 = pneg %p18
    %p25 = scmp.eq.s32.totalorder %s9, 1
    %p26 = por %p24, %p25
    %p27 = scmp.ne.s32.totalorder %s19, %s22
    %p28 = scmp.eq.s32.totalorder %s9, 0
    %p29 = por %p27, %p28
    %p30 = scmp.ne.s32.totalorder %s19, %s22
    %p31 = scmp.eq.s32.totalorder %s14, 1
    %p32 = por %p30, %p31
    %p33 = scmp.ne.s32.totalorder %s22, %s23
    %p34 = scmp.eq.s32.totalorder %s14, 0
    %p35 = por %p33, %p34
    %p36 = scmp.ne.s32.totalorder %s22, %s23
    %p37 = scmp.eq.s32.totalorder %s15, 1
    %p38 = por %p36, %p37
    %p40 = scmp.ne.s32.totalorder %s23, %s39
    %p41 = scmp.eq.s32.totalorder %s15, 0
    %p42 = por %p40, %p41
    %s43 = ssub.s32 %s9, %s16
    %p44 = scmp.eq.s32.totalorder %s43, 0
    %s46 = sadd.s32 %s45, 1
    %s47 = scalar_select %p44, %s45, %s46
    %p50 = pneg %p44
    %p51 = scmp.eq.s32.totalorder %s9, 1
    %p52 = por %p50, %p51
    %p53 = scmp.ne.s32.totalorder %s45, %s48
    %p54 = scmp.eq.s32.totalorder %s9, 0
    %p55 = por %p53, %p54
    %p56 = scmp.ne.s32.totalorder %s45, %s48
    %p57 = scmp.eq.s32.totalorder %s14, 1
    %p58 = por %p56, %p57
    %p59 = scmp.ne.s32.totalorder %s48, %s49
    %p60 = scmp.eq.s32.totalorder %s14, 0
    %p61 = por %p59, %p60
    %p62 = scmp.ne.s32.totalorder %s48, %s49
    %p63 = scmp.eq.s32.totalorder %s15, 1
    %p64 = por %p62, %p63
    %p66 = scmp.ne.s32.totalorder %s49, %s65
    %p67 = scmp.eq.s32.totalorder %s15, 0
    %p68 = por %p66, %p67
    %s69 = ssub.s32 %s9, %s16
    %p70 = scmp.eq.s32.totalorder %s69, 0
    %s72 = sadd.s32 %s71, 1
    %s73 = scalar_select %p70, %s71, %s72
    %p76 = pneg %p70
    %p77 = scmp.eq.s32.totalorder %s9, 1
    %p78 = por %p76, %p77
    %p79 = scmp.ne.s32.totalorder %s71, %s74
    %p80 = scmp.eq.s32.totalorder %s9, 0
    %p81 = por %p79, %p80
    %p82 = scmp.ne.s32.totalorder %s71, %s74
    %p83 = scmp.eq.s32.totalorder %s14, 1
    %p84 = por %p82, %p83
    %p85 = scmp.ne.s32.totalorder %s74, %s75
    %p86 = scmp.eq.s32.totalorder %s14, 0
    %p87 = por %p85, %p86
    %p88 = scmp.ne.s32.totalorder %s74, %s75
    %p89 = scmp.eq.s32.totalorder %s15, 1
    %p90 = por %p88, %p89
    %p92 = scmp.ne.s32.totalorder %s75, %s91
    %p93 = scmp.eq.s32.totalorder %s15, 0
    %p94 = por %p92, %p93
    %s95 = ssub.s32 %s9, %s16
    %p96 = scmp.eq.s32.totalorder %s95, 0
    %s98 = sadd.s32 %s97, 1
    %s99 = scalar_select %p96, %s97, %s98
    %p102 = pneg %p96
    %p103 = scmp.eq.s32.totalorder %s9, 1
    %p104 = por %p102, %p103
    %p105 = scmp.ne.s32.totalorder %s97, %s100
    %p106 = scmp.eq.s32.totalorder %s9, 0
    %p107 = por %p105, %p106
    %p108 = scmp.ne.s32.totalorder %s97, %s100
    %p109 = scmp.eq.s32.totalorder %s14, 1
    %p110 = por %p108, %p109
    %p111 = scmp.ne.s32.totalorder %s100, %s101
    %p112 = scmp.eq.s32.totalorder %s14, 0
    %p113 = por %p111, %p112
    %p114 = scmp.ne.s32.totalorder %s100, %s101
    %p115 = scmp.eq.s32.totalorder %s15, 1
    %p116 = por %p114, %p115
    %p118 = scmp.ne.s32.totalorder %s101, %s117
    %p119 = scmp.eq.s32.totalorder %s15, 0
    %p120 = por %p118, %p119
    %p121 = scmp.le.s32.totalorder 1, %s9
    %p122 = scmp.lt.s32.totalorder %s9, 3
    %p123 = pnand %p121, %p122
    %p124 = pneg %p123
    // Predicated region
    $region9: #{_lambda_.10} parent=5 // pred_check
      _
    $region10: #{_lambda_.10} parent=5 // pred_check_branch
      %126 = sbr.rel (%p123) target = $region12
    $region11: #{_lambda_.10} parent=5 // pred_region
      %s127 = ssub.s32 %s9, 1
    $region12: #{_lambda_.10} parent=5 // pred_fallthru
      _
    %p128 = scmp.lt.s32.totalorder %s9, 2
    // Predicated region
    $region13: #{_lambda_.10} parent=5 // pred_check
      %p129 = pneg %p128
    $region14: #{_lambda_.10} parent=5 // pred_check_branch
      %131 = sbr.rel (%p129) target = $region16
    $region15: #{_lambda_.10} parent=5 // pred_region
      // Predicated region
      $region17: #{_lambda_.10} parent=15 // pred_check
        %p132 = pneg %p29
      $region18: #{_lambda_.10} parent=15 // pred_check_branch
        %134 = sbr.rel (%p132) target = $region20
      $region19: #{_lambda_.10} parent=15 // pred_region
        %p135 = scmp.lt.s32.totalorder %s9, 1
        %s136 = scalar_select %p135, %s9, 1
        %s137 = smul.addr %s136, 4
        %s138 = smul.addr %s137, 8
        %s139 = scalar_lea.vmem %s0, %s138
      $region20: #{_lambda_.10} parent=15 // pred_fallthru
        _
      // Predicated region
      $region21: #{_lambda_.10} parent=15 // pred_check
        %p140 = pneg %p55
      $region22: #{_lambda_.10} parent=15 // pred_check_branch
        %142 = sbr.rel (%p140) target = $region24
      $region23: #{_lambda_.10} parent=15 // pred_region
        %p143 = scmp.lt.s32.totalorder %s9, 1
        %s144 = scalar_select %p143, %s9, 1
        %s145 = smul.addr %s144, 7
        %s146 = smul.addr %s145, 4
        %s147 = scalar_lea.vmem %s1, %s146
      $region24: #{_lambda_.10} parent=15 // pred_fallthru
        _
      // Predicated region
      $region25: #{_lambda_.10} parent=15 // pred_check
        %p148 = pneg %p81
      $region26: #{_lambda_.10} parent=15 // pred_check_branch
        %150 = sbr.rel (%p148) target = $region28
      $region27: #{_lambda_.10} parent=15 // pred_region
        %p151 = scmp.lt.s32.totalorder %s9, 1
        %s152 = scalar_select %p151, %s9, 1
        %s153 = smul.addr %s152, 7
        %s154 = smul.addr %s153, 4
        %s155 = scalar_lea.vmem %s2, %s154
      $region28: #{_lambda_.10} parent=15 // pred_fallthru
        _
    $region16: #{_lambda_.10} parent=5 // pred_fallthru
      _
    %p156 = scmp.le.s32.totalorder 1, %s9
    %p157 = scmp.lt.s32.totalorder %s9, 3
    %p158 = pnand %p156, %p157
    %p159 = pneg %p158
    // Predicated region
    $region29: #{_lambda_.10} parent=5 // pred_check
      _
    $region30: #{_lambda_.10} parent=5 // pred_check_branch
      %161 = sbr.rel (%p158) target = $region32
    $region31: #{_lambda_.10} parent=5 // pred_region
      %s162 = ssub.s32 %s9, 1
      %p163 = scmp.lt.s32.totalorder %s14, 1
      %s164 = scalar_select %p163, %s14, 1
      %s165 = smul.addr %s164, 4
      %s166 = smul.addr %s165, 8
      %s167 = scalar_lea.vmem %s0, %s166
      %p168 = pneg %p35
      %p169 = pneg %p32
      %p170 = scmp.lt.s32.totalorder %s14, 1
      %s171 = scalar_select %p170, %s14, 1
      %s172 = smul.addr %s171, 7
      %s173 = smul.addr %s172, 4
      %s174 = scalar_lea.vmem %s1, %s173
      %p175 = pneg %p61
      %p176 = pneg %p58
      %p177 = scmp.lt.s32.totalorder %s14, 1
      %s178 = scalar_select %p177, %s14, 1
      %s179 = smul.addr %s178, 7
      %s180 = smul.addr %s179, 4
      %s181 = scalar_lea.vmem %s2, %s180
      %p182 = pneg %p87
      %p183 = pneg %p84
      %p184 = pneg %p113
      %p185 = pneg %p110
      %p186 = scmp.lt.s32.totalorder %s14, 1
      %s187 = scalar_select %p186, %s14, 1
      %s188 = smul.addr %s187, 7
      %s189 = scalar_lea.vmem %s3, %s188
      %p190 = scmp.lt.s32.totalorder %s14, 1
      %s191 = scalar_select %p190, %s14, 1
      %s192 = smul.addr %s191, 4
      %s193 = smul.addr %s192, 8
      %s194 = scalar_lea.vmem %s0, %s193
      %p195 = scmp.lt.s32.totalorder %s14, 1
      %s196 = scalar_select %p195, %s14, 1
      %s197 = smul.addr %s196, 7
      %s198 = smul.addr %s197, 4
      %s199 = scalar_lea.vmem %s1, %s198
      %p200 = scmp.lt.s32.totalorder %s14, 1
      %s201 = scalar_select %p200, %s14, 1
      %s202 = smul.addr %s201, 7
      %s203 = smul.addr %s202, 4
      %s204 = scalar_lea.vmem %s2, %s203
      %p205 = scmp.lt.s32.totalorder %s14, 1
      %s206 = scalar_select %p205, %s14, 1
      %s207 = smul.addr %s206, 7
      %s208 = scalar_lea.vmem %s3, %s207
      %v209 = vld [vmem:[%s194] sm:$0xff]
      %v210 = vld [vmem:[%s194 + $0x8] sm:$0xff]
      %v211 = vld [vmem:[%s194 + $0x10] sm:$0xff]
      %v212 = vld [vmem:[%s194 + $0x18] sm:$0xf]
      %v213 = vld [vmem:[%s199] sm:$0xff]
      %v214 = vld [vmem:[%s199 + $0x8] sm:$0xff]
      %v215 = vld [vmem:[%s199 + $0x10] sm:$0xff]
      %v216 = vld [vmem:[%s199 + $0x18] sm:$0xf]
      %v217 = vld [vmem:[%s204] sm:$0xff]
      %v218 = vld [vmem:[%s204 + $0x8] sm:$0xff]
      %v219 = vld [vmem:[%s204 + $0x10] sm:$0xff]
      %v220 = vld [vmem:[%s204 + $0x18] sm:$0xf]
      %v221 = vlaneseq
      %v222 = vshrl.u32 %v221, 7
      %v223 = vadd.s32 %v222, 8
      %v224 = vadd.s32 %v222, 16
      %v225 = vadd.s32 %v222, 24
      %v226 = vlaneseq
      %v227 = vshrl.u32 %v226, 7
      %v228 = vsub.s32 0, %v227
      %v229 = vrot.slane %v213, %v228
      %v230 = vlaneseq
      %v231 = vshrl.u32 %v230, 7
      %v232 = vsub.s32 4, %v231
      %v233 = vrot.slane %v213, %v232
      %v234 = vlaneseq
      %v235 = vshrl.u32 %v234, 7
      %v236 = vsub.s32 0, %v235
      %v237 = vrot.slane %v214, %v236
      %v238 = vlaneseq
      %v239 = vshrl.u32 %v238, 7
      %v240 = vsub.s32 4, %v239
      %v241 = vrot.slane %v214, %v240
      %v242 = vlaneseq
      %v243 = vshrl.u32 %v242, 7
      %v244 = vsub.s32 0, %v243
      %v245 = vrot.slane %v215, %v244
      %v246 = vlaneseq
      %v247 = vshrl.u32 %v246, 7
      %v248 = vsub.s32 4, %v247
      %v249 = vrot.slane %v215, %v248
      %v250 = vlaneseq
      %v251 = vshrl.u32 %v250, 7
      %v252 = vsub.s32 0, %v251
      %v253 = vrot.slane %v216, %v252
      %v254 = vlaneseq
      %v255 = vshrl.u32 %v254, 7
      %v256 = vsub.s32 0, %v255
      %v257 = vrot.slane %v229, %v256
      %v258 = vlaneseq
      %v259 = vshrl.u32 %v258, 7
      %v260 = vsub.s32 0, %v259
      %v261 = vrot.slane %v233, %v260
      %v262 = vlaneseq
      %v263 = vshrl.u32 %v262, 7
      %v264 = vsub.s32 0, %v263
      %v265 = vrot.slane %v237, %v264
      %v266 = vlaneseq
      %v267 = vshrl.u32 %v266, 7
      %v268 = vsub.s32 0, %v267
      %v269 = vrot.slane %v241, %v268
      %v270 = vlaneseq
      %v271 = vshrl.u32 %v270, 7
      %v272 = vsub.s32 0, %v271
      %v273 = vrot.slane %v245, %v272
      %v274 = vlaneseq
      %v275 = vshrl.u32 %v274, 7
      %v276 = vsub.s32 0, %v275
      %v277 = vrot.slane %v249, %v276
      %v278 = vlaneseq
      %v279 = vshrl.u32 %v278, 7
      %v280 = vsub.s32 0, %v279
      %v281 = vrot.slane %v253, %v280
      %vm282 = vcmp.eq.s32.totalorder %v222, %v257
      %vm283 = vcmp.eq.s32.totalorder %v222, %v261
      %vm284 = vcmp.eq.s32.totalorder %v222, %v265
      %vm285 = vcmp.eq.s32.totalorder %v222, %v269
      %vm286 = vcmp.eq.s32.totalorder %v222, %v273
      %vm287 = vcmp.eq.s32.totalorder %v222, %v277
      %vm288 = vcmp.eq.s32.totalorder %v222, %v281
      %vm289 = vcmp.eq.s32.totalorder %v223, %v257
      %vm290 = vcmp.eq.s32.totalorder %v223, %v261
      %vm291 = vcmp.eq.s32.totalorder %v223, %v265
      %vm292 = vcmp.eq.s32.totalorder %v223, %v269
      %vm293 = vcmp.eq.s32.totalorder %v223, %v273
      %vm294 = vcmp.eq.s32.totalorder %v223, %v277
      %vm295 = vcmp.eq.s32.totalorder %v223, %v281
      %vm296 = vcmp.eq.s32.totalorder %v224, %v257
      %vm297 = vcmp.eq.s32.totalorder %v224, %v261
      %vm298 = vcmp.eq.s32.totalorder %v224, %v265
      %vm299 = vcmp.eq.s32.totalorder %v224, %v269
      %vm300 = vcmp.eq.s32.totalorder %v224, %v273
      %vm301 = vcmp.eq.s32.totalorder %v224, %v277
      %vm302 = vcmp.eq.s32.totalorder %v224, %v281
      %vm303 = vcmp.eq.s32.totalorder %v225, %v257
      %vm304 = vcmp.eq.s32.totalorder %v225, %v261
      %vm305 = vcmp.eq.s32.totalorder %v225, %v265
      %vm306 = vcmp.eq.s32.totalorder %v225, %v269
      %vm307 = vcmp.eq.s32.totalorder %v225, %v273
      %vm308 = vcmp.eq.s32.totalorder %v225, %v277
      %vm309 = vcmp.eq.s32.totalorder %v225, %v281
      %v310 = vsel %vm282, 1, 0
      %v311 = vsel %vm283, 1, 0
      %v312 = vsel %vm284, 1, 0
      %v313 = vsel %vm285, 1, 0
      %v314 = vsel %vm286, 1, 0
      %v315 = vsel %vm287, 1, 0
      %v316 = vsel %vm288, 1, 0
      %v317 = vsel %vm289, 1, 0
      %v318 = vsel %vm290, 1, 0
      %v319 = vsel %vm291, 1, 0
      %v320 = vsel %vm292, 1, 0
      %v321 = vsel %vm293, 1, 0
      %v322 = vsel %vm294, 1, 0
      %v323 = vsel %vm295, 1, 0
      %v324 = vsel %vm296, 1, 0
      %v325 = vsel %vm297, 1, 0
      %v326 = vsel %vm298, 1, 0
      %v327 = vsel %vm299, 1, 0
      %v328 = vsel %vm300, 1, 0
      %v329 = vsel %vm301, 1, 0
      %v330 = vsel %vm302, 1, 0
      %v331 = vsel %vm303, 1, 0
      %v332 = vsel %vm304, 1, 0
      %v333 = vsel %vm305, 1, 0
      %v334 = vsel %vm306, 1, 0
      %v335 = vsel %vm307, 1, 0
      %v336 = vsel %vm308, 1, 0
      %v337 = vsel %vm309, 1, 0
      %v338 = vcvt.s32.f32 %v310
      %v339 = vcvt.s32.f32 %v311
      %v340 = vcvt.s32.f32 %v312
      %v341 = vcvt.s32.f32 %v313
      %v342 = vcvt.s32.f32 %v314
      %v343 = vcvt.s32.f32 %v315
      %v344 = vcvt.s32.f32 %v316
      %v345 = vcvt.s32.f32 %v317
      %v346 = vcvt.s32.f32 %v318
      %v347 = vcvt.s32.f32 %v319
      %v348 = vcvt.s32.f32 %v320
      %v349 = vcvt.s32.f32 %v321
      %v350 = vcvt.s32.f32 %v322
      %v351 = vcvt.s32.f32 %v323
      %v352 = vcvt.s32.f32 %v324
      %v353 = vcvt.s32.f32 %v325
      %v354 = vcvt.s32.f32 %v326
      %v355 = vcvt.s32.f32 %v327
      %v356 = vcvt.s32.f32 %v328
      %v357 = vcvt.s32.f32 %v329
      %v358 = vcvt.s32.f32 %v330
      %v359 = vcvt.s32.f32 %v331
      %v360 = vcvt.s32.f32 %v332
      %v361 = vcvt.s32.f32 %v333
      %v362 = vcvt.s32.f32 %v334
      %v363 = vcvt.s32.f32 %v335
      %v364 = vcvt.s32.f32 %v336
      %v365 = vcvt.s32.f32 %v337
      %v370 = vlaneseq
      %v371 = vshrl.u32 %v370, 7
      %v372 = vsub.s32 0, %v371
      %v373 = vrot.slane %v217, %v372
      %v374 = vlaneseq
      %v375 = vshrl.u32 %v374, 7
      %v376 = vsub.s32 4, %v375
      %v377 = vrot.slane %v217, %v376
      %v378 = vlaneseq
      %v379 = vshrl.u32 %v378, 7
      %v380 = vsub.s32 0, %v379
      %v381 = vrot.slane %v218, %v380
      %v382 = vlaneseq
      %v383 = vshrl.u32 %v382, 7
      %v384 = vsub.s32 4, %v383
      %v385 = vrot.slane %v218, %v384
      %v386 = vlaneseq
      %v387 = vshrl.u32 %v386, 7
      %v388 = vsub.s32 0, %v387
      %v389 = vrot.slane %v219, %v388
      %v390 = vlaneseq
      %v391 = vshrl.u32 %v390, 7
      %v392 = vsub.s32 4, %v391
      %v393 = vrot.slane %v219, %v392
      %v394 = vlaneseq
      %v395 = vshrl.u32 %v394, 7
      %v396 = vsub.s32 0, %v395
      %v397 = vrot.slane %v220, %v396
      %v405 = vlaneseq
      %v406 = vshrl.u32 %v405, 7
      %v407 = vsub.s32 0, %v406
      %v408 = vrot.slane %v373, %v407
      %v409 = vlaneseq
      %v410 = vshrl.u32 %v409, 7
      %v411 = vsub.s32 0, %v410
      %v412 = vrot.slane %v377, %v411
      %v413 = vlaneseq
      %v414 = vshrl.u32 %v413, 7
      %v415 = vsub.s32 0, %v414
      %v416 = vrot.slane %v381, %v415
      %v417 = vlaneseq
      %v418 = vshrl.u32 %v417, 7
      %v419 = vsub.s32 0, %v418
      %v420 = vrot.slane %v385, %v419
      %v421 = vlaneseq
      %v422 = vshrl.u32 %v421, 7
      %v423 = vsub.s32 0, %v422
      %v424 = vrot.slane %v389, %v423
      %v425 = vlaneseq
      %v426 = vshrl.u32 %v425, 7
      %v427 = vsub.s32 0, %v426
      %v428 = vrot.slane %v393, %v427
      %v429 = vlaneseq
      %v430 = vshrl.u32 %v429, 7
      %v431 = vsub.s32 0, %v430
      %v432 = vrot.slane %v397, %v431
      %v433 = vmul.f32 %v408, %v338
      %v434 = vmul.f32 %v412, %v339
      %v435 = vmul.f32 %v416, %v340
      %v436 = vmul.f32 %v420, %v341
      %v437 = vmul.f32 %v424, %v342
      %v438 = vmul.f32 %v428, %v343
      %v439 = vmul.f32 %v432, %v344
      %v440 = vmul.f32 %v408, %v345
      %v441 = vmul.f32 %v412, %v346
      %v442 = vmul.f32 %v416, %v347
      %v443 = vmul.f32 %v420, %v348
      %v444 = vmul.f32 %v424, %v349
      %v445 = vmul.f32 %v428, %v350
      %v446 = vmul.f32 %v432, %v351
      %v447 = vmul.f32 %v408, %v352
      %v448 = vmul.f32 %v412, %v353
      %v449 = vmul.f32 %v416, %v354
      %v450 = vmul.f32 %v420, %v355
      %v451 = vmul.f32 %v424, %v356
      %v452 = vmul.f32 %v428, %v357
      %v453 = vmul.f32 %v432, %v358
      %v454 = vmul.f32 %v408, %v359
      %v455 = vmul.f32 %v412, %v360
      %v456 = vmul.f32 %v416, %v361
      %v457 = vmul.f32 %v420, %v362
      %v458 = vmul.f32 %v424, %v363
      %v459 = vmul.f32 %v428, %v364
      %v460 = vmul.f32 %v432, %v365
      %v461 = vlaneseq
      %v462 = vshrl.u32 %v461, 7
      %v463 = vsub.s32 1, %v462
      %v464 = vrot.slane %v213, %v463
      %v465 = vlaneseq
      %v466 = vshrl.u32 %v465, 7
      %v467 = vsub.s32 5, %v466
      %v468 = vrot.slane %v213, %v467
      %v469 = vlaneseq
      %v470 = vshrl.u32 %v469, 7
      %v471 = vsub.s32 1, %v470
      %v472 = vrot.slane %v214, %v471
      %v473 = vlaneseq
      %v474 = vshrl.u32 %v473, 7
      %v475 = vsub.s32 5, %v474
      %v476 = vrot.slane %v214, %v475
      %v477 = vlaneseq
      %v478 = vshrl.u32 %v477, 7
      %v479 = vsub.s32 1, %v478
      %v480 = vrot.slane %v215, %v479
      %v481 = vlaneseq
      %v482 = vshrl.u32 %v481, 7
      %v483 = vsub.s32 5, %v482
      %v484 = vrot.slane %v215, %v483
      %v485 = vlaneseq
      %v486 = vshrl.u32 %v485, 7
      %v487 = vsub.s32 1, %v486
      %v488 = vrot.slane %v216, %v487
      %v489 = vlaneseq
      %v490 = vshrl.u32 %v489, 7
      %v491 = vsub.s32 1, %v490
      %v492 = vrot.slane %v464, %v491
      %v493 = vlaneseq
      %v494 = vshrl.u32 %v493, 7
      %v495 = vsub.s32 1, %v494
      %v496 = vrot.slane %v468, %v495
      %v497 = vlaneseq
      %v498 = vshrl.u32 %v497, 7
      %v499 = vsub.s32 1, %v498
      %v500 = vrot.slane %v472, %v499
      %v501 = vlaneseq
      %v502 = vshrl.u32 %v501, 7
      %v503 = vsub.s32 1, %v502
      %v504 = vrot.slane %v476, %v503
      %v505 = vlaneseq
      %v506 = vshrl.u32 %v505, 7
      %v507 = vsub.s32 1, %v506
      %v508 = vrot.slane %v480, %v507
      %v509 = vlaneseq
      %v510 = vshrl.u32 %v509, 7
      %v511 = vsub.s32 1, %v510
      %v512 = vrot.slane %v484, %v511
      %v513 = vlaneseq
      %v514 = vshrl.u32 %v513, 7
      %v515 = vsub.s32 1, %v514
      %v516 = vrot.slane %v488, %v515
      %vm517 = vcmp.eq.s32.totalorder %v222, %v492
      %vm518 = vcmp.eq.s32.totalorder %v222, %v496
      %vm519 = vcmp.eq.s32.totalorder %v222, %v500
      %vm520 = vcmp.eq.s32.totalorder %v222, %v504
      %vm521 = vcmp.eq.s32.totalorder %v222, %v508
      %vm522 = vcmp.eq.s32.totalorder %v222, %v512
      %vm523 = vcmp.eq.s32.totalorder %v222, %v516
      %vm524 = vcmp.eq.s32.totalorder %v223, %v492
      %vm525 = vcmp.eq.s32.totalorder %v223, %v496
      %vm526 = vcmp.eq.s32.totalorder %v223, %v500
      %vm527 = vcmp.eq.s32.totalorder %v223, %v504
      %vm528 = vcmp.eq.s32.totalorder %v223, %v508
      %vm529 = vcmp.eq.s32.totalorder %v223, %v512
      %vm530 = vcmp.eq.s32.totalorder %v223, %v516
      %vm531 = vcmp.eq.s32.totalorder %v224, %v492
      %vm532 = vcmp.eq.s32.totalorder %v224, %v496
      %vm533 = vcmp.eq.s32.totalorder %v224, %v500
      %vm534 = vcmp.eq.s32.totalorder %v224, %v504
      %vm535 = vcmp.eq.s32.totalorder %v224, %v508
      %vm536 = vcmp.eq.s32.totalorder %v224, %v512
      %vm537 = vcmp.eq.s32.totalorder %v224, %v516
      %vm538 = vcmp.eq.s32.totalorder %v225, %v492
      %vm539 = vcmp.eq.s32.totalorder %v225, %v496
      %vm540 = vcmp.eq.s32.totalorder %v225, %v500
      %vm541 = vcmp.eq.s32.totalorder %v225, %v504
      %vm542 = vcmp.eq.s32.totalorder %v225, %v508
      %vm543 = vcmp.eq.s32.totalorder %v225, %v512
      %vm544 = vcmp.eq.s32.totalorder %v225, %v516
      %v545 = vsel %vm517, 1, 0
      %v546 = vsel %vm518, 1, 0
      %v547 = vsel %vm519, 1, 0
      %v548 = vsel %vm520, 1, 0
      %v549 = vsel %vm521, 1, 0
      %v550 = vsel %vm522, 1, 0
      %v551 = vsel %vm523, 1, 0
      %v552 = vsel %vm524, 1, 0
      %v553 = vsel %vm525, 1, 0
      %v554 = vsel %vm526, 1, 0
      %v555 = vsel %vm527, 1, 0
      %v556 = vsel %vm528, 1, 0
      %v557 = vsel %vm529, 1, 0
      %v558 = vsel %vm530, 1, 0
      %v559 = vsel %vm531, 1, 0
      %v560 = vsel %vm532, 1, 0
      %v561 = vsel %vm533, 1, 0
      %v562 = vsel %vm534, 1, 0
      %v563 = vsel %vm535, 1, 0
      %v564 = vsel %vm536, 1, 0
      %v565 = vsel %vm537, 1, 0
      %v566 = vsel %vm538, 1, 0
      %v567 = vsel %vm539, 1, 0
      %v568 = vsel %vm540, 1, 0
      %v569 = vsel %vm541, 1, 0
      %v570 = vsel %vm542, 1, 0
      %v571 = vsel %vm543, 1, 0
      %v572 = vsel %vm544, 1, 0
      %v573 = vcvt.s32.f32 %v545
      %v574 = vcvt.s32.f32 %v546
      %v575 = vcvt.s32.f32 %v547
      %v576 = vcvt.s32.f32 %v548
      %v577 = vcvt.s32.f32 %v549
      %v578 = vcvt.s32.f32 %v550
      %v579 = vcvt.s32.f32 %v551
      %v580 = vcvt.s32.f32 %v552
      %v581 = vcvt.s32.f32 %v553
      %v582 = vcvt.s32.f32 %v554
      %v583 = vcvt.s32.f32 %v555
      %v584 = vcvt.s32.f32 %v556
      %v585 = vcvt.s32.f32 %v557
      %v586 = vcvt.s32.f32 %v558
      %v587 = vcvt.s32.f32 %v559
      %v588 = vcvt.s32.f32 %v560
      %v589 = vcvt.s32.f32 %v561
      %v590 = vcvt.s32.f32 %v562
      %v591 = vcvt.s32.f32 %v563
      %v592 = vcvt.s32.f32 %v564
      %v593 = vcvt.s32.f32 %v565
      %v594 = vcvt.s32.f32 %v566
      %v595 = vcvt.s32.f32 %v567
      %v596 = vcvt.s32.f32 %v568
      %v597 = vcvt.s32.f32 %v569
      %v598 = vcvt.s32.f32 %v570
      %v599 = vcvt.s32.f32 %v571
      %v600 = vcvt.s32.f32 %v572
      %v601 = vlaneseq
      %v602 = vshrl.u32 %v601, 7
      %v603 = vsub.s32 1, %v602
      %v604 = vrot.slane %v217, %v603
      %v605 = vlaneseq
      %v606 = vshrl.u32 %v605, 7
      %v607 = vsub.s32 5, %v606
      %v608 = vrot.slane %v217, %v607
      %v609 = vlaneseq
      %v610 = vshrl.u32 %v609, 7
      %v611 = vsub.s32 1, %v610
      %v612 = vrot.slane %v218, %v611
      %v613 = vlaneseq
      %v614 = vshrl.u32 %v613, 7
      %v615 = vsub.s32 5, %v614
      %v616 = vrot.slane %v218, %v615
      %v617 = vlaneseq
      %v618 = vshrl.u32 %v617, 7
      %v619 = vsub.s32 1, %v618
      %v620 = vrot.slane %v219, %v619
      %v621 = vlaneseq
      %v622 = vshrl.u32 %v621, 7
      %v623 = vsub.s32 5, %v622
      %v624 = vrot.slane %v219, %v623
      %v625 = vlaneseq
      %v626 = vshrl.u32 %v625, 7
      %v627 = vsub.s32 1, %v626
      %v628 = vrot.slane %v220, %v627
      %v636 = vlaneseq
      %v637 = vshrl.u32 %v636, 7
      %v638 = vsub.s32 1, %v637
      %v639 = vrot.slane %v604, %v638
      %v640 = vlaneseq
      %v641 = vshrl.u32 %v640, 7
      %v642 = vsub.s32 1, %v641
      %v643 = vrot.slane %v608, %v642
      %v644 = vlaneseq
      %v645 = vshrl.u32 %v644, 7
      %v646 = vsub.s32 1, %v645
      %v647 = vrot.slane %v612, %v646
      %v648 = vlaneseq
      %v649 = vshrl.u32 %v648, 7
      %v650 = vsub.s32 1, %v649
      %v651 = vrot.slane %v616, %v650
      %v652 = vlaneseq
      %v653 = vshrl.u32 %v652, 7
      %v654 = vsub.s32 1, %v653
      %v655 = vrot.slane %v620, %v654
      %v656 = vlaneseq
      %v657 = vshrl.u32 %v656, 7
      %v658 = vsub.s32 1, %v657
      %v659 = vrot.slane %v624, %v658
      %v660 = vlaneseq
      %v661 = vshrl.u32 %v660, 7
      %v662 = vsub.s32 1, %v661
      %v663 = vrot.slane %v628, %v662
      %v664 = vmul.f32 %v639, %v573
      %v665 = vmul.f32 %v643, %v574
      %v666 = vmul.f32 %v647, %v575
      %v667 = vmul.f32 %v651, %v576
      %v668 = vmul.f32 %v655, %v577
      %v669 = vmul.f32 %v659, %v578
      %v670 = vmul.f32 %v663, %v579
      %v671 = vmul.f32 %v639, %v580
      %v672 = vmul.f32 %v643, %v581
      %v673 = vmul.f32 %v647, %v582
      %v674 = vmul.f32 %v651, %v583
      %v675 = vmul.f32 %v655, %v584
      %v676 = vmul.f32 %v659, %v585
      %v677 = vmul.f32 %v663, %v586
      %v678 = vmul.f32 %v639, %v587
      %v679 = vmul.f32 %v643, %v588
      %v680 = vmul.f32 %v647, %v589
      %v681 = vmul.f32 %v651, %v590
      %v682 = vmul.f32 %v655, %v591
      %v683 = vmul.f32 %v659, %v592
      %v684 = vmul.f32 %v663, %v593
      %v685 = vmul.f32 %v639, %v594
      %v686 = vmul.f32 %v643, %v595
      %v687 = vmul.f32 %v647, %v596
      %v688 = vmul.f32 %v651, %v597
      %v689 = vmul.f32 %v655, %v598
      %v690 = vmul.f32 %v659, %v599
      %v691 = vmul.f32 %v663, %v600
      %v692 = vadd.f32 %v433, %v664
      %v693 = vadd.f32 %v434, %v665
      %v694 = vadd.f32 %v435, %v666
      %v695 = vadd.f32 %v436, %v667
      %v696 = vadd.f32 %v437, %v668
      %v697 = vadd.f32 %v438, %v669
      %v698 = vadd.f32 %v439, %v670
      %v699 = vadd.f32 %v440, %v671
      %v700 = vadd.f32 %v441, %v672
      %v701 = vadd.f32 %v442, %v673
      %v702 = vadd.f32 %v443, %v674
      %v703 = vadd.f32 %v444, %v675
      %v704 = vadd.f32 %v445, %v676
      %v705 = vadd.f32 %v446, %v677
      %v706 = vadd.f32 %v447, %v678
      %v707 = vadd.f32 %v448, %v679
      %v708 = vadd.f32 %v449, %v680
      %v709 = vadd.f32 %v450, %v681
      %v710 = vadd.f32 %v451, %v682
      %v711 = vadd.f32 %v452, %v683
      %v712 = vadd.f32 %v453, %v684
      %v713 = vadd.f32 %v454, %v685
      %v714 = vadd.f32 %v455, %v686
      %v715 = vadd.f32 %v456, %v687
      %v716 = vadd.f32 %v457, %v688
      %v717 = vadd.f32 %v458, %v689
      %v718 = vadd.f32 %v459, %v690
      %v719 = vadd.f32 %v460, %v691
      %v720 = vlaneseq
      %v721 = vshrl.u32 %v720, 7
      %v722 = vsub.s32 2, %v721
      %v723 = vrot.slane %v213, %v722
      %v724 = vlaneseq
      %v725 = vshrl.u32 %v724, 7
      %v726 = vsub.s32 6, %v725
      %v727 = vrot.slane %v213, %v726
      %v728 = vlaneseq
      %v729 = vshrl.u32 %v728, 7
      %v730 = vsub.s32 2, %v729
      %v731 = vrot.slane %v214, %v730
      %v732 = vlaneseq
      %v733 = vshrl.u32 %v732, 7
      %v734 = vsub.s32 6, %v733
      %v735 = vrot.slane %v214, %v734
      %v736 = vlaneseq
      %v737 = vshrl.u32 %v736, 7
      %v738 = vsub.s32 2, %v737
      %v739 = vrot.slane %v215, %v738
      %v740 = vlaneseq
      %v741 = vshrl.u32 %v740, 7
      %v742 = vsub.s32 6, %v741
      %v743 = vrot.slane %v215, %v742
      %v744 = vlaneseq
      %v745 = vshrl.u32 %v744, 7
      %v746 = vsub.s32 2, %v745
      %v747 = vrot.slane %v216, %v746
      %v748 = vlaneseq
      %v749 = vshrl.u32 %v748, 7
      %v750 = vsub.s32 2, %v749
      %v751 = vrot.slane %v723, %v750
      %v752 = vlaneseq
      %v753 = vshrl.u32 %v752, 7
      %v754 = vsub.s32 2, %v753
      %v755 = vrot.slane %v727, %v754
      %v756 = vlaneseq
      %v757 = vshrl.u32 %v756, 7
      %v758 = vsub.s32 2, %v757
      %v759 = vrot.slane %v731, %v758
      %v760 = vlaneseq
      %v761 = vshrl.u32 %v760, 7
      %v762 = vsub.s32 2, %v761
      %v763 = vrot.slane %v735, %v762
      %v764 = vlaneseq
      %v765 = vshrl.u32 %v764, 7
      %v766 = vsub.s32 2, %v765
      %v767 = vrot.slane %v739, %v766
      %v768 = vlaneseq
      %v769 = vshrl.u32 %v768, 7
      %v770 = vsub.s32 2, %v769
      %v771 = vrot.slane %v743, %v770
      %v772 = vlaneseq
      %v773 = vshrl.u32 %v772, 7
      %v774 = vsub.s32 2, %v773
      %v775 = vrot.slane %v747, %v774
      %vm776 = vcmp.eq.s32.totalorder %v222, %v751
      %vm777 = vcmp.eq.s32.totalorder %v222, %v755
      %vm778 = vcmp.eq.s32.totalorder %v222, %v759
      %vm779 = vcmp.eq.s32.totalorder %v222, %v763
      %vm780 = vcmp.eq.s32.totalorder %v222, %v767
      %vm781 = vcmp.eq.s32.totalorder %v222, %v771
      %vm782 = vcmp.eq.s32.totalorder %v222, %v775
      %vm783 = vcmp.eq.s32.totalorder %v223, %v751
      %vm784 = vcmp.eq.s32.totalorder %v223, %v755
      %vm785 = vcmp.eq.s32.totalorder %v223, %v759
      %vm786 = vcmp.eq.s32.totalorder %v223, %v763
      %vm787 = vcmp.eq.s32.totalorder %v223, %v767
      %vm788 = vcmp.eq.s32.totalorder %v223, %v771
      %vm789 = vcmp.eq.s32.totalorder %v223, %v775
      %vm790 = vcmp.eq.s32.totalorder %v224, %v751
      %vm791 = vcmp.eq.s32.totalorder %v224, %v755
      %vm792 = vcmp.eq.s32.totalorder %v224, %v759
      %vm793 = vcmp.eq.s32.totalorder %v224, %v763
      %vm794 = vcmp.eq.s32.totalorder %v224, %v767
      %vm795 = vcmp.eq.s32.totalorder %v224, %v771
      %vm796 = vcmp.eq.s32.totalorder %v224, %v775
      %vm797 = vcmp.eq.s32.totalorder %v225, %v751
      %vm798 = vcmp.eq.s32.totalorder %v225, %v755
      %vm799 = vcmp.eq.s32.totalorder %v225, %v759
      %vm800 = vcmp.eq.s32.totalorder %v225, %v763
      %vm801 = vcmp.eq.s32.totalorder %v225, %v767
      %vm802 = vcmp.eq.s32.totalorder %v225, %v771
      %vm803 = vcmp.eq.s32.totalorder %v225, %v775
      %v804 = vsel %vm776, 1, 0
      %v805 = vsel %vm777, 1, 0
      %v806 = vsel %vm778, 1, 0
      %v807 = vsel %vm779, 1, 0
      %v808 = vsel %vm780, 1, 0
      %v809 = vsel %vm781, 1, 0
      %v810 = vsel %vm782, 1, 0
      %v811 = vsel %vm783, 1, 0
      %v812 = vsel %vm784, 1, 0
      %v813 = vsel %vm785, 1, 0
      %v814 = vsel %vm786, 1, 0
      %v815 = vsel %vm787, 1, 0
      %v816 = vsel %vm788, 1, 0
      %v817 = vsel %vm789, 1, 0
      %v818 = vsel %vm790, 1, 0
      %v819 = vsel %vm791, 1, 0
      %v820 = vsel %vm792, 1, 0
      %v821 = vsel %vm793, 1, 0
      %v822 = vsel %vm794, 1, 0
      %v823 = vsel %vm795, 1, 0
      %v824 = vsel %vm796, 1, 0
      %v825 = vsel %vm797, 1, 0
      %v826 = vsel %vm798, 1, 0
      %v827 = vsel %vm799, 1, 0
      %v828 = vsel %vm800, 1, 0
      %v829 = vsel %vm801, 1, 0
      %v830 = vsel %vm802, 1, 0
      %v831 = vsel %vm803, 1, 0
      %v832 = vcvt.s32.f32 %v804
      %v833 = vcvt.s32.f32 %v805
      %v834 = vcvt.s32.f32 %v806
      %v835 = vcvt.s32.f32 %v807
      %v836 = vcvt.s32.f32 %v808
      %v837 = vcvt.s32.f32 %v809
      %v838 = vcvt.s32.f32 %v810
      %v839 = vcvt.s32.f32 %v811
      %v840 = vcvt.s32.f32 %v812
      %v841 = vcvt.s32.f32 %v813
      %v842 = vcvt.s32.f32 %v814
      %v843 = vcvt.s32.f32 %v815
      %v844 = vcvt.s32.f32 %v816
      %v845 = vcvt.s32.f32 %v817
      %v846 = vcvt.s32.f32 %v818
      %v847 = vcvt.s32.f32 %v819
      %v848 = vcvt.s32.f32 %v820
      %v849 = vcvt.s32.f32 %v821
      %v850 = vcvt.s32.f32 %v822
      %v851 = vcvt.s32.f32 %v823
      %v852 = vcvt.s32.f32 %v824
      %v853 = vcvt.s32.f32 %v825
      %v854 = vcvt.s32.f32 %v826
      %v855 = vcvt.s32.f32 %v827
      %v856 = vcvt.s32.f32 %v828
      %v857 = vcvt.s32.f32 %v829
      %v858 = vcvt.s32.f32 %v830
      %v859 = vcvt.s32.f32 %v831
      %v860 = vlaneseq
      %v861 = vshrl.u32 %v860, 7
      %v862 = vsub.s32 2, %v861
      %v863 = vrot.slane %v217, %v862
      %v864 = vlaneseq
      %v865 = vshrl.u32 %v864, 7
      %v866 = vsub.s32 6, %v865
      %v867 = vrot.slane %v217, %v866
      %v868 = vlaneseq
      %v869 = vshrl.u32 %v868, 7
      %v870 = vsub.s32 2, %v869
      %v871 = vrot.slane %v218, %v870
      %v872 = vlaneseq
      %v873 = vshrl.u32 %v872, 7
      %v874 = vsub.s32 6, %v873
      %v875 = vrot.slane %v218, %v874
      %v876 = vlaneseq
      %v877 = vshrl.u32 %v876, 7
      %v878 = vsub.s32 2, %v877
      %v879 = vrot.slane %v219, %v878
      %v880 = vlaneseq
      %v881 = vshrl.u32 %v880, 7
      %v882 = vsub.s32 6, %v881
      %v883 = vrot.slane %v219, %v882
      %v884 = vlaneseq
      %v885 = vshrl.u32 %v884, 7
      %v886 = vsub.s32 2, %v885
      %v887 = vrot.slane %v220, %v886
      %v895 = vlaneseq
      %v896 = vshrl.u32 %v895, 7
      %v897 = vsub.s32 2, %v896
      %v898 = vrot.slane %v863, %v897
      %v899 = vlaneseq
      %v900 = vshrl.u32 %v899, 7
      %v901 = vsub.s32 2, %v900
      %v902 = vrot.slane %v867, %v901
      %v903 = vlaneseq
      %v904 = vshrl.u32 %v903, 7
      %v905 = vsub.s32 2, %v904
      %v906 = vrot.slane %v871, %v905
      %v907 = vlaneseq
      %v908 = vshrl.u32 %v907, 7
      %v909 = vsub.s32 2, %v908
      %v910 = vrot.slane %v875, %v909
      %v911 = vlaneseq
      %v912 = vshrl.u32 %v911, 7
      %v913 = vsub.s32 2, %v912
      %v914 = vrot.slane %v879, %v913
      %v915 = vlaneseq
      %v916 = vshrl.u32 %v915, 7
      %v917 = vsub.s32 2, %v916
      %v918 = vrot.slane %v883, %v917
      %v919 = vlaneseq
      %v920 = vshrl.u32 %v919, 7
      %v921 = vsub.s32 2, %v920
      %v922 = vrot.slane %v887, %v921
      %v923 = vmul.f32 %v898, %v832
      %v924 = vmul.f32 %v902, %v833
      %v925 = vmul.f32 %v906, %v834
      %v926 = vmul.f32 %v910, %v835
      %v927 = vmul.f32 %v914, %v836
      %v928 = vmul.f32 %v918, %v837
      %v929 = vmul.f32 %v922, %v838
      %v930 = vmul.f32 %v898, %v839
      %v931 = vmul.f32 %v902, %v840
      %v932 = vmul.f32 %v906, %v841
      %v933 = vmul.f32 %v910, %v842
      %v934 = vmul.f32 %v914, %v843
      %v935 = vmul.f32 %v918, %v844
      %v936 = vmul.f32 %v922, %v845
      %v937 = vmul.f32 %v898, %v846
      %v938 = vmul.f32 %v902, %v847
      %v939 = vmul.f32 %v906, %v848
      %v940 = vmul.f32 %v910, %v849
      %v941 = vmul.f32 %v914, %v850
      %v942 = vmul.f32 %v918, %v851
      %v943 = vmul.f32 %v922, %v852
      %v944 = vmul.f32 %v898, %v853
      %v945 = vmul.f32 %v902, %v854
      %v946 = vmul.f32 %v906, %v855
      %v947 = vmul.f32 %v910, %v856
      %v948 = vmul.f32 %v914, %v857
      %v949 = vmul.f32 %v918, %v858
      %v950 = vmul.f32 %v922, %v859
      %v951 = vlaneseq
      %v952 = vshrl.u32 %v951, 7
      %v953 = vsub.s32 3, %v952
      %v954 = vrot.slane %v213, %v953
      %v955 = vlaneseq
      %v956 = vshrl.u32 %v955, 7
      %v957 = vsub.s32 7, %v956
      %v958 = vrot.slane %v213, %v957
      %v959 = vlaneseq
      %v960 = vshrl.u32 %v959, 7
      %v961 = vsub.s32 3, %v960
      %v962 = vrot.slane %v214, %v961
      %v963 = vlaneseq
      %v964 = vshrl.u32 %v963, 7
      %v965 = vsub.s32 7, %v964
      %v966 = vrot.slane %v214, %v965
      %v967 = vlaneseq
      %v968 = vshrl.u32 %v967, 7
      %v969 = vsub.s32 3, %v968
      %v970 = vrot.slane %v215, %v969
      %v971 = vlaneseq
      %v972 = vshrl.u32 %v971, 7
      %v973 = vsub.s32 7, %v972
      %v974 = vrot.slane %v215, %v973
      %v975 = vlaneseq
      %v976 = vshrl.u32 %v975, 7
      %v977 = vsub.s32 3, %v976
      %v978 = vrot.slane %v216, %v977
      %v979 = vlaneseq
      %v980 = vshrl.u32 %v979, 7
      %v981 = vsub.s32 3, %v980
      %v982 = vrot.slane %v954, %v981
      %v983 = vlaneseq
      %v984 = vshrl.u32 %v983, 7
      %v985 = vsub.s32 3, %v984
      %v986 = vrot.slane %v958, %v985
      %v987 = vlaneseq
      %v988 = vshrl.u32 %v987, 7
      %v989 = vsub.s32 3, %v988
      %v990 = vrot.slane %v962, %v989
      %v991 = vlaneseq
      %v992 = vshrl.u32 %v991, 7
      %v993 = vsub.s32 3, %v992
      %v994 = vrot.slane %v966, %v993
      %v995 = vlaneseq
      %v996 = vshrl.u32 %v995, 7
      %v997 = vsub.s32 3, %v996
      %v998 = vrot.slane %v970, %v997
      %v999 = vlaneseq
      %v1000 = vshrl.u32 %v999, 7
      %v1001 = vsub.s32 3, %v1000
      %v1002 = vrot.slane %v974, %v1001
      %v1003 = vlaneseq
      %v1004 = vshrl.u32 %v1003, 7
      %v1005 = vsub.s32 3, %v1004
      %v1006 = vrot.slane %v978, %v1005
      %vm1007 = vcmp.eq.s32.totalorder %v222, %v982
      %vm1008 = vcmp.eq.s32.totalorder %v222, %v986
      %vm1009 = vcmp.eq.s32.totalorder %v222, %v990
      %vm1010 = vcmp.eq.s32.totalorder %v222, %v994
      %vm1011 = vcmp.eq.s32.totalorder %v222, %v998
      %vm1012 = vcmp.eq.s32.totalorder %v222, %v1002
      %vm1013 = vcmp.eq.s32.totalorder %v222, %v1006
      %vm1014 = vcmp.eq.s32.totalorder %v223, %v982
      %vm1015 = vcmp.eq.s32.totalorder %v223, %v986
      %vm1016 = vcmp.eq.s32.totalorder %v223, %v990
      %vm1017 = vcmp.eq.s32.totalorder %v223, %v994
      %vm1018 = vcmp.eq.s32.totalorder %v223, %v998
      %vm1019 = vcmp.eq.s32.totalorder %v223, %v1002
      %vm1020 = vcmp.eq.s32.totalorder %v223, %v1006
      %vm1021 = vcmp.eq.s32.totalorder %v224, %v982
      %vm1022 = vcmp.eq.s32.totalorder %v224, %v986
      %vm1023 = vcmp.eq.s32.totalorder %v224, %v990
      %vm1024 = vcmp.eq.s32.totalorder %v224, %v994
      %vm1025 = vcmp.eq.s32.totalorder %v224, %v998
      %vm1026 = vcmp.eq.s32.totalorder %v224, %v1002
      %vm1027 = vcmp.eq.s32.totalorder %v224, %v1006
      %vm1028 = vcmp.eq.s32.totalorder %v225, %v982
      %vm1029 = vcmp.eq.s32.totalorder %v225, %v986
      %vm1030 = vcmp.eq.s32.totalorder %v225, %v990
      %vm1031 = vcmp.eq.s32.totalorder %v225, %v994
      %vm1032 = vcmp.eq.s32.totalorder %v225, %v998
      %vm1033 = vcmp.eq.s32.totalorder %v225, %v1002
      %vm1034 = vcmp.eq.s32.totalorder %v225, %v1006
      %v1035 = vsel %vm1007, 1, 0
      %v1036 = vsel %vm1008, 1, 0
      %v1037 = vsel %vm1009, 1, 0
      %v1038 = vsel %vm1010, 1, 0
      %v1039 = vsel %vm1011, 1, 0
      %v1040 = vsel %vm1012, 1, 0
      %v1041 = vsel %vm1013, 1, 0
      %v1042 = vsel %vm1014, 1, 0
      %v1043 = vsel %vm1015, 1, 0
      %v1044 = vsel %vm1016, 1, 0
      %v1045 = vsel %vm1017, 1, 0
      %v1046 = vsel %vm1018, 1, 0
      %v1047 = vsel %vm1019, 1, 0
      %v1048 = vsel %vm1020, 1, 0
      %v1049 = vsel %vm1021, 1, 0
      %v1050 = vsel %vm1022, 1, 0
      %v1051 = vsel %vm1023, 1, 0
      %v1052 = vsel %vm1024, 1, 0
      %v1053 = vsel %vm1025, 1, 0
      %v1054 = vsel %vm1026, 1, 0
      %v1055 = vsel %vm1027, 1, 0
      %v1056 = vsel %vm1028, 1, 0
      %v1057 = vsel %vm1029, 1, 0
      %v1058 = vsel %vm1030, 1, 0
      %v1059 = vsel %vm1031, 1, 0
      %v1060 = vsel %vm1032, 1, 0
      %v1061 = vsel %vm1033, 1, 0
      %v1062 = vsel %vm1034, 1, 0
      %v1063 = vcvt.s32.f32 %v1035
      %v1064 = vcvt.s32.f32 %v1036
      %v1065 = vcvt.s32.f32 %v1037
      %v1066 = vcvt.s32.f32 %v1038
      %v1067 = vcvt.s32.f32 %v1039
      %v1068 = vcvt.s32.f32 %v1040
      %v1069 = vcvt.s32.f32 %v1041
      %v1070 = vcvt.s32.f32 %v1042
      %v1071 = vcvt.s32.f32 %v1043
      %v1072 = vcvt.s32.f32 %v1044
      %v1073 = vcvt.s32.f32 %v1045
      %v1074 = vcvt.s32.f32 %v1046
      %v1075 = vcvt.s32.f32 %v1047
      %v1076 = vcvt.s32.f32 %v1048
      %v1077 = vcvt.s32.f32 %v1049
      %v1078 = vcvt.s32.f32 %v1050
      %v1079 = vcvt.s32.f32 %v1051
      %v1080 = vcvt.s32.f32 %v1052
      %v1081 = vcvt.s32.f32 %v1053
      %v1082 = vcvt.s32.f32 %v1054
      %v1083 = vcvt.s32.f32 %v1055
      %v1084 = vcvt.s32.f32 %v1056
      %v1085 = vcvt.s32.f32 %v1057
      %v1086 = vcvt.s32.f32 %v1058
      %v1087 = vcvt.s32.f32 %v1059
      %v1088 = vcvt.s32.f32 %v1060
      %v1089 = vcvt.s32.f32 %v1061
      %v1090 = vcvt.s32.f32 %v1062
      %v1091 = vlaneseq
      %v1092 = vshrl.u32 %v1091, 7
      %v1093 = vsub.s32 3, %v1092
      %v1094 = vrot.slane %v217, %v1093
      %v1095 = vlaneseq
      %v1096 = vshrl.u32 %v1095, 7
      %v1097 = vsub.s32 7, %v1096
      %v1098 = vrot.slane %v217, %v1097
      %v1099 = vlaneseq
      %v1100 = vshrl.u32 %v1099, 7
      %v1101 = vsub.s32 3, %v1100
      %v1102 = vrot.slane %v218, %v1101
      %v1103 = vlaneseq
      %v1104 = vshrl.u32 %v1103, 7
      %v1105 = vsub.s32 7, %v1104
      %v1106 = vrot.slane %v218, %v1105
      %v1107 = vlaneseq
      %v1108 = vshrl.u32 %v1107, 7
      %v1109 = vsub.s32 3, %v1108
      %v1110 = vrot.slane %v219, %v1109
      %v1111 = vlaneseq
      %v1112 = vshrl.u32 %v1111, 7
      %v1113 = vsub.s32 7, %v1112
      %v1114 = vrot.slane %v219, %v1113
      %v1115 = vlaneseq
      %v1116 = vshrl.u32 %v1115, 7
      %v1117 = vsub.s32 3, %v1116
      %v1118 = vrot.slane %v220, %v1117
      %v1126 = vlaneseq
      %v1127 = vshrl.u32 %v1126, 7
      %v1128 = vsub.s32 3, %v1127
      %v1129 = vrot.slane %v1094, %v1128
      %v1130 = vlaneseq
      %v1131 = vshrl.u32 %v1130, 7
      %v1132 = vsub.s32 3, %v1131
      %v1133 = vrot.slane %v1098, %v1132
      %v1134 = vlaneseq
      %v1135 = vshrl.u32 %v1134, 7
      %v1136 = vsub.s32 3, %v1135
      %v1137 = vrot.slane %v1102, %v1136
      %v1138 = vlaneseq
      %v1139 = vshrl.u32 %v1138, 7
      %v1140 = vsub.s32 3, %v1139
      %v1141 = vrot.slane %v1106, %v1140
      %v1142 = vlaneseq
      %v1143 = vshrl.u32 %v1142, 7
      %v1144 = vsub.s32 3, %v1143
      %v1145 = vrot.slane %v1110, %v1144
      %v1146 = vlaneseq
      %v1147 = vshrl.u32 %v1146, 7
      %v1148 = vsub.s32 3, %v1147
      %v1149 = vrot.slane %v1114, %v1148
      %v1150 = vlaneseq
      %v1151 = vshrl.u32 %v1150, 7
      %v1152 = vsub.s32 3, %v1151
      %v1153 = vrot.slane %v1118, %v1152
      %v1154 = vmul.f32 %v1129, %v1063
      %v1155 = vmul.f32 %v1133, %v1064
      %v1156 = vmul.f32 %v1137, %v1065
      %v1157 = vmul.f32 %v1141, %v1066
      %v1158 = vmul.f32 %v1145, %v1067
      %v1159 = vmul.f32 %v1149, %v1068
      %v1160 = vmul.f32 %v1153, %v1069
      %v1161 = vmul.f32 %v1129, %v1070
      %v1162 = vmul.f32 %v1133, %v1071
      %v1163 = vmul.f32 %v1137, %v1072
      %v1164 = vmul.f32 %v1141, %v1073
      %v1165 = vmul.f32 %v1145, %v1074
      %v1166 = vmul.f32 %v1149, %v1075
      %v1167 = vmul.f32 %v1153, %v1076
      %v1168 = vmul.f32 %v1129, %v1077
      %v1169 = vmul.f32 %v1133, %v1078
      %v1170 = vmul.f32 %v1137, %v1079
      %v1171 = vmul.f32 %v1141, %v1080
      %v1172 = vmul.f32 %v1145, %v1081
      %v1173 = vmul.f32 %v1149, %v1082
      %v1174 = vmul.f32 %v1153, %v1083
      %v1175 = vmul.f32 %v1129, %v1084
      %v1176 = vmul.f32 %v1133, %v1085
      %v1177 = vmul.f32 %v1137, %v1086
      %v1178 = vmul.f32 %v1141, %v1087
      %v1179 = vmul.f32 %v1145, %v1088
      %v1180 = vmul.f32 %v1149, %v1089
      %v1181 = vmul.f32 %v1153, %v1090
      %v1182 = vadd.f32 %v923, %v1154
      %v1183 = vadd.f32 %v924, %v1155
      %v1184 = vadd.f32 %v925, %v1156
      %v1185 = vadd.f32 %v926, %v1157
      %v1186 = vadd.f32 %v927, %v1158
      %v1187 = vadd.f32 %v928, %v1159
      %v1188 = vadd.f32 %v929, %v1160
      %v1189 = vadd.f32 %v930, %v1161
      %v1190 = vadd.f32 %v931, %v1162
      %v1191 = vadd.f32 %v932, %v1163
      %v1192 = vadd.f32 %v933, %v1164
      %v1193 = vadd.f32 %v934, %v1165
      %v1194 = vadd.f32 %v935, %v1166
      %v1195 = vadd.f32 %v936, %v1167
      %v1196 = vadd.f32 %v937, %v1168
      %v1197 = vadd.f32 %v938, %v1169
      %v1198 = vadd.f32 %v939, %v1170
      %v1199 = vadd.f32 %v940, %v1171
      %v1200 = vadd.f32 %v941, %v1172
      %v1201 = vadd.f32 %v942, %v1173
      %v1202 = vadd.f32 %v943, %v1174
      %v1203 = vadd.f32 %v944, %v1175
      %v1204 = vadd.f32 %v945, %v1176
      %v1205 = vadd.f32 %v946, %v1177
      %v1206 = vadd.f32 %v947, %v1178
      %v1207 = vadd.f32 %v948, %v1179
      %v1208 = vadd.f32 %v949, %v1180
      %v1209 = vadd.f32 %v950, %v1181
      %vm1210 = vcmask 228352
      %v1212 = vsel %vm1210, %v209, 0
      %v1215 = vsel %vm1210, %v210, 0
      %v1218 = vsel %vm1210, %v211, 0
      %v1221 = vsel %vm1210, %v212, 0
      %vm1223 = vcmask 1043456
      %v1225 = vsel %vm1223, %v713, 0
      %v1228 = vsel %vm1223, %v714, 0
      %v1231 = vsel %vm1223, %v715, 0
      %v1234 = vsel %vm1223, %v716, 0
      %v1237 = vsel %vm1223, %v717, 0
      %v1240 = vsel %vm1223, %v718, 0
      %v1243 = vsel %vm1223, %v719, 0
      %1245 = vmatprep.subr.mxu0 %v693
      %1246 = vmatpush1.msra.mxu0 %v692
      %1247 = vmatprep.subr.mxu0 %v700
      %1248 = vmatpush1.msra.mxu0 %v699
      %1249 = vmatprep.subr.mxu0 %v707
      %1250 = vmatpush1.msra.mxu0 %v706
      %1251 = vmatprep.subr.mxu0 %v1228
      %1252 = vmatpush1.msra.mxu0 %v1225
      %1253 = vmatprep.subr.mxu0 0.0
      %1254 = vmatpush1.msra.mxu0 0.0
      %1255 = vmatprep.subr.mxu0 0.0
      %1256 = vmatpush1.msra.mxu0 0.0
      %1257 = vmatprep.subr.mxu0 0.0
      %1258 = vmatpush1.msra.mxu0 0.0
      %1259 = vmatprep.subr.mxu0 0.0
      %1260 = vmatpush1.msra.mxu0 0.0
      %1261 = vmatprep.subr.mxu0 0.0
      %1262 = vmatpush1.msra.mxu0 0.0
      %1263 = vmatprep.subr.mxu0 0.0
      %1264 = vmatpush1.msra.mxu0 0.0
      %1265 = vmatprep.subr.mxu0 0.0
      %1266 = vmatpush1.msra.mxu0 0.0
      %1267 = vmatprep.subr.mxu0 0.0
      %1268 = vmatpush1.msra.mxu0 0.0
      %1269 = vmatprep.subr.mxu0 0.0
      %1270 = vmatpush1.msra.mxu0 0.0
      %1271 = vmatprep.subr.mxu0 0.0
      %1272 = vmatpush1.msra.mxu0 0.0
      %1273 = vmatprep.subr.mxu0 0.0
      %1274 = vmatpush1.msra.mxu0 0.0
      %1275 = vmatprep.subr.mxu0 0.0
      %1276 = vmatpush1.msra.mxu0 0.0
      %1277 = vmatprep.subr.mxu0 0.0
      %1278 = vmatpush1.msra.mxu0 0.0
      %1279 = vmatprep.subr.mxu0 0.0
      %1280 = vmatpush1.msra.mxu0 0.0
      %1281 = vmatprep.subr.mxu0 0.0
      %1282 = vmatpush1.msra.mxu0 0.0
      %1283 = vmatprep.subr.mxu0 0.0
      %1284 = vmatpush1.msra.mxu0 0.0
      %1285 = vmatprep.subr.mxu0 0.0
      %1286 = vmatpush1.msra.mxu0 0.0
      %1287 = vmatprep.subr.mxu0 0.0
      %1288 = vmatpush1.msra.mxu0 0.0
      %1289 = vmatprep.subr.mxu0 0.0
      %1290 = vmatpush1.msra.mxu0 0.0
      %1291 = vmatprep.subr.mxu0 0.0
      %1292 = vmatpush1.msra.mxu0 0.0
      %1293 = vmatprep.subr.mxu0 0.0
      %1294 = vmatpush1.msra.mxu0 0.0
      %1295 = vmatprep.subr.mxu0 0.0
      %1296 = vmatpush1.msra.mxu0 0.0
      %1297 = vmatprep.subr.mxu0 0.0
      %1298 = vmatpush1.msra.mxu0 0.0
      %1299 = vmatprep.subr.mxu0 0.0
      %1300 = vmatpush1.msra.mxu0 0.0
      %1301 = vmatprep.subr.mxu0 0.0
      %1302 = vmatpush1.msra.mxu0 0.0
      %1303 = vmatprep.subr.mxu0 0.0
      %1304 = vmatpush1.msra.mxu0 0.0
      %1305 = vmatprep.subr.mxu0 0.0
      %1306 = vmatpush1.msra.mxu0 0.0
      %1307 = vmatprep.subr.mxu0 0.0
      %1308 = vmatpush1.msra.mxu0 0.0
      %1309 = vmatprep.mubr.f32.mxu0 0.0
      %1310 = vmatmul.mubr.f32.gmra.mrb[0].mxu0 %v1212
      %v1311 = vpop.f32.mrb[0].mxu0
      %v1312 = vadd.f32 0.0, %v1311
      %v1313 = vpop.f32.mrb[0].mxu0
      %v1314 = vadd.f32 0.0, %v1313
      %1315 = vmatprep.mubr.f32.mxu0 0.0
      %1316 = vmatmul.mubr.f32.gmra.mrb[0].mxu0 %v1215
      %v1317 = vpop.f32.mrb[0].mxu0
      %v1318 = vadd.f32 0.0, %v1317
      %v1319 = vpop.f32.mrb[0].mxu0
      %v1320 = vadd.f32 0.0, %v1319
      %1321 = vmatprep.mubr.f32.mxu0 0.0
      %1322 = vmatmul.mubr.f32.gmra.mrb[0].mxu0 %v1218
      %v1323 = vpop.f32.mrb[0].mxu0
      %v1324 = vadd.f32 0.0, %v1323
      %v1325 = vpop.f32.mrb[0].mxu0
      %v1326 = vadd.f32 0.0, %v1325
      %1327 = vmatprep.mubr.f32.mxu0 0.0
      %1328 = vmatmul.mubr.f32.gmra.mrb[0].mxu0 %v1221
      %v1329 = vpop.f32.mrb[0].mxu0
      %v1330 = vadd.f32 0.0, %v1329
      %v1331 = vpop.f32.mrb[0].mxu0
      %v1332 = vadd.f32 0.0, %v1331
      %1333 = vdwg.mxu0
      %1334 = vmatprep.subr.mxu0 %v695
      %1335 = vmatpush1.msra.mxu0 %v694
      %1336 = vmatprep.subr.mxu0 %v702
      %1337 = vmatpush1.msra.mxu0 %v701
      %1338 = vmatprep.subr.mxu0 %v709
      %1339 = vmatpush1.msra.mxu0 %v708
      %1340 = vmatprep.subr.mxu0 %v1234
      %1341 = vmatpush1.msra.mxu0 %v1231
      %1342 = vmatprep.subr.mxu0 0.0
      %1343 = vmatpush1.msra.mxu0 0.0
      %1344 = vmatprep.subr.mxu0 0.0
      %1345 = vmatpush1.msra.mxu0 0.0
      %1346 = vmatprep.subr.mxu0 0.0
      %1347 = vmatpush1.msra.mxu0 0.0
      %1348 = vmatprep.subr.mxu0 0.0
      %1349 = vmatpush1.msra.mxu0 0.0
      %1350 = vmatprep.subr.mxu0 0.0
      %1351 = vmatpush1.msra.mxu0 0.0
      %1352 = vmatprep.subr.mxu0 0.0
      %1353 = vmatpush1.msra.mxu0 0.0
      %1354 = vmatprep.subr.mxu0 0.0
      %1355 = vmatpush1.msra.mxu0 0.0
      %1356 = vmatprep.subr.mxu0 0.0
      %1357 = vmatpush1.msra.mxu0 0.0
      %1358 = vmatprep.subr.mxu0 0.0
      %1359 = vmatpush1.msra.mxu0 0.0
      %1360 = vmatprep.subr.mxu0 0.0
      %1361 = vmatpush1.msra.mxu0 0.0
      %1362 = vmatprep.subr.mxu0 0.0
      %1363 = vmatpush1.msra.mxu0 0.0
      %1364 = vmatprep.subr.mxu0 0.0
      %1365 = vmatpush1.msra.mxu0 0.0
      %1366 = vmatprep.subr.mxu0 0.0
      %1367 = vmatpush1.msra.mxu0 0.0
      %1368 = vmatprep.subr.mxu0 0.0
      %1369 = vmatpush1.msra.mxu0 0.0
      %1370 = vmatprep.subr.mxu0 0.0
      %1371 = vmatpush1.msra.mxu0 0.0
      %1372 = vmatprep.subr.mxu0 0.0
      %1373 = vmatpush1.msra.mxu0 0.0
      %1374 = vmatprep.subr.mxu0 0.0
      %1375 = vmatpush1.msra.mxu0 0.0
      %1376 = vmatprep.subr.mxu0 0.0
      %1377 = vmatpush1.msra.mxu0 0.0
      %1378 = vmatprep.subr.mxu0 0.0
      %1379 = vmatpush1.msra.mxu0 0.0
      %1380 = vmatprep.subr.mxu0 0.0
      %1381 = vmatpush1.msra.mxu0 0.0
      %1382 = vmatprep.subr.mxu0 0.0
      %1383 = vmatpush1.msra.mxu0 0.0
      %1384 = vmatprep.subr.mxu0 0.0
      %1385 = vmatpush1.msra.mxu0 0.0
      %1386 = vmatprep.subr.mxu0 0.0
      %1387 = vmatpush1.msra.mxu0 0.0
      %1388 = vmatprep.subr.mxu0 0.0
      %1389 = vmatpush1.msra.mxu0 0.0
      %1390 = vmatprep.subr.mxu0 0.0
      %1391 = vmatpush1.msra.mxu0 0.0
      %1392 = vmatprep.subr.mxu0 0.0
      %1393 = vmatpush1.msra.mxu0 0.0
      %1394 = vmatprep.subr.mxu0 0.0
      %1395 = vmatpush1.msra.mxu0 0.0
      %1396 = vmatprep.subr.mxu0 0.0
      %1397 = vmatpush1.msra.mxu0 0.0
      %1398 = vmatprep.mubr.f32.mxu0 0.0
      %1399 = vmatmul.mubr.f32.gmra.mrb[0].mxu0 %v1212
      %v1400 = vpop.f32.mrb[0].mxu0
      %v1401 = vadd.f32 0.0, %v1400
      %v1402 = vpop.f32.mrb[0].mxu0
      %v1403 = vadd.f32 0.0, %v1402
      %1404 = vmatprep.mubr.f32.mxu0 0.0
      %1405 = vmatmul.mubr.f32.gmra.mrb[0].mxu0 %v1215
      %v1406 = vpop.f32.mrb[0].mxu0
      %v1407 = vadd.f32 0.0, %v1406
      %v1408 = vpop.f32.mrb[0].mxu0
      %v1409 = vadd.f32 0.0, %v1408
      %1410 = vmatprep.mubr.f32.mxu0 0.0
      %1411 = vmatmul.mubr.f32.gmra.mrb[0].mxu0 %v1218
      %v1412 = vpop.f32.mrb[0].mxu0
      %v1413 = vadd.f32 0.0, %v1412
      %v1414 = vpop.f32.mrb[0].mxu0
      %v1415 = vadd.f32 0.0, %v1414
      %1416 = vmatprep.mubr.f32.mxu0 0.0
      %1417 = vmatmul.mubr.f32.gmra.mrb[0].mxu0 %v1221
      %v1418 = vpop.f32.mrb[0].mxu0
      %v1419 = vadd.f32 0.0, %v1418
      %v1420 = vpop.f32.mrb[0].mxu0
      %v1421 = vadd.f32 0.0, %v1420
      %1422 = vdwg.mxu0
      %1423 = vmatprep.subr.mxu0 %v697
      %1424 = vmatpush1.msra.mxu0 %v696
      %1425 = vmatprep.subr.mxu0 %v704
      %1426 = vmatpush1.msra.mxu0 %v703
      %1427 = vmatprep.subr.mxu0 %v711
      %1428 = vmatpush1.msra.mxu0 %v710
      %1429 = vmatprep.subr.mxu0 %v1240
      %1430 = vmatpush1.msra.mxu0 %v1237
      %1431 = vmatprep.subr.mxu0 0.0
      %1432 = vmatpush1.msra.mxu0 0.0
      %1433 = vmatprep.subr.mxu0 0.0
      %1434 = vmatpush1.msra.mxu0 0.0
      %1435 = vmatprep.subr.mxu0 0.0
      %1436 = vmatpush1.msra.mxu0 0.0
      %1437 = vmatprep.subr.mxu0 0.0
      %1438 = vmatpush1.msra.mxu0 0.0
      %1439 = vmatprep.subr.mxu0 0.0
      %1440 = vmatpush1.msra.mxu0 0.0
      %1441 = vmatprep.subr.mxu0 0.0
      %1442 = vmatpush1.msra.mxu0 0.0
      %1443 = vmatprep.subr.mxu0 0.0
      %1444 = vmatpush1.msra.mxu0 0.0
      %1445 = vmatprep.subr.mxu0 0.0
      %1446 = vmatpush1.msra.mxu0 0.0
      %1447 = vmatprep.subr.mxu0 0.0
      %1448 = vmatpush1.msra.mxu0 0.0
      %1449 = vmatprep.subr.mxu0 0.0
      %1450 = vmatpush1.msra.mxu0 0.0
      %1451 = vmatprep.subr.mxu0 0.0
      %1452 = vmatpush1.msra.mxu0 0.0
      %1453 = vmatprep.subr.mxu0 0.0
      %1454 = vmatpush1.msra.mxu0 0.0
      %1455 = vmatprep.subr.mxu0 0.0
      %1456 = vmatpush1.msra.mxu0 0.0
      %1457 = vmatprep.subr.mxu0 0.0
      %1458 = vmatpush1.msra.mxu0 0.0
      %1459 = vmatprep.subr.mxu0 0.0
      %1460 = vmatpush1.msra.mxu0 0.0
      %1461 = vmatprep.subr.mxu0 0.0
      %1462 = vmatpush1.msra.mxu0 0.0
      %1463 = vmatprep.subr.mxu0 0.0
      %1464 = vmatpush1.msra.mxu0 0.0
      %1465 = vmatprep.subr.mxu0 0.0
      %1466 = vmatpush1.msra.mxu0 0.0
      %1467 = vmatprep.subr.mxu0 0.0
      %1468 = vmatpush1.msra.mxu0 0.0
      %1469 = vmatprep.subr.mxu0 0.0
      %1470 = vmatpush1.msra.mxu0 0.0
      %1471 = vmatprep.subr.mxu0 0.0
      %1472 = vmatpush1.msra.mxu0 0.0
      %1473 = vmatprep.subr.mxu0 0.0
      %1474 = vmatpush1.msra.mxu0 0.0
      %1475 = vmatprep.subr.mxu0 0.0
      %1476 = vmatpush1.msra.mxu0 0.0
      %1477 = vmatprep.subr.mxu0 0.0
      %1478 = vmatpush1.msra.mxu0 0.0
      %1479 = vmatprep.subr.mxu0 0.0
      %1480 = vmatpush1.msra.mxu0 0.0
      %1481 = vmatprep.subr.mxu0 0.0
      %1482 = vmatpush1.msra.mxu0 0.0
      %1483 = vmatprep.subr.mxu0 0.0
      %1484 = vmatpush1.msra.mxu0 0.0
      %1485 = vmatprep.subr.mxu0 0.0
      %1486 = vmatpush1.msra.mxu0 0.0
      %1487 = vmatprep.mubr.f32.mxu0 0.0
      %1488 = vmatmul.mubr.f32.gmra.mrb[0].mxu0 %v1212
      %v1489 = vpop.f32.mrb[0].mxu0
      %v1490 = vadd.f32 0.0, %v1489
      %v1491 = vpop.f32.mrb[0].mxu0
      %v1492 = vadd.f32 0.0, %v1491
      %1493 = vmatprep.mubr.f32.mxu0 0.0
      %1494 = vmatmul.mubr.f32.gmra.mrb[0].mxu0 %v1215
      %v1495 = vpop.f32.mrb[0].mxu0
      %v1496 = vadd.f32 0.0, %v1495
      %v1497 = vpop.f32.mrb[0].mxu0
      %v1498 = vadd.f32 0.0, %v1497
      %1499 = vmatprep.mubr.f32.mxu0 0.0
      %1500 = vmatmul.mubr.f32.gmra.mrb[0].mxu0 %v1218
      %v1501 = vpop.f32.mrb[0].mxu0
      %v1502 = vadd.f32 0.0, %v1501
      %v1503 = vpop.f32.mrb[0].mxu0
      %v1504 = vadd.f32 0.0, %v1503
      %1505 = vmatprep.mubr.f32.mxu0 0.0
      %1506 = vmatmul.mubr.f32.gmra.mrb[0].mxu0 %v1221
      %v1507 = vpop.f32.mrb[0].mxu0
      %v1508 = vadd.f32 0.0, %v1507
      %v1509 = vpop.f32.mrb[0].mxu0
      %v1510 = vadd.f32 0.0, %v1509
      %1511 = vdwg.mxu0
      %1512 = vmatprep.subr.mxu0 0.0
      %1513 = vmatpush1.msra.mxu0 %v698
      %1514 = vmatprep.subr.mxu0 0.0
      %1515 = vmatpush1.msra.mxu0 %v705
      %1516 = vmatprep.subr.mxu0 0.0
      %1517 = vmatpush1.msra.mxu0 %v712
      %1518 = vmatprep.subr.mxu0 0.0
      %1519 = vmatpush1.msra.mxu0 %v1243
      %1520 = vmatprep.subr.mxu0 0.0
      %1521 = vmatpush1.msra.mxu0 0.0
      %1522 = vmatprep.subr.mxu0 0.0
      %1523 = vmatpush1.msra.mxu0 0.0
      %1524 = vmatprep.subr.mxu0 0.0
      %1525 = vmatpush1.msra.mxu0 0.0
      %1526 = vmatprep.subr.mxu0 0.0
      %1527 = vmatpush1.msra.mxu0 0.0
      %1528 = vmatprep.subr.mxu0 0.0
      %1529 = vmatpush1.msra.mxu0 0.0
      %1530 = vmatprep.subr.mxu0 0.0
      %1531 = vmatpush1.msra.mxu0 0.0
      %1532 = vmatprep.subr.mxu0 0.0
      %1533 = vmatpush1.msra.mxu0 0.0
      %1534 = vmatprep.subr.mxu0 0.0
      %1535 = vmatpush1.msra.mxu0 0.0
      %1536 = vmatprep.subr.mxu0 0.0
      %1537 = vmatpush1.msra.mxu0 0.0
      %1538 = vmatprep.subr.mxu0 0.0
      %1539 = vmatpush1.msra.mxu0 0.0
      %1540 = vmatprep.subr.mxu0 0.0
      %1541 = vmatpush1.msra.mxu0 0.0
      %1542 = vmatprep.subr.mxu0 0.0
      %1543 = vmatpush1.msra.mxu0 0.0
      %1544 = vmatprep.subr.mxu0 0.0
      %1545 = vmatpush1.msra.mxu0 0.0
      %1546 = vmatprep.subr.mxu0 0.0
      %1547 = vmatpush1.msra.mxu0 0.0
      %1548 = vmatprep.subr.mxu0 0.0
      %1549 = vmatpush1.msra.mxu0 0.0
      %1550 = vmatprep.subr.mxu0 0.0
      %1551 = vmatpush1.msra.mxu0 0.0
      %1552 = vmatprep.subr.mxu0 0.0
      %1553 = vmatpush1.msra.mxu0 0.0
      %1554 = vmatprep.subr.mxu0 0.0
      %1555 = vmatpush1.msra.mxu0 0.0
      %1556 = vmatprep.subr.mxu0 0.0
      %1557 = vmatpush1.msra.mxu0 0.0
      %1558 = vmatprep.subr.mxu0 0.0
      %1559 = vmatpush1.msra.mxu0 0.0
      %1560 = vmatprep.subr.mxu0 0.0
      %1561 = vmatpush1.msra.mxu0 0.0
      %1562 = vmatprep.subr.mxu0 0.0
      %1563 = vmatpush1.msra.mxu0 0.0
      %1564 = vmatprep.subr.mxu0 0.0
      %1565 = vmatpush1.msra.mxu0 0.0
      %1566 = vmatprep.subr.mxu0 0.0
      %1567 = vmatpush1.msra.mxu0 0.0
      %1568 = vmatprep.subr.mxu0 0.0
      %1569 = vmatpush1.msra.mxu0 0.0
      %1570 = vmatprep.subr.mxu0 0.0
      %1571 = vmatpush1.msra.mxu0 0.0
      %1572 = vmatprep.subr.mxu0 0.0
      %1573 = vmatpush1.msra.mxu0 0.0
      %1574 = vmatprep.subr.mxu0 0.0
      %1575 = vmatpush1.msra.mxu0 0.0
      %1576 = vmatprep.mubr.f32.mxu0 0.0
      %1577 = vmatmul.mubr.f32.gmra.mrb[0].mxu0 %v1212
      %v1578 = vpop.f32.mrb[0].mxu0
      %v1579 = vadd.f32 0.0, %v1578
      %v1580 = vpop.f32.mrb[0].mxu0
      %1581 = vmatprep.mubr.f32.mxu0 0.0
      %1582 = vmatmul.mubr.f32.gmra.mrb[0].mxu0 %v1215
      %v1583 = vpop.f32.mrb[0].mxu0
      %v1584 = vadd.f32 0.0, %v1583
      %v1585 = vpop.f32.mrb[0].mxu0
      %1586 = vmatprep.mubr.f32.mxu0 0.0
      %1587 = vmatmul.mubr.f32.gmra.mrb[0].mxu0 %v1218
      %v1588 = vpop.f32.mrb[0].mxu0
      %v1589 = vadd.f32 0.0, %v1588
      %v1590 = vpop.f32.mrb[0].mxu0
      %1591 = vmatprep.mubr.f32.mxu0 0.0
      %1592 = vmatmul.mubr.f32.gmra.mrb[0].mxu0 %v1221
      %v1593 = vpop.f32.mrb[0].mxu0
      %v1594 = vadd.f32 0.0, %v1593
      %v1595 = vpop.f32.mrb[0].mxu0
      %1596 = vdwg.mxu0
      %v1597 = vmul.f32 %v1182, %v1312
      %v1598 = vmul.f32 %v1183, %v1314
      %v1599 = vmul.f32 %v1184, %v1401
      %v1600 = vmul.f32 %v1185, %v1403
      %v1601 = vmul.f32 %v1186, %v1490
      %v1602 = vmul.f32 %v1187, %v1492
      %v1603 = vmul.f32 %v1188, %v1579
      %v1604 = vmul.f32 %v1189, %v1318
      %v1605 = vmul.f32 %v1190, %v1320
      %v1606 = vmul.f32 %v1191, %v1407
      %v1607 = vmul.f32 %v1192, %v1409
      %v1608 = vmul.f32 %v1193, %v1496
      %v1609 = vmul.f32 %v1194, %v1498
      %v1610 = vmul.f32 %v1195, %v1584
      %v1611 = vmul.f32 %v1196, %v1324
      %v1612 = vmul.f32 %v1197, %v1326
      %v1613 = vmul.f32 %v1198, %v1413
      %v1614 = vmul.f32 %v1199, %v1415
      %v1615 = vmul.f32 %v1200, %v1502
      %v1616 = vmul.f32 %v1201, %v1504
      %v1617 = vmul.f32 %v1202, %v1589
      %v1618 = vmul.f32 %v1203, %v1330
      %v1619 = vmul.f32 %v1204, %v1332
      %v1620 = vmul.f32 %v1205, %v1419
      %v1621 = vmul.f32 %v1206, %v1421
      %v1622 = vmul.f32 %v1207, %v1508
      %v1623 = vmul.f32 %v1208, %v1510
      %v1624 = vmul.f32 %v1209, %v1594
      %v1625 = vadd.f32 %v1597, %v1604
      %v1626 = vadd.f32 %v1625, %v1611
      %v1627 = vsel %vm1223, %v1618, 0.0
      %v1628 = vadd.f32 %v1626, %v1627
      %v1629 = vrot.slane %v1628, 4
      %v1630 = vadd.f32 %v1628, %v1629
      %v1631 = vrot.slane %v1630, 2
      %v1632 = vadd.f32 %v1630, %v1631
      %v1633 = vrot.slane %v1632, 1
      %v1634 = vadd.f32 %v1632, %v1633
      %v1635 = vadd.f32 %v1598, %v1605
      %v1636 = vadd.f32 %v1635, %v1612
      %v1637 = vsel %vm1223, %v1619, 0.0
      %v1638 = vadd.f32 %v1636, %v1637
      %v1639 = vrot.slane %v1638, 4
      %v1640 = vadd.f32 %v1638, %v1639
      %v1641 = vrot.slane %v1640, 2
      %v1642 = vadd.f32 %v1640, %v1641
      %v1643 = vrot.slane %v1642, 1
      %v1644 = vadd.f32 %v1642, %v1643
      %v1645 = vadd.f32 %v1599, %v1606
      %v1646 = vadd.f32 %v1645, %v1613
      %v1647 = vsel %vm1223, %v1620, 0.0
      %v1648 = vadd.f32 %v1646, %v1647
      %v1649 = vrot.slane %v1648, 4
      %v1650 = vadd.f32 %v1648, %v1649
      %v1651 = vrot.slane %v1650, 2
      %v1652 = vadd.f32 %v1650, %v1651
      %v1653 = vrot.slane %v1652, 1
      %v1654 = vadd.f32 %v1652, %v1653
      %v1655 = vadd.f32 %v1600, %v1607
      %v1656 = vadd.f32 %v1655, %v1614
      %v1657 = vsel %vm1223, %v1621, 0.0
      %v1658 = vadd.f32 %v1656, %v1657
      %v1659 = vrot.slane %v1658, 4
      %v1660 = vadd.f32 %v1658, %v1659
      %v1661 = vrot.slane %v1660, 2
      %v1662 = vadd.f32 %v1660, %v1661
      %v1663 = vrot.slane %v1662, 1
      %v1664 = vadd.f32 %v1662, %v1663
      %v1665 = vadd.f32 %v1601, %v1608
      %v1666 = vadd.f32 %v1665, %v1615
      %v1667 = vsel %vm1223, %v1622, 0.0
      %v1668 = vadd.f32 %v1666, %v1667
      %v1669 = vrot.slane %v1668, 4
      %v1670 = vadd.f32 %v1668, %v1669
      %v1671 = vrot.slane %v1670, 2
      %v1672 = vadd.f32 %v1670, %v1671
      %v1673 = vrot.slane %v1672, 1
      %v1674 = vadd.f32 %v1672, %v1673
      %v1675 = vadd.f32 %v1602, %v1609
      %v1676 = vadd.f32 %v1675, %v1616
      %v1677 = vsel %vm1223, %v1623, 0.0
      %v1678 = vadd.f32 %v1676, %v1677
      %v1679 = vrot.slane %v1678, 4
      %v1680 = vadd.f32 %v1678, %v1679
      %v1681 = vrot.slane %v1680, 2
      %v1682 = vadd.f32 %v1680, %v1681
      %v1683 = vrot.slane %v1682, 1
      %v1684 = vadd.f32 %v1682, %v1683
      %vm1685 = vcmask 130048
      %v1686 = vsel %vm1685, %v1603, 0.0
      %v1687 = vsel %vm1685, %v1610, 0.0
      %v1688 = vadd.f32 %v1686, %v1687
      %v1689 = vsel %vm1685, %v1617, 0.0
      %v1690 = vadd.f32 %v1688, %v1689
      %vm1691 = vcmask 125952
      %v1692 = vsel %vm1691, %v1624, 0.0
      %v1693 = vadd.f32 %v1690, %v1692
      %v1694 = vrot.slane %v1693, 4
      %v1695 = vadd.f32 %v1693, %v1694
      %v1696 = vrot.slane %v1695, 2
      %v1697 = vadd.f32 %v1695, %v1696
      %v1698 = vrot.slane %v1697, 1
      %v1699 = vadd.f32 %v1697, %v1698
      %v1707 = vcombine.low %v1634, %v1644
      %v1708 = vcombine.low %v1654, %v1664
      %v1709 = vcombine.low %v1674, %v1684
      %v1711 = vunpack.c.l.s4 1966171168
      %v1712 = vunpack.c.0.s8 %v1711
      %v1713 = vlaneseq
      %v1714 = vshrl.u32 %v1713, 7
      %v1715 = vsub.s32 %v1712, %v1714
      %v1716 = vrot.slane %v1707, %v1715
      %v1718 = vunpack.c.l.s4 1966171168
      %v1719 = vunpack.c.0.s8 %v1718
      %v1720 = vlaneseq
      %v1721 = vshrl.u32 %v1720, 7
      %v1722 = vsub.s32 %v1719, %v1721
      %v1723 = vrot.slane %v1708, %v1722
      %v1725 = vunpack.c.l.s4 1966171168
      %v1726 = vunpack.c.0.s8 %v1725
      %v1727 = vlaneseq
      %v1728 = vshrl.u32 %v1727, 7
      %v1729 = vsub.s32 %v1726, %v1728
      %v1730 = vrot.slane %v1709, %v1729
      %v1732 = vunpack.c.l.s4 1966171168
      %v1733 = vunpack.c.0.s8 %v1732
      %v1734 = vlaneseq
      %v1735 = vshrl.u32 %v1734, 7
      %v1736 = vsub.s32 %v1733, %v1735
      %v1737 = vrot.slane %v1699, %v1736
      %v1738 = vcombine.low %v1716, %v1723
      %v1739 = vcombine.low %v1730, %v1737
      %v1741 = vunpack.c.l.s4 1966171168
      %v1742 = vunpack.c.0.s8 %v1741
      %v1743 = vlaneseq
      %v1744 = vshrl.u32 %v1743, 7
      %v1745 = vsub.s32 %v1742, %v1744
      %v1746 = vrot.slane %v1738, %v1745
      %v1748 = vunpack.c.l.s4 1966171168
      %v1749 = vunpack.c.0.s8 %v1748
      %v1750 = vlaneseq
      %v1751 = vshrl.u32 %v1750, 7
      %v1752 = vsub.s32 %v1749, %v1751
      %v1753 = vrot.slane %v1739, %v1752
      %v1754 = vcombine.low %v1746, %v1753
      %v1756 = vlaneseq
      %vm1757 = vcmp.ge.s32.totalorder %v1756, 0
      %vm1758 = vcmp.lt.s32.totalorder %v1756, 784
      %vm1759 = vmand %vm1757, %vm1758
      %1760 = vst.msk [vmem:[%s208] sm:$0x7f] %vm1759, %v1754
      %p1761 = scmp.lt.s32.totalorder %s14, 1
      %s1762 = scalar_select %p1761, %s14, 1
      %s1763 = smul.addr %s1762, 7
      %s1764 = scalar_lea.vmem %s3, %s1763
      // Predicated region
      $region33: #{_lambda_.10} parent=31 // pred_check
        %p1765 = pneg %p110
      $region34: #{_lambda_.10} parent=31 // pred_check_branch
        %1767 = sbr.rel (%p1765) target = $region36
      $region35: #{_lambda_.10} parent=31 // pred_region
        _
      $region36: #{_lambda_.10} parent=31 // pred_fallthru
        _
    $region32: #{_lambda_.10} parent=5 // pred_fallthru
      _
    %p1768 = scmp.le.s32.totalorder 2, %s9
    // Predicated region
    $region37: #{_lambda_.10} parent=5 // pred_check
      %p1769 = pneg %p1768
    $region38: #{_lambda_.10} parent=5 // pred_check_branch
      %1771 = sbr.rel (%p1769) target = $region40
    $region39: #{_lambda_.10} parent=5 // pred_region
      %s1772 = ssub.s32 %s9, 2
      // Predicated region
      $region41: #{_lambda_.10} parent=39 // pred_check
        %p1773 = pneg %p116
      $region42: #{_lambda_.10} parent=39 // pred_check_branch
        %1775 = sbr.rel (%p1773) target = $region44
      $region43: #{_lambda_.10} parent=39 // pred_region
        %p1776 = scmp.lt.s32.totalorder %s15, 1
        %s1777 = scalar_select %p1776, %s15, 1
        %s1778 = smul.addr %s1777, 7
        %s1779 = scalar_lea.vmem %s3, %s1778
      $region44: #{_lambda_.10} parent=39 // pred_fallthru
        _
    $region40: #{_lambda_.10} parent=5 // pred_fallthru
      _
  $region6: #{_lambda_.10} parent=0 // loop_footer
    %s13 = sadd.s32 1, %s9
  $region7: #{_lambda_.10} parent=0 // loop_footer_branch
    %8 = sbr.rel target = $region3
  $region8: #{_lambda_.10} parent=0 // loop_exit
    _

// kernel: _lambda_.11
$region0: #{_lambda_.11}
  #allocation0 [shape = 'u32[]', space=smem, size = 0x4, offset = 0x4, fixed_abs, tag = 'smem constant byte address 0x4 - core index']
  #allocation1 [shape = 'u32[144,128]{1,0:T(1,128)}', space=vmem, size = 0x12000, scoped, tag = 'internal scratch']
  %s0 = inlined_call_operand.vmem [shape: bf16[288,25], index: 0, kind: input, shape index: {}]
  %s1 = inlined_call_operand.vmem [shape: bf16[288,25], index: 1, kind: input, shape index: {}]
  %s2 = inlined_call_operand.vmem [shape: bf16[288,25], index: 2, kind: input, shape index: {}]
  %s3 = inlined_call_operand.vmem [shape: bf16[288,25], index: 3, kind: input, shape index: {}]
  %s4 = inlined_call_operand.vmem [shape: bf16[25,128], index: 4, kind: input, shape index: {}]
  %s5 = inlined_call_operand.vmem [shape: f32[1,128], index: 5, kind: input, shape index: {}]
  %s6 = inlined_call_operand.vmem [shape: f32[288,128], index: 6, kind: output, shape index: {}]
  %s7 = sld [smem:[#allocation0]]
  $region57: #{_lambda_.11} parent=0
    _
  %s9 = ssub.s32 1, %s7
  %s10 = scalar_select 0, %s9, %s7
  loop: start=0, step=1, limit=5
  $region2: #{_lambda_.11} parent=0 // loop_pre_header
    _
  $region3: #{_lambda_.11} parent=0 // loop_header
    %s12 = sphi 0, %s16
    %p13 = scmp.ge.s32.totalorder %s12, 5
    %s22 = sphi 0, %s24
    %s25 = sphi 0, %s22
    %s26 = sphi 0, %s25
    %s42 = sphi 0, %s26
    %s48 = sphi 0, %s50
    %s51 = sphi 0, %s48
    %s52 = sphi 0, %s51
    %s68 = sphi 0, %s52
    %s74 = sphi 0, %s76
    %s77 = sphi 0, %s74
    %s78 = sphi 0, %s77
    %s94 = sphi 0, %s78
    %s100 = sphi 0, %s102
    %s103 = sphi 0, %s100
    %s104 = sphi 0, %s103
    %s120 = sphi 0, %s104
    %s124 = sphi 0, %s124
    %s126 = sphi 0, %s124
    %s127 = sphi 0, %s126
    %s141 = sphi 0, %s127
    %s145 = sphi 0, %s145
    %s147 = sphi 0, %s145
    %s148 = sphi 0, %s147
    %s162 = sphi 0, %s148
    %s168 = sphi 0, %s170
    %s171 = sphi 0, %s168
    %s172 = sphi 0, %s171
    %s188 = sphi 0, %s172
  $region4: #{_lambda_.11} parent=0 // loop_header_branch
    %15 = sbr.rel (%p13) target = $region8
  $region5: #{_lambda_.11} parent=0 // loop_body
    %s17 = ssub.s32 %s12, 1
    %s18 = ssub.s32 %s12, 2
    %s19 = sadd.s32 %s12, 1
    %s20 = ssub.s32 %s12, %s19
    %p21 = scmp.eq.s32.totalorder %s20, 0
    %s23 = sadd.s32 %s22, 1
    %s24 = scalar_select %p21, %s22, %s23
    %p27 = pneg %p21
    %p28 = scmp.eq.s32.totalorder %s12, 2
    %p29 = por %p27, %p28
    %p30 = scmp.ne.s32.totalorder %s22, %s25
    %p31 = scmp.eq.s32.totalorder %s12, 0
    %p32 = por %p30, %p31
    %p33 = scmp.ne.s32.totalorder %s22, %s25
    %p34 = scmp.eq.s32.totalorder %s17, 2
    %p35 = por %p33, %p34
    %p36 = scmp.ne.s32.totalorder %s25, %s26
    %p37 = scmp.eq.s32.totalorder %s17, 0
    %p38 = por %p36, %p37
    %p39 = scmp.ne.s32.totalorder %s25, %s26
    %p40 = scmp.eq.s32.totalorder %s18, 2
    %p41 = por %p39, %p40
    %p43 = scmp.ne.s32.totalorder %s26, %s42
    %p44 = scmp.eq.s32.totalorder %s18, 0
    %p45 = por %p43, %p44
    %s46 = ssub.s32 %s12, %s19
    %p47 = scmp.eq.s32.totalorder %s46, 0
    %s49 = sadd.s32 %s48, 1
    %s50 = scalar_select %p47, %s48, %s49
    %p53 = pneg %p47
    %p54 = scmp.eq.s32.totalorder %s12, 2
    %p55 = por %p53, %p54
    %p56 = scmp.ne.s32.totalorder %s48, %s51
    %p57 = scmp.eq.s32.totalorder %s12, 0
    %p58 = por %p56, %p57
    %p59 = scmp.ne.s32.totalorder %s48, %s51
    %p60 = scmp.eq.s32.totalorder %s17, 2
    %p61 = por %p59, %p60
    %p62 = scmp.ne.s32.totalorder %s51, %s52
    %p63 = scmp.eq.s32.totalorder %s17, 0
    %p64 = por %p62, %p63
    %p65 = scmp.ne.s32.totalorder %s51, %s52
    %p66 = scmp.eq.s32.totalorder %s18, 2
    %p67 = por %p65, %p66
    %p69 = scmp.ne.s32.totalorder %s52, %s68
    %p70 = scmp.eq.s32.totalorder %s18, 0
    %p71 = por %p69, %p70
    %s72 = ssub.s32 %s12, %s19
    %p73 = scmp.eq.s32.totalorder %s72, 0
    %s75 = sadd.s32 %s74, 1
    %s76 = scalar_select %p73, %s74, %s75
    %p79 = pneg %p73
    %p80 = scmp.eq.s32.totalorder %s12, 2
    %p81 = por %p79, %p80
    %p82 = scmp.ne.s32.totalorder %s74, %s77
    %p83 = scmp.eq.s32.totalorder %s12, 0
    %p84 = por %p82, %p83
    %p85 = scmp.ne.s32.totalorder %s74, %s77
    %p86 = scmp.eq.s32.totalorder %s17, 2
    %p87 = por %p85, %p86
    %p88 = scmp.ne.s32.totalorder %s77, %s78
    %p89 = scmp.eq.s32.totalorder %s17, 0
    %p90 = por %p88, %p89
    %p91 = scmp.ne.s32.totalorder %s77, %s78
    %p92 = scmp.eq.s32.totalorder %s18, 2
    %p93 = por %p91, %p92
    %p95 = scmp.ne.s32.totalorder %s78, %s94
    %p96 = scmp.eq.s32.totalorder %s18, 0
    %p97 = por %p95, %p96
    %s98 = ssub.s32 %s12, %s19
    %p99 = scmp.eq.s32.totalorder %s98, 0
    %s101 = sadd.s32 %s100, 1
    %s102 = scalar_select %p99, %s100, %s101
    %p105 = pneg %p99
    %p106 = scmp.eq.s32.totalorder %s12, 2
    %p107 = por %p105, %p106
    %p108 = scmp.ne.s32.totalorder %s100, %s103
    %p109 = scmp.eq.s32.totalorder %s12, 0
    %p110 = por %p108, %p109
    %p111 = scmp.ne.s32.totalorder %s100, %s103
    %p112 = scmp.eq.s32.totalorder %s17, 2
    %p113 = por %p111, %p112
    %p114 = scmp.ne.s32.totalorder %s103, %s104
    %p115 = scmp.eq.s32.totalorder %s17, 0
    %p116 = por %p114, %p115
    %p117 = scmp.ne.s32.totalorder %s103, %s104
    %p118 = scmp.eq.s32.totalorder %s18, 2
    %p119 = por %p117, %p118
    %p121 = scmp.ne.s32.totalorder %s104, %s120
    %p122 = scmp.eq.s32.totalorder %s18, 0
    %p123 = por %p121, %p122
    %s125 = sadd.s32 %s124, 1
    %p128 = scmp.eq.s32.totalorder %s12, 2
    %p129 = scmp.ne.s32.totalorder %s124, %s126
    %p130 = scmp.eq.s32.totalorder %s12, 0
    %p131 = por %p129, %p130
    %p132 = scmp.ne.s32.totalorder %s124, %s126
    %p133 = scmp.eq.s32.totalorder %s17, 2
    %p134 = por %p132, %p133
    %p135 = scmp.ne.s32.totalorder %s126, %s127
    %p136 = scmp.eq.s32.totalorder %s17, 0
    %p137 = por %p135, %p136
    %p138 = scmp.ne.s32.totalorder %s126, %s127
    %p139 = scmp.eq.s32.totalorder %s18, 2
    %p140 = por %p138, %p139
    %p142 = scmp.ne.s32.totalorder %s127, %s141
    %p143 = scmp.eq.s32.totalorder %s18, 0
    %p144 = por %p142, %p143
    %s146 = sadd.s32 %s145, 1
    %p149 = scmp.eq.s32.totalorder %s12, 2
    %p150 = scmp.ne.s32.totalorder %s145, %s147
    %p151 = scmp.eq.s32.totalorder %s12, 0
    %p152 = por %p150, %p151
    %p153 = scmp.ne.s32.totalorder %s145, %s147
    %p154 = scmp.eq.s32.totalorder %s17, 2
    %p155 = por %p153, %p154
    %p156 = scmp.ne.s32.totalorder %s147, %s148
    %p157 = scmp.eq.s32.totalorder %s17, 0
    %p158 = por %p156, %p157
    %p159 = scmp.ne.s32.totalorder %s147, %s148
    %p160 = scmp.eq.s32.totalorder %s18, 2
    %p161 = por %p159, %p160
    %p163 = scmp.ne.s32.totalorder %s148, %s162
    %p164 = scmp.eq.s32.totalorder %s18, 0
    %p165 = por %p163, %p164
    %s166 = ssub.s32 %s12, %s19
    %p167 = scmp.eq.s32.totalorder %s166, 0
    %s169 = sadd.s32 %s168, 1
    %s170 = scalar_select %p167, %s168, %s169
    %p173 = pneg %p167
    %p174 = scmp.eq.s32.totalorder %s12, 2
    %p175 = por %p173, %p174
    %p176 = scmp.ne.s32.totalorder %s168, %s171
    %p177 = scmp.eq.s32.totalorder %s12, 0
    %p178 = por %p176, %p177
    %p179 = scmp.ne.s32.totalorder %s168, %s171
    %p180 = scmp.eq.s32.totalorder %s17, 2
    %p181 = por %p179, %p180
    %p182 = scmp.ne.s32.totalorder %s171, %s172
    %p183 = scmp.eq.s32.totalorder %s17, 0
    %p184 = por %p182, %p183
    %p185 = scmp.ne.s32.totalorder %s171, %s172
    %p186 = scmp.eq.s32.totalorder %s18, 2
    %p187 = por %p185, %p186
    %p189 = scmp.ne.s32.totalorder %s172, %s188
    %p190 = scmp.eq.s32.totalorder %s18, 0
    %p191 = por %p189, %p190
    %p192 = scmp.le.s32.totalorder 1, %s12
    %p193 = scmp.lt.s32.totalorder %s12, 4
    %p194 = pnand %p192, %p193
    %p195 = pneg %p194
    // Predicated region
    $region9: #{_lambda_.11} parent=5 // pred_check
      _
    $region10: #{_lambda_.11} parent=5 // pred_check_branch
      %197 = sbr.rel (%p194) target = $region12
    $region11: #{_lambda_.11} parent=5 // pred_region
      %s198 = ssub.s32 %s12, 1
      // Predicated region
      $region13: #{_lambda_.11} parent=11 // pred_check
        %p199 = pneg %p137
      $region14: #{_lambda_.11} parent=11 // pred_check_branch
        %201 = sbr.rel (%p199) target = $region16
      $region15: #{_lambda_.11} parent=11 // pred_region
        _
      $region16: #{_lambda_.11} parent=11 // pred_fallthru
        _
      // Predicated region
      $region17: #{_lambda_.11} parent=11 // pred_check
        %p202 = pneg %p158
      $region18: #{_lambda_.11} parent=11 // pred_check_branch
        %204 = sbr.rel (%p202) target = $region20
      $region19: #{_lambda_.11} parent=11 // pred_region
        _
      $region20: #{_lambda_.11} parent=11 // pred_fallthru
        _
    $region12: #{_lambda_.11} parent=5 // pred_fallthru
      _
    %p205 = scmp.lt.s32.totalorder %s12, 3
    // Predicated region
    $region21: #{_lambda_.11} parent=5 // pred_check
      %p206 = pneg %p205
    $region22: #{_lambda_.11} parent=5 // pred_check_branch
      %208 = sbr.rel (%p206) target = $region24
    $region23: #{_lambda_.11} parent=5 // pred_region
      // Predicated region
      $region25: #{_lambda_.11} parent=23 // pred_check
        %p209 = pneg %p32
      $region26: #{_lambda_.11} parent=23 // pred_check_branch
        %211 = sbr.rel (%p209) target = $region28
      $region27: #{_lambda_.11} parent=23 // pred_region
        %s212 = smul.u32 12, %s12
        %p213 = scmp.lt.s32.totalorder %s212, 35
        %s214 = scalar_select %p213, %s212, 35
        %s215 = smul.addr %s214, 4
        %s216 = scalar_lea.vmem %s0, %s215
        %s217 = smul.u32 12, %s12
      $region28: #{_lambda_.11} parent=23 // pred_fallthru
        _
      // Predicated region
      $region29: #{_lambda_.11} parent=23 // pred_check
        %p218 = pneg %p58
      $region30: #{_lambda_.11} parent=23 // pred_check_branch
        %220 = sbr.rel (%p218) target = $region32
      $region31: #{_lambda_.11} parent=23 // pred_region
        %s221 = smul.u32 12, %s12
        %p222 = scmp.lt.s32.totalorder %s221, 35
        %s223 = scalar_select %p222, %s221, 35
        %s224 = smul.addr %s223, 4
        %s225 = scalar_lea.vmem %s1, %s224
        %s226 = smul.u32 12, %s12
      $region32: #{_lambda_.11} parent=23 // pred_fallthru
        _
      // Predicated region
      $region33: #{_lambda_.11} parent=23 // pred_check
        %p227 = pneg %p84
      $region34: #{_lambda_.11} parent=23 // pred_check_branch
        %229 = sbr.rel (%p227) target = $region36
      $region35: #{_lambda_.11} parent=23 // pred_region
        %s230 = smul.u32 12, %s12
        %p231 = scmp.lt.s32.totalorder %s230, 35
        %s232 = scalar_select %p231, %s230, 35
        %s233 = smul.addr %s232, 4
        %s234 = scalar_lea.vmem %s2, %s233
        %s235 = smul.u32 12, %s12
      $region36: #{_lambda_.11} parent=23 // pred_fallthru
        _
      // Predicated region
      $region37: #{_lambda_.11} parent=23 // pred_check
        %p236 = pneg %p110
      $region38: #{_lambda_.11} parent=23 // pred_check_branch
        %238 = sbr.rel (%p236) target = $region40
      $region39: #{_lambda_.11} parent=23 // pred_region
        %s239 = smul.u32 12, %s12
        %p240 = scmp.lt.s32.totalorder %s239, 35
        %s241 = scalar_select %p240, %s239, 35
        %s242 = smul.addr %s241, 4
        %s243 = scalar_lea.vmem %s3, %s242
        %s244 = smul.u32 12, %s12
      $region40: #{_lambda_.11} parent=23 // pred_fallthru
        _
    $region24: #{_lambda_.11} parent=5 // pred_fallthru
      _
    %p245 = scmp.le.s32.totalorder 1, %s12
    %p246 = scmp.lt.s32.totalorder %s12, 4
    %p247 = pnand %p245, %p246
    %p248 = pneg %p247
    // Predicated region
    $region41: #{_lambda_.11} parent=5 // pred_check
      _
    $region42: #{_lambda_.11} parent=5 // pred_check_branch
      %250 = sbr.rel (%p247) target = $region44
    $region43: #{_lambda_.11} parent=5 // pred_region
      %s251 = ssub.s32 %s12, 1
      %s252 = smul.u32 12, %s17
      %p253 = scmp.lt.s32.totalorder %s252, 35
      %s254 = scalar_select %p253, %s252, 35
      %s255 = smul.addr %s254, 4
      %s256 = scalar_lea.vmem %s0, %s255
      %p257 = pneg %p38
      %p258 = pneg %p35
      %s259 = smul.u32 12, %s17
      %p260 = scmp.lt.s32.totalorder %s259, 35
      %s261 = scalar_select %p260, %s259, 35
      %s262 = smul.addr %s261, 4
      %s263 = scalar_lea.vmem %s1, %s262
      %p264 = pneg %p64
      %p265 = pneg %p61
      %s266 = smul.u32 12, %s17
      %p267 = scmp.lt.s32.totalorder %s266, 35
      %s268 = scalar_select %p267, %s266, 35
      %s269 = smul.addr %s268, 4
      %s270 = scalar_lea.vmem %s2, %s269
      %p271 = pneg %p90
      %p272 = pneg %p87
      %s273 = smul.u32 12, %s17
      %p274 = scmp.lt.s32.totalorder %s273, 35
      %s275 = scalar_select %p274, %s273, 35
      %s276 = smul.addr %s275, 4
      %s277 = scalar_lea.vmem %s3, %s276
      %p278 = pneg %p116
      %p279 = pneg %p113
      %p280 = pneg %p137
      %p281 = pneg %p134
      %p282 = pneg %p158
      %p283 = pneg %p155
      %p284 = pneg %p184
      %p285 = pneg %p181
      %s286 = smul.u32 12, %s17
      %p287 = scmp.lt.s32.totalorder %s286, 35
      %s288 = scalar_select %p287, %s286, 35
      %s289 = smul.addr %s288, 8
      %s290 = scalar_lea.vmem %s6, %s289
      %s291 = smul.u32 12, %s17
      %p292 = scmp.lt.s32.totalorder %s291, 35
      %s293 = scalar_select %p292, %s291, 35
      %s294 = smul.addr %s293, 4
      %s295 = scalar_lea.vmem %s0, %s294
      %s296 = smul.u32 12, %s17
      %s297 = smul.u32 12, %s17
      %p298 = scmp.lt.s32.totalorder %s297, 35
      %s299 = scalar_select %p298, %s297, 35
      %s300 = smul.addr %s299, 4
      %s301 = scalar_lea.vmem %s1, %s300
      %s302 = smul.u32 12, %s17
      %s303 = smul.u32 12, %s17
      %p304 = scmp.lt.s32.totalorder %s303, 35
      %s305 = scalar_select %p304, %s303, 35
      %s306 = smul.addr %s305, 4
      %s307 = scalar_lea.vmem %s2, %s306
      %s308 = smul.u32 12, %s17
      %s309 = smul.u32 12, %s17
      %p310 = scmp.lt.s32.totalorder %s309, 35
      %s311 = scalar_select %p310, %s309, 35
      %s312 = smul.addr %s311, 4
      %s313 = scalar_lea.vmem %s3, %s312
      %s314 = smul.u32 12, %s17
      %s315 = smul.u32 12, %s17
      %p316 = scmp.lt.s32.totalorder %s315, 35
      %s317 = scalar_select %p316, %s315, 35
      %s318 = smul.addr %s317, 8
      %s319 = scalar_lea.vmem %s6, %s318
      %s320 = smul.u32 12, %s17
      %v322 = vld [vmem:[%s4] sm:$0xf]
      %v323 = vld [vmem:[%s4 + $0x4] sm:$0xf]
      %v324 = vld [vmem:[%s4 + $0x8] sm:$0xf]
      %v325 = vld [vmem:[%s4 + $0xc] sm:$0x1]
      %v326 = vld [vmem:[%s295] sm:$0xf]
      %v327 = vld [vmem:[%s295 + $0x4] sm:$0xf]
      %v328 = vld [vmem:[%s295 + $0x8] sm:$0xf]
      %v329 = vld [vmem:[%s295 + $0xc] sm:$0xf]
      %v330 = vld [vmem:[%s295 + $0x10] sm:$0xf]
      %v331 = vld [vmem:[%s295 + $0x14] sm:$0xf]
      %v332 = vld [vmem:[%s295 + $0x18] sm:$0xf]
      %v333 = vld [vmem:[%s295 + $0x1c] sm:$0xf]
      %v334 = vld [vmem:[%s295 + $0x20] sm:$0xf]
      %v335 = vld [vmem:[%s295 + $0x24] sm:$0xf]
      %v336 = vld [vmem:[%s295 + $0x28] sm:$0xf]
      %v337 = vld [vmem:[%s295 + $0x2c] sm:$0xf]
      %v350 = vunpack.c.l.b16 %v326
      %v351 = vunpack.c.l.b16 %v327
      %v352 = vunpack.c.l.b16 %v328
      %v353 = vunpack.c.l.b16 %v329
      %v354 = vunpack.c.l.b16 %v330
      %v355 = vunpack.c.l.b16 %v331
      %v356 = vunpack.c.l.b16 %v332
      %v357 = vunpack.c.l.b16 %v333
      %v358 = vunpack.c.l.b16 %v334
      %v359 = vunpack.c.l.b16 %v335
      %v360 = vunpack.c.l.b16 %v336
      %v361 = vunpack.c.l.b16 %v337
      %v362 = vpack.c.b16 %v351, %v350
      %v363 = vpack.c.b16 %v353, %v352
      %v364 = vpack.c.b16 %v355, %v354
      %v365 = vpack.c.b16 %v357, %v356
      %v366 = vpack.c.b16 %v359, %v358
      %v367 = vpack.c.b16 %v361, %v360
      %v372 = vunpack.c.l.b16 %v322
      %v373 = vunpack.c.l.b16 %v323
      %v374 = vunpack.c.l.b16 %v324
      %v375 = vunpack.c.l.b16 %v325
      %v376 = vpack.c.b16 %v373, %v372
      %v377 = vpack.c.b16 %v375, %v374
      %vm379 = vcmask 203776
      %v381 = vsel %vm379, %v362, 0
      %v384 = vsel %vm379, %v363, 0
      %v387 = vsel %vm379, %v364, 0
      %v390 = vsel %vm379, %v365, 0
      %v393 = vsel %vm379, %v366, 0
      %v396 = vsel %vm379, %v367, 0
      %vm398 = vcmask 1043456
      %vm399 = vcmask 1044480
      %v400 = vsel %vm398, 4294967295, 65535
      %v401 = vsel %vm399, %v400, 0
      %v403 = vand.u32 %v377, %v401
      %405 = vmatprep.subr.bf16.mxu0 0
      %406 = vmatpush1.bf16.msra.mxu0 %v376
      %407 = vmatprep.subr.bf16.mxu0 0
      %408 = vmatpush1.bf16.msra.mxu0 %v403
      %409 = vmatprep.subr.bf16.mxu0 0
      %410 = vmatpush1.bf16.msra.mxu0 0
      %411 = vmatprep.subr.bf16.mxu0 0
      %412 = vmatpush1.bf16.msra.mxu0 0
      %413 = vmatprep.subr.bf16.mxu0 0
      %414 = vmatpush1.bf16.msra.mxu0 0
      %415 = vmatprep.subr.bf16.mxu0 0
      %416 = vmatpush1.bf16.msra.mxu0 0
      %417 = vmatprep.subr.bf16.mxu0 0
      %418 = vmatpush1.bf16.msra.mxu0 0
      %419 = vmatprep.subr.bf16.mxu0 0
      %420 = vmatpush1.bf16.msra.mxu0 0
      %421 = vmatprep.subr.bf16.mxu0 0
      %422 = vmatpush1.bf16.msra.mxu0 0
      %423 = vmatprep.subr.bf16.mxu0 0
      %424 = vmatpush1.bf16.msra.mxu0 0
      %425 = vmatprep.subr.bf16.mxu0 0
      %426 = vmatpush1.bf16.msra.mxu0 0
      %427 = vmatprep.subr.bf16.mxu0 0
      %428 = vmatpush1.bf16.msra.mxu0 0
      %429 = vmatprep.subr.bf16.mxu0 0
      %430 = vmatpush1.bf16.msra.mxu0 0
      %431 = vmatprep.subr.bf16.mxu0 0
      %432 = vmatpush1.bf16.msra.mxu0 0
      %433 = vmatprep.subr.bf16.mxu0 0
      %434 = vmatpush1.bf16.msra.mxu0 0
      %435 = vmatprep.subr.bf16.mxu0 0
      %436 = vmatpush1.bf16.msra.mxu0 0
      %437 = vmatprep.mubr.bf16.mxu0 0
      %438 = vmatmul.mubr.bf16.gmra.mrb[0].mxu0 %v381
      %v439 = vpop.f32.mrb[0].mxu0
      %v440 = vadd.f32 0.0, %v439
      %v441 = vpop.f32.mrb[0].mxu0
      %v442 = vpop.f32.mrb[0].mxu0
      %v443 = vadd.f32 0.0, %v442
      %v444 = vpop.f32.mrb[0].mxu0
      %445 = vmatprep.mubr.bf16.mxu0 0
      %446 = vmatmul.mubr.bf16.gmra.mrb[0].mxu0 %v384
      %v447 = vpop.f32.mrb[0].mxu0
      %v448 = vadd.f32 0.0, %v447
      %v449 = vpop.f32.mrb[0].mxu0
      %v450 = vpop.f32.mrb[0].mxu0
      %v451 = vadd.f32 0.0, %v450
      %v452 = vpop.f32.mrb[0].mxu0
      %453 = vmatprep.mubr.bf16.mxu0 0
      %454 = vmatmul.mubr.bf16.gmra.mrb[0].mxu0 %v387
      %v455 = vpop.f32.mrb[0].mxu0
      %v456 = vadd.f32 0.0, %v455
      %v457 = vpop.f32.mrb[0].mxu0
      %v458 = vpop.f32.mrb[0].mxu0
      %v459 = vadd.f32 0.0, %v458
      %v460 = vpop.f32.mrb[0].mxu0
      %461 = vmatprep.mubr.bf16.mxu0 0
      %462 = vmatmul.mubr.bf16.gmra.mrb[0].mxu0 %v390
      %v463 = vpop.f32.mrb[0].mxu0
      %v464 = vadd.f32 0.0, %v463
      %v465 = vpop.f32.mrb[0].mxu0
      %v466 = vpop.f32.mrb[0].mxu0
      %v467 = vadd.f32 0.0, %v466
      %v468 = vpop.f32.mrb[0].mxu0
      %469 = vmatprep.mubr.bf16.mxu0 0
      %470 = vmatmul.mubr.bf16.gmra.mrb[0].mxu0 %v393
      %v471 = vpop.f32.mrb[0].mxu0
      %v472 = vadd.f32 0.0, %v471
      %v473 = vpop.f32.mrb[0].mxu0
      %v474 = vpop.f32.mrb[0].mxu0
      %v475 = vadd.f32 0.0, %v474
      %v476 = vpop.f32.mrb[0].mxu0
      %477 = vmatprep.mubr.bf16.mxu0 0
      %478 = vmatmul.mubr.bf16.gmra.mrb[0].mxu0 %v396
      %v479 = vpop.f32.mrb[0].mxu0
      %v480 = vadd.f32 0.0, %v479
      %v481 = vpop.f32.mrb[0].mxu0
      %v482 = vpop.f32.mrb[0].mxu0
      %v483 = vadd.f32 0.0, %v482
      %v484 = vpop.f32.mrb[0].mxu0
      %485 = vdwg.mxu0
      %v486 = vld [vmem:[%s301] sm:$0xf]
      %v487 = vld [vmem:[%s301 + $0x4] sm:$0xf]
      %v488 = vld [vmem:[%s301 + $0x8] sm:$0xf]
      %v489 = vld [vmem:[%s301 + $0xc] sm:$0xf]
      %v490 = vld [vmem:[%s301 + $0x10] sm:$0xf]
      %v491 = vld [vmem:[%s301 + $0x14] sm:$0xf]
      %v492 = vld [vmem:[%s301 + $0x18] sm:$0xf]
      %v493 = vld [vmem:[%s301 + $0x1c] sm:$0xf]
      %v494 = vld [vmem:[%s301 + $0x20] sm:$0xf]
      %v495 = vld [vmem:[%s301 + $0x24] sm:$0xf]
      %v496 = vld [vmem:[%s301 + $0x28] sm:$0xf]
      %v497 = vld [vmem:[%s301 + $0x2c] sm:$0xf]
      %v510 = vunpack.c.l.b16 %v486
      %v511 = vunpack.c.l.b16 %v487
      %v512 = vunpack.c.l.b16 %v488
      %v513 = vunpack.c.l.b16 %v489
      %v514 = vunpack.c.l.b16 %v490
      %v515 = vunpack.c.l.b16 %v491
      %v516 = vunpack.c.l.b16 %v492
      %v517 = vunpack.c.l.b16 %v493
      %v518 = vunpack.c.l.b16 %v494
      %v519 = vunpack.c.l.b16 %v495
      %v520 = vunpack.c.l.b16 %v496
      %v521 = vunpack.c.l.b16 %v497
      %v522 = vpack.c.b16 %v511, %v510
      %v523 = vpack.c.b16 %v513, %v512
      %v524 = vpack.c.b16 %v515, %v514
      %v525 = vpack.c.b16 %v517, %v516
      %v526 = vpack.c.b16 %v519, %v518
      %v527 = vpack.c.b16 %v521, %v520
      %v529 = vsel %vm379, %v522, 0
      %v532 = vsel %vm379, %v523, 0
      %v535 = vsel %vm379, %v524, 0
      %v538 = vsel %vm379, %v525, 0
      %v541 = vsel %vm379, %v526, 0
      %v544 = vsel %vm379, %v527, 0
      %546 = vmatprep.subr.bf16.mxu0 0
      %547 = vmatpush1.bf16.msra.mxu0 %v376
      %548 = vmatprep.subr.bf16.mxu0 0
      %549 = vmatpush1.bf16.msra.mxu0 %v403
      %550 = vmatprep.subr.bf16.mxu0 0
      %551 = vmatpush1.bf16.msra.mxu0 0
      %552 = vmatprep.subr.bf16.mxu0 0
      %553 = vmatpush1.bf16.msra.mxu0 0
      %554 = vmatprep.subr.bf16.mxu0 0
      %555 = vmatpush1.bf16.msra.mxu0 0
      %556 = vmatprep.subr.bf16.mxu0 0
      %557 = vmatpush1.bf16.msra.mxu0 0
      %558 = vmatprep.subr.bf16.mxu0 0
      %559 = vmatpush1.bf16.msra.mxu0 0
      %560 = vmatprep.subr.bf16.mxu0 0
      %561 = vmatpush1.bf16.msra.mxu0 0
      %562 = vmatprep.subr.bf16.mxu0 0
      %563 = vmatpush1.bf16.msra.mxu0 0
      %564 = vmatprep.subr.bf16.mxu0 0
      %565 = vmatpush1.bf16.msra.mxu0 0
      %566 = vmatprep.subr.bf16.mxu0 0
      %567 = vmatpush1.bf16.msra.mxu0 0
      %568 = vmatprep.subr.bf16.mxu0 0
      %569 = vmatpush1.bf16.msra.mxu0 0
      %570 = vmatprep.subr.bf16.mxu0 0
      %571 = vmatpush1.bf16.msra.mxu0 0
      %572 = vmatprep.subr.bf16.mxu0 0
      %573 = vmatpush1.bf16.msra.mxu0 0
      %574 = vmatprep.subr.bf16.mxu0 0
      %575 = vmatpush1.bf16.msra.mxu0 0
      %576 = vmatprep.subr.bf16.mxu0 0
      %577 = vmatpush1.bf16.msra.mxu0 0
      %578 = vmatprep.mubr.bf16.mxu0 0
      %579 = vmatmul.mubr.bf16.gmra.mrb[0].mxu0 %v529
      %v580 = vpop.f32.mrb[0].mxu0
      %v581 = vadd.f32 0.0, %v580
      %v582 = vpop.f32.mrb[0].mxu0
      %v583 = vpop.f32.mrb[0].mxu0
      %v584 = vadd.f32 0.0, %v583
      %v585 = vpop.f32.mrb[0].mxu0
      %586 = vmatprep.mubr.bf16.mxu0 0
      %587 = vmatmul.mubr.bf16.gmra.mrb[0].mxu0 %v532
      %v588 = vpop.f32.mrb[0].mxu0
      %v589 = vadd.f32 0.0, %v588
      %v590 = vpop.f32.mrb[0].mxu0
      %v591 = vpop.f32.mrb[0].mxu0
      %v592 = vadd.f32 0.0, %v591
      %v593 = vpop.f32.mrb[0].mxu0
      %594 = vmatprep.mubr.bf16.mxu0 0
      %595 = vmatmul.mubr.bf16.gmra.mrb[0].mxu0 %v535
      %v596 = vpop.f32.mrb[0].mxu0
      %v597 = vadd.f32 0.0, %v596
      %v598 = vpop.f32.mrb[0].mxu0
      %v599 = vpop.f32.mrb[0].mxu0
      %v600 = vadd.f32 0.0, %v599
      %v601 = vpop.f32.mrb[0].mxu0
      %602 = vmatprep.mubr.bf16.mxu0 0
      %603 = vmatmul.mubr.bf16.gmra.mrb[0].mxu0 %v538
      %v604 = vpop.f32.mrb[0].mxu0
      %v605 = vadd.f32 0.0, %v604
      %v606 = vpop.f32.mrb[0].mxu0
      %v607 = vpop.f32.mrb[0].mxu0
      %v608 = vadd.f32 0.0, %v607
      %v609 = vpop.f32.mrb[0].mxu0
      %610 = vmatprep.mubr.bf16.mxu0 0
      %611 = vmatmul.mubr.bf16.gmra.mrb[0].mxu0 %v541
      %v612 = vpop.f32.mrb[0].mxu0
      %v613 = vadd.f32 0.0, %v612
      %v614 = vpop.f32.mrb[0].mxu0
      %v615 = vpop.f32.mrb[0].mxu0
      %v616 = vadd.f32 0.0, %v615
      %v617 = vpop.f32.mrb[0].mxu0
      %618 = vmatprep.mubr.bf16.mxu0 0
      %619 = vmatmul.mubr.bf16.gmra.mrb[0].mxu0 %v544
      %v620 = vpop.f32.mrb[0].mxu0
      %v621 = vadd.f32 0.0, %v620
      %v622 = vpop.f32.mrb[0].mxu0
      %v623 = vpop.f32.mrb[0].mxu0
      %v624 = vadd.f32 0.0, %v623
      %v625 = vpop.f32.mrb[0].mxu0
      %626 = vdwg.mxu0
      %v627 = vmax.f32 %v440, %v581
      %v628 = vmax.f32 %v443, %v584
      %v629 = vmax.f32 %v448, %v589
      %v630 = vmax.f32 %v451, %v592
      %v631 = vmax.f32 %v456, %v597
      %v632 = vmax.f32 %v459, %v600
      %v633 = vmax.f32 %v464, %v605
      %v634 = vmax.f32 %v467, %v608
      %v635 = vmax.f32 %v472, %v613
      %v636 = vmax.f32 %v475, %v616
      %v637 = vmax.f32 %v480, %v621
      %v638 = vmax.f32 %v483, %v624
      %v639 = vld [vmem:[%s307] sm:$0xf]
      %v640 = vld [vmem:[%s307 + $0x4] sm:$0xf]
      %v641 = vld [vmem:[%s307 + $0x8] sm:$0xf]
      %v642 = vld [vmem:[%s307 + $0xc] sm:$0xf]
      %v643 = vld [vmem:[%s307 + $0x10] sm:$0xf]
      %v644 = vld [vmem:[%s307 + $0x14] sm:$0xf]
      %v645 = vld [vmem:[%s307 + $0x18] sm:$0xf]
      %v646 = vld [vmem:[%s307 + $0x1c] sm:$0xf]
      %v647 = vld [vmem:[%s307 + $0x20] sm:$0xf]
      %v648 = vld [vmem:[%s307 + $0x24] sm:$0xf]
      %v649 = vld [vmem:[%s307 + $0x28] sm:$0xf]
      %v650 = vld [vmem:[%s307 + $0x2c] sm:$0xf]
      %v663 = vunpack.c.l.b16 %v639
      %v664 = vunpack.c.l.b16 %v640
      %v665 = vunpack.c.l.b16 %v641
      %v666 = vunpack.c.l.b16 %v642
      %v667 = vunpack.c.l.b16 %v643
      %v668 = vunpack.c.l.b16 %v644
      %v669 = vunpack.c.l.b16 %v645
      %v670 = vunpack.c.l.b16 %v646
      %v671 = vunpack.c.l.b16 %v647
      %v672 = vunpack.c.l.b16 %v648
      %v673 = vunpack.c.l.b16 %v649
      %v674 = vunpack.c.l.b16 %v650
      %v675 = vpack.c.b16 %v664, %v663
      %v676 = vpack.c.b16 %v666, %v665
      %v677 = vpack.c.b16 %v668, %v667
      %v678 = vpack.c.b16 %v670, %v669
      %v679 = vpack.c.b16 %v672, %v671
      %v680 = vpack.c.b16 %v674, %v673
      %v682 = vsel %vm379, %v675, 0
      %v685 = vsel %vm379, %v676, 0
      %v688 = vsel %vm379, %v677, 0
      %v691 = vsel %vm379, %v678, 0
      %v694 = vsel %vm379, %v679, 0
      %v697 = vsel %vm379, %v680, 0
      %699 = vmatprep.subr.bf16.mxu0 0
      %700 = vmatpush1.bf16.msra.mxu0 %v376
      %701 = vmatprep.subr.bf16.mxu0 0
      %702 = vmatpush1.bf16.msra.mxu0 %v403
      %703 = vmatprep.subr.bf16.mxu0 0
      %704 = vmatpush1.bf16.msra.mxu0 0
      %705 = vmatprep.subr.bf16.mxu0 0
      %706 = vmatpush1.bf16.msra.mxu0 0
      %707 = vmatprep.subr.bf16.mxu0 0
      %708 = vmatpush1.bf16.msra.mxu0 0
      %709 = vmatprep.subr.bf16.mxu0 0
      %710 = vmatpush1.bf16.msra.mxu0 0
      %711 = vmatprep.subr.bf16.mxu0 0
      %712 = vmatpush1.bf16.msra.mxu0 0
      %713 = vmatprep.subr.bf16.mxu0 0
      %714 = vmatpush1.bf16.msra.mxu0 0
      %715 = vmatprep.subr.bf16.mxu0 0
      %716 = vmatpush1.bf16.msra.mxu0 0
      %717 = vmatprep.subr.bf16.mxu0 0
      %718 = vmatpush1.bf16.msra.mxu0 0
      %719 = vmatprep.subr.bf16.mxu0 0
      %720 = vmatpush1.bf16.msra.mxu0 0
      %721 = vmatprep.subr.bf16.mxu0 0
      %722 = vmatpush1.bf16.msra.mxu0 0
      %723 = vmatprep.subr.bf16.mxu0 0
      %724 = vmatpush1.bf16.msra.mxu0 0
      %725 = vmatprep.subr.bf16.mxu0 0
      %726 = vmatpush1.bf16.msra.mxu0 0
      %727 = vmatprep.subr.bf16.mxu0 0
      %728 = vmatpush1.bf16.msra.mxu0 0
      %729 = vmatprep.subr.bf16.mxu0 0
      %730 = vmatpush1.bf16.msra.mxu0 0
      %731 = vmatprep.mubr.bf16.mxu0 0
      %732 = vmatmul.mubr.bf16.gmra.mrb[0].mxu0 %v682
      %v733 = vpop.f32.mrb[0].mxu0
      %v734 = vadd.f32 0.0, %v733
      %v735 = vpop.f32.mrb[0].mxu0
      %v736 = vpop.f32.mrb[0].mxu0
      %v737 = vadd.f32 0.0, %v736
      %v738 = vpop.f32.mrb[0].mxu0
      %739 = vmatprep.mubr.bf16.mxu0 0
      %740 = vmatmul.mubr.bf16.gmra.mrb[0].mxu0 %v685
      %v741 = vpop.f32.mrb[0].mxu0
      %v742 = vadd.f32 0.0, %v741
      %v743 = vpop.f32.mrb[0].mxu0
      %v744 = vpop.f32.mrb[0].mxu0
      %v745 = vadd.f32 0.0, %v744
      %v746 = vpop.f32.mrb[0].mxu0
      %747 = vmatprep.mubr.bf16.mxu0 0
      %748 = vmatmul.mubr.bf16.gmra.mrb[0].mxu0 %v688
      %v749 = vpop.f32.mrb[0].mxu0
      %v750 = vadd.f32 0.0, %v749
      %v751 = vpop.f32.mrb[0].mxu0
      %v752 = vpop.f32.mrb[0].mxu0
      %v753 = vadd.f32 0.0, %v752
      %v754 = vpop.f32.mrb[0].mxu0
      %755 = vmatprep.mubr.bf16.mxu0 0
      %756 = vmatmul.mubr.bf16.gmra.mrb[0].mxu0 %v691
      %v757 = vpop.f32.mrb[0].mxu0
      %v758 = vadd.f32 0.0, %v757
      %v759 = vpop.f32.mrb[0].mxu0
      %v760 = vpop.f32.mrb[0].mxu0
      %v761 = vadd.f32 0.0, %v760
      %v762 = vpop.f32.mrb[0].mxu0
      %763 = vmatprep.mubr.bf16.mxu0 0
      %764 = vmatmul.mubr.bf16.gmra.mrb[0].mxu0 %v694
      %v765 = vpop.f32.mrb[0].mxu0
      %v766 = vadd.f32 0.0, %v765
      %v767 = vpop.f32.mrb[0].mxu0
      %v768 = vpop.f32.mrb[0].mxu0
      %v769 = vadd.f32 0.0, %v768
      %v770 = vpop.f32.mrb[0].mxu0
      %771 = vmatprep.mubr.bf16.mxu0 0
      %772 = vmatmul.mubr.bf16.gmra.mrb[0].mxu0 %v697
      %v773 = vpop.f32.mrb[0].mxu0
      %v774 = vadd.f32 0.0, %v773
      %v775 = vpop.f32.mrb[0].mxu0
      %v776 = vpop.f32.mrb[0].mxu0
      %v777 = vadd.f32 0.0, %v776
      %v778 = vpop.f32.mrb[0].mxu0
      %779 = vdwg.mxu0
      %v780 = vld [vmem:[%s313] sm:$0xf]
      %v781 = vld [vmem:[%s313 + $0x4] sm:$0xf]
      %v782 = vld [vmem:[%s313 + $0x8] sm:$0xf]
      %v783 = vld [vmem:[%s313 + $0xc] sm:$0xf]
      %v784 = vld [vmem:[%s313 + $0x10] sm:$0xf]
      %v785 = vld [vmem:[%s313 + $0x14] sm:$0xf]
      %v786 = vld [vmem:[%s313 + $0x18] sm:$0xf]
      %v787 = vld [vmem:[%s313 + $0x1c] sm:$0xf]
      %v788 = vld [vmem:[%s313 + $0x20] sm:$0xf]
      %v789 = vld [vmem:[%s313 + $0x24] sm:$0xf]
      %v790 = vld [vmem:[%s313 + $0x28] sm:$0xf]
      %v791 = vld [vmem:[%s313 + $0x2c] sm:$0xf]
      %v804 = vunpack.c.l.b16 %v780
      %v805 = vunpack.c.l.b16 %v781
      %v806 = vunpack.c.l.b16 %v782
      %v807 = vunpack.c.l.b16 %v783
      %v808 = vunpack.c.l.b16 %v784
      %v809 = vunpack.c.l.b16 %v785
      %v810 = vunpack.c.l.b16 %v786
      %v811 = vunpack.c.l.b16 %v787
      %v812 = vunpack.c.l.b16 %v788
      %v813 = vunpack.c.l.b16 %v789
      %v814 = vunpack.c.l.b16 %v790
      %v815 = vunpack.c.l.b16 %v791
      %v816 = vpack.c.b16 %v805, %v804
      %v817 = vpack.c.b16 %v807, %v806
      %v818 = vpack.c.b16 %v809, %v808
      %v819 = vpack.c.b16 %v811, %v810
      %v820 = vpack.c.b16 %v813, %v812
      %v821 = vpack.c.b16 %v815, %v814
      %v823 = vsel %vm379, %v816, 0
      %v826 = vsel %vm379, %v817, 0
      %v829 = vsel %vm379, %v818, 0
      %v832 = vsel %vm379, %v819, 0
      %v835 = vsel %vm379, %v820, 0
      %v838 = vsel %vm379, %v821, 0
      %840 = vmatprep.subr.bf16.mxu0 0
      %841 = vmatpush1.bf16.msra.mxu0 %v376
      %842 = vmatprep.subr.bf16.mxu0 0
      %843 = vmatpush1.bf16.msra.mxu0 %v403
      %844 = vmatprep.subr.bf16.mxu0 0
      %845 = vmatpush1.bf16.msra.mxu0 0
      %846 = vmatprep.subr.bf16.mxu0 0
      %847 = vmatpush1.bf16.msra.mxu0 0
      %848 = vmatprep.subr.bf16.mxu0 0
      %849 = vmatpush1.bf16.msra.mxu0 0
      %850 = vmatprep.subr.bf16.mxu0 0
      %851 = vmatpush1.bf16.msra.mxu0 0
      %852 = vmatprep.subr.bf16.mxu0 0
      %853 = vmatpush1.bf16.msra.mxu0 0
      %854 = vmatprep.subr.bf16.mxu0 0
      %855 = vmatpush1.bf16.msra.mxu0 0
      %856 = vmatprep.subr.bf16.mxu0 0
      %857 = vmatpush1.bf16.msra.mxu0 0
      %858 = vmatprep.subr.bf16.mxu0 0
      %859 = vmatpush1.bf16.msra.mxu0 0
      %860 = vmatprep.subr.bf16.mxu0 0
      %861 = vmatpush1.bf16.msra.mxu0 0
      %862 = vmatprep.subr.bf16.mxu0 0
      %863 = vmatpush1.bf16.msra.mxu0 0
      %864 = vmatprep.subr.bf16.mxu0 0
      %865 = vmatpush1.bf16.msra.mxu0 0
      %866 = vmatprep.subr.bf16.mxu0 0
      %867 = vmatpush1.bf16.msra.mxu0 0
      %868 = vmatprep.subr.bf16.mxu0 0
      %869 = vmatpush1.bf16.msra.mxu0 0
      %870 = vmatprep.subr.bf16.mxu0 0
      %871 = vmatpush1.bf16.msra.mxu0 0
      %872 = vmatprep.mubr.bf16.mxu0 0
      %873 = vmatmul.mubr.bf16.gmra.mrb[0].mxu0 %v823
      %v874 = vpop.f32.mrb[0].mxu0
      %v875 = vadd.f32 0.0, %v874
      %v876 = vpop.f32.mrb[0].mxu0
      %v877 = vpop.f32.mrb[0].mxu0
      %v878 = vadd.f32 0.0, %v877
      %v879 = vpop.f32.mrb[0].mxu0
      %880 = vmatprep.mubr.bf16.mxu0 0
      %881 = vmatmul.mubr.bf16.gmra.mrb[0].mxu0 %v826
      %v882 = vpop.f32.mrb[0].mxu0
      %v883 = vadd.f32 0.0, %v882
      %v884 = vpop.f32.mrb[0].mxu0
      %v885 = vpop.f32.mrb[0].mxu0
      %v886 = vadd.f32 0.0, %v885
      %v887 = vpop.f32.mrb[0].mxu0
      %888 = vmatprep.mubr.bf16.mxu0 0
      %889 = vmatmul.mubr.bf16.gmra.mrb[0].mxu0 %v829
      %v890 = vpop.f32.mrb[0].mxu0
      %v891 = vadd.f32 0.0, %v890
      %v892 = vpop.f32.mrb[0].mxu0
      %v893 = vpop.f32.mrb[0].mxu0
      %v894 = vadd.f32 0.0, %v893
      %v895 = vpop.f32.mrb[0].mxu0
      %896 = vmatprep.mubr.bf16.mxu0 0
      %897 = vmatmul.mubr.bf16.gmra.mrb[0].mxu0 %v832
      %v898 = vpop.f32.mrb[0].mxu0
      %v899 = vadd.f32 0.0, %v898
      %v900 = vpop.f32.mrb[0].mxu0
      %v901 = vpop.f32.mrb[0].mxu0
      %v902 = vadd.f32 0.0, %v901
      %v903 = vpop.f32.mrb[0].mxu0
      %904 = vmatprep.mubr.bf16.mxu0 0
      %905 = vmatmul.mubr.bf16.gmra.mrb[0].mxu0 %v835
      %v906 = vpop.f32.mrb[0].mxu0
      %v907 = vadd.f32 0.0, %v906
      %v908 = vpop.f32.mrb[0].mxu0
      %v909 = vpop.f32.mrb[0].mxu0
      %v910 = vadd.f32 0.0, %v909
      %v911 = vpop.f32.mrb[0].mxu0
      %912 = vmatprep.mubr.bf16.mxu0 0
      %913 = vmatmul.mubr.bf16.gmra.mrb[0].mxu0 %v838
      %v914 = vpop.f32.mrb[0].mxu0
      %v915 = vadd.f32 0.0, %v914
      %v916 = vpop.f32.mrb[0].mxu0
      %v917 = vpop.f32.mrb[0].mxu0
      %v918 = vadd.f32 0.0, %v917
      %v919 = vpop.f32.mrb[0].mxu0
      %920 = vdwg.mxu0
      %v921 = vmax.f32 %v734, %v875
      %v922 = vmax.f32 %v737, %v878
      %v923 = vmax.f32 %v742, %v883
      %v924 = vmax.f32 %v745, %v886
      %v925 = vmax.f32 %v750, %v891
      %v926 = vmax.f32 %v753, %v894
      %v927 = vmax.f32 %v758, %v899
      %v928 = vmax.f32 %v761, %v902
      %v929 = vmax.f32 %v766, %v907
      %v930 = vmax.f32 %v769, %v910
      %v931 = vmax.f32 %v774, %v915
      %v932 = vmax.f32 %v777, %v918
      %v933 = vmax.f32 %v627, %v921
      %v934 = vmax.f32 %v628, %v922
      %v935 = vmax.f32 %v629, %v923
      %v936 = vmax.f32 %v630, %v924
      %v937 = vmax.f32 %v631, %v925
      %v938 = vmax.f32 %v632, %v926
      %v939 = vmax.f32 %v633, %v927
      %v940 = vmax.f32 %v634, %v928
      %v941 = vmax.f32 %v635, %v929
      %v942 = vmax.f32 %v636, %v930
      %v943 = vmax.f32 %v637, %v931
      %v944 = vmax.f32 %v638, %v932
      %v945 = vld [vmem:[%s5] sm:$0x1]
      %v947 = vlaneseq
      %v948 = vshrl.u32 %v947, 7
      %v949 = vsub.s32 0, %v948
      %v950 = vrot.slane %v945, %v949
      %v952 = vadd.f32 %v933, %v950
      %v953 = vadd.f32 %v934, %v950
      %v954 = vadd.f32 %v935, %v950
      %v955 = vadd.f32 %v936, %v950
      %v956 = vadd.f32 %v937, %v950
      %v957 = vadd.f32 %v938, %v950
      %v958 = vadd.f32 %v939, %v950
      %v959 = vadd.f32 %v940, %v950
      %v960 = vadd.f32 %v941, %v950
      %v961 = vadd.f32 %v942, %v950
      %v962 = vadd.f32 %v943, %v950
      %v963 = vadd.f32 %v944, %v950
      %v964 = vmax.f32 %v952, 0.0
      %v965 = vmax.f32 %v953, 0.0
      %v966 = vmax.f32 %v954, 0.0
      %v967 = vmax.f32 %v955, 0.0
      %v968 = vmax.f32 %v956, 0.0
      %v969 = vmax.f32 %v957, 0.0
      %v970 = vmax.f32 %v958, 0.0
      %v971 = vmax.f32 %v959, 0.0
      %v972 = vmax.f32 %v960, 0.0
      %v973 = vmax.f32 %v961, 0.0
      %v974 = vmax.f32 %v962, 0.0
      %v975 = vmax.f32 %v963, 0.0
      %976 = vst [vmem:[%s319] sm:$0xff] %v964
      %977 = vst [vmem:[%s319 + $0x8] sm:$0xff] %v965
      %978 = vst [vmem:[%s319 + $0x10] sm:$0xff] %v966
      %979 = vst [vmem:[%s319 + $0x18] sm:$0xff] %v967
      %980 = vst [vmem:[%s319 + $0x20] sm:$0xff] %v968
      %981 = vst [vmem:[%s319 + $0x28] sm:$0xff] %v969
      %982 = vst [vmem:[%s319 + $0x30] sm:$0xff] %v970
      %983 = vst [vmem:[%s319 + $0x38] sm:$0xff] %v971
      %984 = vst [vmem:[%s319 + $0x40] sm:$0xff] %v972
      %985 = vst [vmem:[%s319 + $0x48] sm:$0xff] %v973
      %986 = vst [vmem:[%s319 + $0x50] sm:$0xff] %v974
      %987 = vst [vmem:[%s319 + $0x58] sm:$0xff] %v975
      %s988 = smul.u32 12, %s17
      %p989 = scmp.lt.s32.totalorder %s988, 35
      %s990 = scalar_select %p989, %s988, 35
      %s991 = smul.addr %s990, 8
      %s992 = scalar_lea.vmem %s6, %s991
      // Predicated region
      $region45: #{_lambda_.11} parent=43 // pred_check
        %p993 = pneg %p181
      $region46: #{_lambda_.11} parent=43 // pred_check_branch
        %995 = sbr.rel (%p993) target = $region48
      $region47: #{_lambda_.11} parent=43 // pred_region
        %s996 = smul.u32 12, %s17
      $region48: #{_lambda_.11} parent=43 // pred_fallthru
        _
    $region44: #{_lambda_.11} parent=5 // pred_fallthru
      _
    %p997 = scmp.le.s32.totalorder 2, %s12
    // Predicated region
    $region49: #{_lambda_.11} parent=5 // pred_check
      %p998 = pneg %p997
    $region50: #{_lambda_.11} parent=5 // pred_check_branch
      %1000 = sbr.rel (%p998) target = $region52
    $region51: #{_lambda_.11} parent=5 // pred_region
      %s1001 = ssub.s32 %s12, 2
      // Predicated region
      $region53: #{_lambda_.11} parent=51 // pred_check
        %p1002 = pneg %p187
      $region54: #{_lambda_.11} parent=51 // pred_check_branch
        %1004 = sbr.rel (%p1002) target = $region56
      $region55: #{_lambda_.11} parent=51 // pred_region
        %s1005 = smul.u32 12, %s18
        %p1006 = scmp.lt.s32.totalorder %s1005, 35
        %s1007 = scalar_select %p1006, %s1005, 35
        %s1008 = smul.addr %s1007, 8
        %s1009 = scalar_lea.vmem %s6, %s1008
      $region56: #{_lambda_.11} parent=51 // pred_fallthru
        _
    $region52: #{_lambda_.11} parent=5 // pred_fallthru
      _
  $region6: #{_lambda_.11} parent=0 // loop_footer
    %s16 = sadd.s32 1, %s12
  $region7: #{_lambda_.11} parent=0 // loop_footer_branch
    %11 = sbr.rel target = $region3
  $region8: #{_lambda_.11} parent=0 // loop_exit
    _

// kernel: _lambda_.12
$region0: #{_lambda_.12}
  #allocation0 [shape = 'u32[]', space=smem, size = 0x4, offset = 0x4, fixed_abs, tag = 'smem constant byte address 0x4 - core index']
  #allocation1 [shape = 'u32[144,128]{1,0:T(1,128)}', space=vmem, size = 0x12000, scoped, tag = 'internal scratch']
  %s0 = inlined_call_operand.vmem [shape: bf16[32,250], index: 0, kind: input, shape index: {}]
  %s1 = inlined_call_operand.vmem [shape: bf16[32,250], index: 1, kind: input, shape index: {}]
  %s2 = inlined_call_operand.vmem [shape: bf16[32,250], index: 2, kind: input, shape index: {}]
  %s3 = inlined_call_operand.vmem [shape: bf16[32,250], index: 3, kind: input, shape index: {}]
  %s4 = inlined_call_operand.vmem [shape: bf16[250,128], index: 4, kind: input, shape index: {}]
  %s5 = inlined_call_operand.vmem [shape: f32[1,128], index: 5, kind: input, shape index: {}]
  %s6 = inlined_call_operand.vmem [shape: f32[32,128], index: 6, kind: output, shape index: {}]
  %s7 = sld [smem:[#allocation0]]
  $region34: #{_lambda_.12} parent=0
    _
  %s9 = ssub.s32 1, %s7
  %s10 = scalar_select 0, %s9, %s7
  // Predicated region
  $region2: #{_lambda_.12} parent=0 // pred_check
    _
  $region3: #{_lambda_.12} parent=0 // pred_check_branch
    %12 = sbr.rel (0) target = $region5
  $region4: #{_lambda_.12} parent=0 // pred_region
    _
  $region5: #{_lambda_.12} parent=0 // pred_fallthru
    _
  // Predicated region
  $region6: #{_lambda_.12} parent=0 // pred_check
    _
  $region7: #{_lambda_.12} parent=0 // pred_check_branch
    %14 = sbr.rel (0) target = $region9
  $region8: #{_lambda_.12} parent=0 // pred_region
    _
  $region9: #{_lambda_.12} parent=0 // pred_fallthru
    _
  // Predicated region
  $region10: #{_lambda_.12} parent=0 // pred_check
    _
  $region11: #{_lambda_.12} parent=0 // pred_check_branch
    %16 = sbr.rel (0) target = $region13
  $region12: #{_lambda_.12} parent=0 // pred_region
    _
  $region13: #{_lambda_.12} parent=0 // pred_fallthru
    _
  // Predicated region
  $region14: #{_lambda_.12} parent=0 // pred_check
    _
  $region15: #{_lambda_.12} parent=0 // pred_check_branch
    %18 = sbr.rel (0) target = $region17
  $region16: #{_lambda_.12} parent=0 // pred_region
    _
  $region17: #{_lambda_.12} parent=0 // pred_fallthru
    _
  // Predicated region
  $region18: #{_lambda_.12} parent=0 // pred_check
    _
  $region19: #{_lambda_.12} parent=0 // pred_check_branch
    %20 = sbr.rel (0) target = $region21
  $region20: #{_lambda_.12} parent=0 // pred_region
    _
  $region21: #{_lambda_.12} parent=0 // pred_fallthru
    _
  // Predicated region
  $region22: #{_lambda_.12} parent=0 // pred_check
    _
  $region23: #{_lambda_.12} parent=0 // pred_check_branch
    %22 = sbr.rel (0) target = $region25
  $region24: #{_lambda_.12} parent=0 // pred_region
    _
  $region25: #{_lambda_.12} parent=0 // pred_fallthru
    _
  %v24 = vld [vmem:[%s4] sm:$0xf]
  %v25 = vld [vmem:[%s4 + $0x4] sm:$0xf]
  %v26 = vld [vmem:[%s4 + $0x8] sm:$0xf]
  %v27 = vld [vmem:[%s4 + $0xc] sm:$0xf]
  %v28 = vld [vmem:[%s4 + $0x10] sm:$0xf]
  %v29 = vld [vmem:[%s4 + $0x14] sm:$0xf]
  %v30 = vld [vmem:[%s4 + $0x18] sm:$0xf]
  %v31 = vld [vmem:[%s4 + $0x1c] sm:$0xf]
  %v32 = vld [vmem:[%s4 + $0x20] sm:$0xf]
  %v33 = vld [vmem:[%s4 + $0x24] sm:$0xf]
  %v34 = vld [vmem:[%s4 + $0x28] sm:$0xf]
  %v35 = vld [vmem:[%s4 + $0x2c] sm:$0xf]
  %v36 = vld [vmem:[%s4 + $0x30] sm:$0xf]
  %v37 = vld [vmem:[%s4 + $0x34] sm:$0xf]
  %v38 = vld [vmem:[%s4 + $0x38] sm:$0xf]
  %v39 = vld [vmem:[%s4 + $0x3c] sm:$0xf]
  %v40 = vld [vmem:[%s4 + $0x40] sm:$0xf]
  %v41 = vld [vmem:[%s4 + $0x44] sm:$0xf]
  %v42 = vld [vmem:[%s4 + $0x48] sm:$0xf]
  %v43 = vld [vmem:[%s4 + $0x4c] sm:$0xf]
  %v44 = vld [vmem:[%s4 + $0x50] sm:$0xf]
  %v45 = vld [vmem:[%s4 + $0x54] sm:$0xf]
  %v46 = vld [vmem:[%s4 + $0x58] sm:$0xf]
  %v47 = vld [vmem:[%s4 + $0x5c] sm:$0xf]
  %v48 = vld [vmem:[%s4 + $0x60] sm:$0xf]
  %v49 = vld [vmem:[%s4 + $0x64] sm:$0xf]
  %v50 = vld [vmem:[%s4 + $0x68] sm:$0xf]
  %v51 = vld [vmem:[%s4 + $0x6c] sm:$0xf]
  %v52 = vld [vmem:[%s4 + $0x70] sm:$0xf]
  %v53 = vld [vmem:[%s4 + $0x74] sm:$0xf]
  %v54 = vld [vmem:[%s4 + $0x78] sm:$0xf]
  %v55 = vld [vmem:[%s4 + $0x7c] sm:$0x1]
  %v56 = vld [vmem:[%s0] sm:$0xff]
  %v57 = vld [vmem:[%s0 + $0x8] sm:$0xff]
  %v58 = vld [vmem:[%s0 + $0x10] sm:$0xff]
  %v59 = vld [vmem:[%s0 + $0x18] sm:$0xff]
  %v64 = vunpack.c.l.b16 %v56
  %v65 = vunpack.c.h.b16 %v56
  %v66 = vunpack.c.l.b16 %v57
  %v67 = vunpack.c.h.b16 %v57
  %v68 = vunpack.c.l.b16 %v58
  %v69 = vunpack.c.h.b16 %v58
  %v70 = vunpack.c.l.b16 %v59
  %v71 = vunpack.c.h.b16 %v59
  %v72 = vpack.c.b16 %v66, %v64
  %v73 = vpack.c.b16 %v67, %v65
  %v74 = vpack.c.b16 %v70, %v68
  %v75 = vpack.c.b16 %v71, %v69
  %v110 = vunpack.c.l.b16 %v24
  %v111 = vunpack.c.l.b16 %v25
  %v112 = vunpack.c.l.b16 %v26
  %v113 = vunpack.c.l.b16 %v27
  %v114 = vunpack.c.l.b16 %v28
  %v115 = vunpack.c.l.b16 %v29
  %v116 = vunpack.c.l.b16 %v30
  %v117 = vunpack.c.l.b16 %v31
  %v118 = vunpack.c.l.b16 %v32
  %v119 = vunpack.c.l.b16 %v33
  %v120 = vunpack.c.l.b16 %v34
  %v121 = vunpack.c.l.b16 %v35
  %v122 = vunpack.c.l.b16 %v36
  %v123 = vunpack.c.l.b16 %v37
  %v124 = vunpack.c.l.b16 %v38
  %v125 = vunpack.c.l.b16 %v39
  %v126 = vunpack.c.l.b16 %v40
  %v127 = vunpack.c.l.b16 %v41
  %v128 = vunpack.c.l.b16 %v42
  %v129 = vunpack.c.l.b16 %v43
  %v130 = vunpack.c.l.b16 %v44
  %v131 = vunpack.c.l.b16 %v45
  %v132 = vunpack.c.l.b16 %v46
  %v133 = vunpack.c.l.b16 %v47
  %v134 = vunpack.c.l.b16 %v48
  %v135 = vunpack.c.l.b16 %v49
  %v136 = vunpack.c.l.b16 %v50
  %v137 = vunpack.c.l.b16 %v51
  %v138 = vunpack.c.l.b16 %v52
  %v139 = vunpack.c.l.b16 %v53
  %v140 = vunpack.c.l.b16 %v54
  %v141 = vunpack.c.l.b16 %v55
  %v142 = vpack.c.b16 %v111, %v110
  %v143 = vpack.c.b16 %v113, %v112
  %v144 = vpack.c.b16 %v115, %v114
  %v145 = vpack.c.b16 %v117, %v116
  %v146 = vpack.c.b16 %v119, %v118
  %v147 = vpack.c.b16 %v121, %v120
  %v148 = vpack.c.b16 %v123, %v122
  %v149 = vpack.c.b16 %v125, %v124
  %v150 = vpack.c.b16 %v127, %v126
  %v151 = vpack.c.b16 %v129, %v128
  %v152 = vpack.c.b16 %v131, %v130
  %v153 = vpack.c.b16 %v133, %v132
  %v154 = vpack.c.b16 %v135, %v134
  %v155 = vpack.c.b16 %v137, %v136
  %v156 = vpack.c.b16 %v139, %v138
  %v157 = vpack.c.b16 %v141, %v140
  %vm173 = vcmask 998400
  %v175 = vsel %vm173, %v73, 0
  %v178 = vsel %vm173, %v75, 0
  %vm180 = vcmask 1044480
  %v182 = vsel %vm180, %v157, 0
  %184 = vmatprep.subr.bf16.mxu0 0
  %185 = vmatpush1.bf16.msra.mxu0 %v142
  %186 = vmatprep.subr.bf16.mxu0 0
  %187 = vmatpush1.bf16.msra.mxu0 %v143
  %188 = vmatprep.subr.bf16.mxu0 0
  %189 = vmatpush1.bf16.msra.mxu0 %v144
  %190 = vmatprep.subr.bf16.mxu0 0
  %191 = vmatpush1.bf16.msra.mxu0 %v145
  %192 = vmatprep.subr.bf16.mxu0 0
  %193 = vmatpush1.bf16.msra.mxu0 %v146
  %194 = vmatprep.subr.bf16.mxu0 0
  %195 = vmatpush1.bf16.msra.mxu0 %v147
  %196 = vmatprep.subr.bf16.mxu0 0
  %197 = vmatpush1.bf16.msra.mxu0 %v148
  %198 = vmatprep.subr.bf16.mxu0 0
  %199 = vmatpush1.bf16.msra.mxu0 %v149
  %200 = vmatprep.subr.bf16.mxu0 0
  %201 = vmatpush1.bf16.msra.mxu0 %v150
  %202 = vmatprep.subr.bf16.mxu0 0
  %203 = vmatpush1.bf16.msra.mxu0 %v151
  %204 = vmatprep.subr.bf16.mxu0 0
  %205 = vmatpush1.bf16.msra.mxu0 %v152
  %206 = vmatprep.subr.bf16.mxu0 0
  %207 = vmatpush1.bf16.msra.mxu0 %v153
  %208 = vmatprep.subr.bf16.mxu0 0
  %209 = vmatpush1.bf16.msra.mxu0 %v154
  %210 = vmatprep.subr.bf16.mxu0 0
  %211 = vmatpush1.bf16.msra.mxu0 %v155
  %212 = vmatprep.subr.bf16.mxu0 0
  %213 = vmatpush1.bf16.msra.mxu0 %v156
  %214 = vmatprep.subr.bf16.mxu0 0
  %215 = vmatpush1.bf16.msra.mxu0 %v182
  %216 = vmatprep.mubr.bf16.mxu0 %v175
  %217 = vmatmul.mubr.bf16.gmra.mrb[0].mxu0 %v72
  %v218 = vpop.f32.mrb[0].mxu0
  %v219 = vadd.f32 0.0, %v218
  %v220 = vpop.f32.mrb[0].mxu0
  %v221 = vpop.f32.mrb[0].mxu0
  %v222 = vadd.f32 0.0, %v221
  %v223 = vpop.f32.mrb[0].mxu0
  %224 = vmatprep.mubr.bf16.mxu0 %v178
  %225 = vmatmul.mubr.bf16.gmra.mrb[0].mxu0 %v74
  %v226 = vpop.f32.mrb[0].mxu0
  %v227 = vadd.f32 0.0, %v226
  %v228 = vpop.f32.mrb[0].mxu0
  %v229 = vpop.f32.mrb[0].mxu0
  %v230 = vadd.f32 0.0, %v229
  %v231 = vpop.f32.mrb[0].mxu0
  %232 = vdwg.mxu0
  %v233 = vld [vmem:[%s1] sm:$0xff]
  %v234 = vld [vmem:[%s1 + $0x8] sm:$0xff]
  %v235 = vld [vmem:[%s1 + $0x10] sm:$0xff]
  %v236 = vld [vmem:[%s1 + $0x18] sm:$0xff]
  %v241 = vunpack.c.l.b16 %v233
  %v242 = vunpack.c.h.b16 %v233
  %v243 = vunpack.c.l.b16 %v234
  %v244 = vunpack.c.h.b16 %v234
  %v245 = vunpack.c.l.b16 %v235
  %v246 = vunpack.c.h.b16 %v235
  %v247 = vunpack.c.l.b16 %v236
  %v248 = vunpack.c.h.b16 %v236
  %v249 = vpack.c.b16 %v243, %v241
  %v250 = vpack.c.b16 %v244, %v242
  %v251 = vpack.c.b16 %v247, %v245
  %v252 = vpack.c.b16 %v248, %v246
  %v256 = vsel %vm173, %v250, 0
  %v259 = vsel %vm173, %v252, 0
  %261 = vmatprep.subr.bf16.mxu0 0
  %262 = vmatpush1.bf16.msra.mxu0 %v142
  %263 = vmatprep.subr.bf16.mxu0 0
  %264 = vmatpush1.bf16.msra.mxu0 %v143
  %265 = vmatprep.subr.bf16.mxu0 0
  %266 = vmatpush1.bf16.msra.mxu0 %v144
  %267 = vmatprep.subr.bf16.mxu0 0
  %268 = vmatpush1.bf16.msra.mxu0 %v145
  %269 = vmatprep.subr.bf16.mxu0 0
  %270 = vmatpush1.bf16.msra.mxu0 %v146
  %271 = vmatprep.subr.bf16.mxu0 0
  %272 = vmatpush1.bf16.msra.mxu0 %v147
  %273 = vmatprep.subr.bf16.mxu0 0
  %274 = vmatpush1.bf16.msra.mxu0 %v148
  %275 = vmatprep.subr.bf16.mxu0 0
  %276 = vmatpush1.bf16.msra.mxu0 %v149
  %277 = vmatprep.subr.bf16.mxu0 0
  %278 = vmatpush1.bf16.msra.mxu0 %v150
  %279 = vmatprep.subr.bf16.mxu0 0
  %280 = vmatpush1.bf16.msra.mxu0 %v151
  %281 = vmatprep.subr.bf16.mxu0 0
  %282 = vmatpush1.bf16.msra.mxu0 %v152
  %283 = vmatprep.subr.bf16.mxu0 0
  %284 = vmatpush1.bf16.msra.mxu0 %v153
  %285 = vmatprep.subr.bf16.mxu0 0
  %286 = vmatpush1.bf16.msra.mxu0 %v154
  %287 = vmatprep.subr.bf16.mxu0 0
  %288 = vmatpush1.bf16.msra.mxu0 %v155
  %289 = vmatprep.subr.bf16.mxu0 0
  %290 = vmatpush1.bf16.msra.mxu0 %v156
  %291 = vmatprep.subr.bf16.mxu0 0
  %292 = vmatpush1.bf16.msra.mxu0 %v182
  %293 = vmatprep.mubr.bf16.mxu0 %v256
  %294 = vmatmul.mubr.bf16.gmra.mrb[0].mxu0 %v249
  %v295 = vpop.f32.mrb[0].mxu0
  %v296 = vadd.f32 0.0, %v295
  %v297 = vpop.f32.mrb[0].mxu0
  %v298 = vpop.f32.mrb[0].mxu0
  %v299 = vadd.f32 0.0, %v298
  %v300 = vpop.f32.mrb[0].mxu0
  %301 = vmatprep.mubr.bf16.mxu0 %v259
  %302 = vmatmul.mubr.bf16.gmra.mrb[0].mxu0 %v251
  %v303 = vpop.f32.mrb[0].mxu0
  %v304 = vadd.f32 0.0, %v303
  %v305 = vpop.f32.mrb[0].mxu0
  %v306 = vpop.f32.mrb[0].mxu0
  %v307 = vadd.f32 0.0, %v306
  %v308 = vpop.f32.mrb[0].mxu0
  %309 = vdwg.mxu0
  %v310 = vmax.f32 %v219, %v296
  %v311 = vmax.f32 %v222, %v299
  %v312 = vmax.f32 %v227, %v304
  %v313 = vmax.f32 %v230, %v307
  %v314 = vld [vmem:[%s2] sm:$0xff]
  %v315 = vld [vmem:[%s2 + $0x8] sm:$0xff]
  %v316 = vld [vmem:[%s2 + $0x10] sm:$0xff]
  %v317 = vld [vmem:[%s2 + $0x18] sm:$0xff]
  %v322 = vunpack.c.l.b16 %v314
  %v323 = vunpack.c.h.b16 %v314
  %v324 = vunpack.c.l.b16 %v315
  %v325 = vunpack.c.h.b16 %v315
  %v326 = vunpack.c.l.b16 %v316
  %v327 = vunpack.c.h.b16 %v316
  %v328 = vunpack.c.l.b16 %v317
  %v329 = vunpack.c.h.b16 %v317
  %v330 = vpack.c.b16 %v324, %v322
  %v331 = vpack.c.b16 %v325, %v323
  %v332 = vpack.c.b16 %v328, %v326
  %v333 = vpack.c.b16 %v329, %v327
  %v337 = vsel %vm173, %v331, 0
  %v340 = vsel %vm173, %v333, 0
  %342 = vmatprep.subr.bf16.mxu0 0
  %343 = vmatpush1.bf16.msra.mxu0 %v142
  %344 = vmatprep.subr.bf16.mxu0 0
  %345 = vmatpush1.bf16.msra.mxu0 %v143
  %346 = vmatprep.subr.bf16.mxu0 0
  %347 = vmatpush1.bf16.msra.mxu0 %v144
  %348 = vmatprep.subr.bf16.mxu0 0
  %349 = vmatpush1.bf16.msra.mxu0 %v145
  %350 = vmatprep.subr.bf16.mxu0 0
  %351 = vmatpush1.bf16.msra.mxu0 %v146
  %352 = vmatprep.subr.bf16.mxu0 0
  %353 = vmatpush1.bf16.msra.mxu0 %v147
  %354 = vmatprep.subr.bf16.mxu0 0
  %355 = vmatpush1.bf16.msra.mxu0 %v148
  %356 = vmatprep.subr.bf16.mxu0 0
  %357 = vmatpush1.bf16.msra.mxu0 %v149
  %358 = vmatprep.subr.bf16.mxu0 0
  %359 = vmatpush1.bf16.msra.mxu0 %v150
  %360 = vmatprep.subr.bf16.mxu0 0
  %361 = vmatpush1.bf16.msra.mxu0 %v151
  %362 = vmatprep.subr.bf16.mxu0 0
  %363 = vmatpush1.bf16.msra.mxu0 %v152
  %364 = vmatprep.subr.bf16.mxu0 0
  %365 = vmatpush1.bf16.msra.mxu0 %v153
  %366 = vmatprep.subr.bf16.mxu0 0
  %367 = vmatpush1.bf16.msra.mxu0 %v154
  %368 = vmatprep.subr.bf16.mxu0 0
  %369 = vmatpush1.bf16.msra.mxu0 %v155
  %370 = vmatprep.subr.bf16.mxu0 0
  %371 = vmatpush1.bf16.msra.mxu0 %v156
  %372 = vmatprep.subr.bf16.mxu0 0
  %373 = vmatpush1.bf16.msra.mxu0 %v182
  %374 = vmatprep.mubr.bf16.mxu0 %v337
  %375 = vmatmul.mubr.bf16.gmra.mrb[0].mxu0 %v330
  %v376 = vpop.f32.mrb[0].mxu0
  %v377 = vadd.f32 0.0, %v376
  %v378 = vpop.f32.mrb[0].mxu0
  %v379 = vpop.f32.mrb[0].mxu0
  %v380 = vadd.f32 0.0, %v379
  %v381 = vpop.f32.mrb[0].mxu0
  %382 = vmatprep.mubr.bf16.mxu0 %v340
  %383 = vmatmul.mubr.bf16.gmra.mrb[0].mxu0 %v332
  %v384 = vpop.f32.mrb[0].mxu0
  %v385 = vadd.f32 0.0, %v384
  %v386 = vpop.f32.mrb[0].mxu0
  %v387 = vpop.f32.mrb[0].mxu0
  %v388 = vadd.f32 0.0, %v387
  %v389 = vpop.f32.mrb[0].mxu0
  %390 = vdwg.mxu0
  %v391 = vld [vmem:[%s3] sm:$0xff]
  %v392 = vld [vmem:[%s3 + $0x8] sm:$0xff]
  %v393 = vld [vmem:[%s3 + $0x10] sm:$0xff]
  %v394 = vld [vmem:[%s3 + $0x18] sm:$0xff]
  %v399 = vunpack.c.l.b16 %v391
  %v400 = vunpack.c.h.b16 %v391
  %v401 = vunpack.c.l.b16 %v392
  %v402 = vunpack.c.h.b16 %v392
  %v403 = vunpack.c.l.b16 %v393
  %v404 = vunpack.c.h.b16 %v393
  %v405 = vunpack.c.l.b16 %v394
  %v406 = vunpack.c.h.b16 %v394
  %v407 = vpack.c.b16 %v401, %v399
  %v408 = vpack.c.b16 %v402, %v400
  %v409 = vpack.c.b16 %v405, %v403
  %v410 = vpack.c.b16 %v406, %v404
  %v414 = vsel %vm173, %v408, 0
  %v417 = vsel %vm173, %v410, 0
  %419 = vmatprep.subr.bf16.mxu0 0
  %420 = vmatpush1.bf16.msra.mxu0 %v142
  %421 = vmatprep.subr.bf16.mxu0 0
  %422 = vmatpush1.bf16.msra.mxu0 %v143
  %423 = vmatprep.subr.bf16.mxu0 0
  %424 = vmatpush1.bf16.msra.mxu0 %v144
  %425 = vmatprep.subr.bf16.mxu0 0
  %426 = vmatpush1.bf16.msra.mxu0 %v145
  %427 = vmatprep.subr.bf16.mxu0 0
  %428 = vmatpush1.bf16.msra.mxu0 %v146
  %429 = vmatprep.subr.bf16.mxu0 0
  %430 = vmatpush1.bf16.msra.mxu0 %v147
  %431 = vmatprep.subr.bf16.mxu0 0
  %432 = vmatpush1.bf16.msra.mxu0 %v148
  %433 = vmatprep.subr.bf16.mxu0 0
  %434 = vmatpush1.bf16.msra.mxu0 %v149
  %435 = vmatprep.subr.bf16.mxu0 0
  %436 = vmatpush1.bf16.msra.mxu0 %v150
  %437 = vmatprep.subr.bf16.mxu0 0
  %438 = vmatpush1.bf16.msra.mxu0 %v151
  %439 = vmatprep.subr.bf16.mxu0 0
  %440 = vmatpush1.bf16.msra.mxu0 %v152
  %441 = vmatprep.subr.bf16.mxu0 0
  %442 = vmatpush1.bf16.msra.mxu0 %v153
  %443 = vmatprep.subr.bf16.mxu0 0
  %444 = vmatpush1.bf16.msra.mxu0 %v154
  %445 = vmatprep.subr.bf16.mxu0 0
  %446 = vmatpush1.bf16.msra.mxu0 %v155
  %447 = vmatprep.subr.bf16.mxu0 0
  %448 = vmatpush1.bf16.msra.mxu0 %v156
  %449 = vmatprep.subr.bf16.mxu0 0
  %450 = vmatpush1.bf16.msra.mxu0 %v182
  %451 = vmatprep.mubr.bf16.mxu0 %v414
  %452 = vmatmul.mubr.bf16.gmra.mrb[0].mxu0 %v407
  %v453 = vpop.f32.mrb[0].mxu0
  %v454 = vadd.f32 0.0, %v453
  %v455 = vpop.f32.mrb[0].mxu0
  %v456 = vpop.f32.mrb[0].mxu0
  %v457 = vadd.f32 0.0, %v456
  %v458 = vpop.f32.mrb[0].mxu0
  %459 = vmatprep.mubr.bf16.mxu0 %v417
  %460 = vmatmul.mubr.bf16.gmra.mrb[0].mxu0 %v409
  %v461 = vpop.f32.mrb[0].mxu0
  %v462 = vadd.f32 0.0, %v461
  %v463 = vpop.f32.mrb[0].mxu0
  %v464 = vpop.f32.mrb[0].mxu0
  %v465 = vadd.f32 0.0, %v464
  %v466 = vpop.f32.mrb[0].mxu0
  %467 = vdwg.mxu0
  %v468 = vmax.f32 %v377, %v454
  %v469 = vmax.f32 %v380, %v457
  %v470 = vmax.f32 %v385, %v462
  %v471 = vmax.f32 %v388, %v465
  %v472 = vmax.f32 %v310, %v468
  %v473 = vmax.f32 %v311, %v469
  %v474 = vmax.f32 %v312, %v470
  %v475 = vmax.f32 %v313, %v471
  %v476 = vld [vmem:[%s5] sm:$0x1]
  %v478 = vlaneseq
  %v479 = vshrl.u32 %v478, 7
  %v480 = vsub.s32 0, %v479
  %v481 = vrot.slane %v476, %v480
  %v483 = vadd.f32 %v472, %v481
  %v484 = vadd.f32 %v473, %v481
  %v485 = vadd.f32 %v474, %v481
  %v486 = vadd.f32 %v475, %v481
  %v487 = vmax.f32 %v483, 0.0
  %v488 = vmax.f32 %v484, 0.0
  %v489 = vmax.f32 %v485, 0.0
  %v490 = vmax.f32 %v486, 0.0
  %491 = vst [vmem:[%s6] sm:$0xff] %v487
  %492 = vst [vmem:[%s6 + $0x8] sm:$0xff] %v488
  %493 = vst [vmem:[%s6 + $0x10] sm:$0xff] %v489
  %494 = vst [vmem:[%s6 + $0x18] sm:$0xff] %v490
  // Predicated region
  $region26: #{_lambda_.12} parent=0 // pred_check
    _
  $region27: #{_lambda_.12} parent=0 // pred_check_branch
    %496 = sbr.rel (0) target = $region29
  $region28: #{_lambda_.12} parent=0 // pred_region
    _
  $region29: #{_lambda_.12} parent=0 // pred_fallthru
    _
  // Predicated region
  $region30: #{_lambda_.12} parent=0 // pred_check
    _
  $region31: #{_lambda_.12} parent=0 // pred_check_branch
    %498 = sbr.rel (0) target = $region33
  $region32: #{_lambda_.12} parent=0 // pred_region
    _
  $region33: #{_lambda_.12} parent=0 // pred_fallthru
    _

// kernel: _lambda_.13
$region0: #{_lambda_.13}
  #allocation0 [shape = 'u32[]', space=smem, size = 0x4, offset = 0x4, fixed_abs, tag = 'smem constant byte address 0x4 - core index']
  #allocation1 [shape = 'u32[144,128]{1,0:T(1,128)}', space=vmem, size = 0x12000, scoped, tag = 'internal scratch']
  %s0 = inlined_call_operand.vmem [shape: bf16[8,320], index: 0, kind: input, shape index: {}]
  %s1 = inlined_call_operand.vmem [shape: bf16[320,128], index: 1, kind: input, shape index: {}]
  %s2 = inlined_call_operand.vmem [shape: f32[1,128], index: 2, kind: input, shape index: {}]
  %s3 = inlined_call_operand.vmem [shape: bf16[128,128], index: 3, kind: input, shape index: {}]
  %s4 = inlined_call_operand.vmem [shape: f32[1,128], index: 4, kind: input, shape index: {}]
  %s5 = inlined_call_operand.vmem [shape: f32[8,128], index: 5, kind: output, shape index: {}]
  %s6 = sld [smem:[#allocation0]]
  $region30: #{_lambda_.13} parent=0
    _
  %s8 = ssub.s32 1, %s6
  %s9 = scalar_select 0, %s8, %s6
  // Predicated region
  $region2: #{_lambda_.13} parent=0 // pred_check
    _
  $region3: #{_lambda_.13} parent=0 // pred_check_branch
    %11 = sbr.rel (0) target = $region5
  $region4: #{_lambda_.13} parent=0 // pred_region
    _
  $region5: #{_lambda_.13} parent=0 // pred_fallthru
    _
  // Predicated region
  $region6: #{_lambda_.13} parent=0 // pred_check
    _
  $region7: #{_lambda_.13} parent=0 // pred_check_branch
    %13 = sbr.rel (0) target = $region9
  $region8: #{_lambda_.13} parent=0 // pred_region
    _
  $region9: #{_lambda_.13} parent=0 // pred_fallthru
    _
  // Predicated region
  $region10: #{_lambda_.13} parent=0 // pred_check
    _
  $region11: #{_lambda_.13} parent=0 // pred_check_branch
    %15 = sbr.rel (0) target = $region13
  $region12: #{_lambda_.13} parent=0 // pred_region
    _
  $region13: #{_lambda_.13} parent=0 // pred_fallthru
    _
  // Predicated region
  $region14: #{_lambda_.13} parent=0 // pred_check
    _
  $region15: #{_lambda_.13} parent=0 // pred_check_branch
    %17 = sbr.rel (0) target = $region17
  $region16: #{_lambda_.13} parent=0 // pred_region
    _
  $region17: #{_lambda_.13} parent=0 // pred_fallthru
    _
  // Predicated region
  $region18: #{_lambda_.13} parent=0 // pred_check
    _
  $region19: #{_lambda_.13} parent=0 // pred_check_branch
    %19 = sbr.rel (0) target = $region21
  $region20: #{_lambda_.13} parent=0 // pred_region
    _
  $region21: #{_lambda_.13} parent=0 // pred_fallthru
    _
  %v21 = vld [vmem:[%s0] sm:$0xff]
  %v22 = vld [vmem:[%s0 + $0x8] sm:$0xf]
  %v23 = vld [vmem:[%s1] sm:$0xf]
  %v24 = vld [vmem:[%s1 + $0x4] sm:$0xf]
  %v25 = vld [vmem:[%s1 + $0x8] sm:$0xf]
  %v26 = vld [vmem:[%s1 + $0xc] sm:$0xf]
  %v27 = vld [vmem:[%s1 + $0x10] sm:$0xf]
  %v28 = vld [vmem:[%s1 + $0x14] sm:$0xf]
  %v29 = vld [vmem:[%s1 + $0x18] sm:$0xf]
  %v30 = vld [vmem:[%s1 + $0x1c] sm:$0xf]
  %v31 = vld [vmem:[%s1 + $0x20] sm:$0xf]
  %v32 = vld [vmem:[%s1 + $0x24] sm:$0xf]
  %v33 = vld [vmem:[%s1 + $0x28] sm:$0xf]
  %v34 = vld [vmem:[%s1 + $0x2c] sm:$0xf]
  %v35 = vld [vmem:[%s1 + $0x30] sm:$0xf]
  %v36 = vld [vmem:[%s1 + $0x34] sm:$0xf]
  %v37 = vld [vmem:[%s1 + $0x38] sm:$0xf]
  %v38 = vld [vmem:[%s1 + $0x3c] sm:$0xf]
  %v39 = vld [vmem:[%s1 + $0x40] sm:$0xf]
  %v40 = vld [vmem:[%s1 + $0x44] sm:$0xf]
  %v41 = vld [vmem:[%s1 + $0x48] sm:$0xf]
  %v42 = vld [vmem:[%s1 + $0x4c] sm:$0xf]
  %v43 = vld [vmem:[%s1 + $0x50] sm:$0xf]
  %v44 = vld [vmem:[%s1 + $0x54] sm:$0xf]
  %v45 = vld [vmem:[%s1 + $0x58] sm:$0xf]
  %v46 = vld [vmem:[%s1 + $0x5c] sm:$0xf]
  %v47 = vld [vmem:[%s1 + $0x60] sm:$0xf]
  %v48 = vld [vmem:[%s1 + $0x64] sm:$0xf]
  %v49 = vld [vmem:[%s1 + $0x68] sm:$0xf]
  %v50 = vld [vmem:[%s1 + $0x6c] sm:$0xf]
  %v51 = vld [vmem:[%s1 + $0x70] sm:$0xf]
  %v52 = vld [vmem:[%s1 + $0x74] sm:$0xf]
  %v53 = vld [vmem:[%s1 + $0x78] sm:$0xf]
  %v54 = vld [vmem:[%s1 + $0x7c] sm:$0xf]
  %v55 = vld [vmem:[%s1 + $0x80] sm:$0xf]
  %v56 = vld [vmem:[%s1 + $0x84] sm:$0xf]
  %v57 = vld [vmem:[%s1 + $0x88] sm:$0xf]
  %v58 = vld [vmem:[%s1 + $0x8c] sm:$0xf]
  %v59 = vld [vmem:[%s1 + $0x90] sm:$0xf]
  %v60 = vld [vmem:[%s1 + $0x94] sm:$0xf]
  %v61 = vld [vmem:[%s1 + $0x98] sm:$0xf]
  %v62 = vld [vmem:[%s1 + $0x9c] sm:$0xf]
  %v63 = vld [vmem:[%s2] sm:$0x1]
  %v65 = vlaneseq
  %v66 = vshrl.u32 %v65, 7
  %v67 = vsub.s32 0, %v66
  %v68 = vrot.slane %v63, %v67
  %v72 = vunpack.c.l.b16 %v21
  %v73 = vunpack.c.h.b16 %v21
  %v74 = vunpack.c.l.b16 %v22
  %v75 = vpack.c.b16 %v72, %v72
  %v76 = vpack.c.b16 %v73, %v73
  %v77 = vpack.c.b16 %v74, %v74
  %v120 = vunpack.c.l.b16 %v23
  %v121 = vunpack.c.l.b16 %v24
  %v122 = vunpack.c.l.b16 %v25
  %v123 = vunpack.c.l.b16 %v26
  %v124 = vunpack.c.l.b16 %v27
  %v125 = vunpack.c.l.b16 %v28
  %v126 = vunpack.c.l.b16 %v29
  %v127 = vunpack.c.l.b16 %v30
  %v128 = vunpack.c.l.b16 %v31
  %v129 = vunpack.c.l.b16 %v32
  %v130 = vunpack.c.l.b16 %v33
  %v131 = vunpack.c.l.b16 %v34
  %v132 = vunpack.c.l.b16 %v35
  %v133 = vunpack.c.l.b16 %v36
  %v134 = vunpack.c.l.b16 %v37
  %v135 = vunpack.c.l.b16 %v38
  %v136 = vunpack.c.l.b16 %v39
  %v137 = vunpack.c.l.b16 %v40
  %v138 = vunpack.c.l.b16 %v41
  %v139 = vunpack.c.l.b16 %v42
  %v140 = vunpack.c.l.b16 %v43
  %v141 = vunpack.c.l.b16 %v44
  %v142 = vunpack.c.l.b16 %v45
  %v143 = vunpack.c.l.b16 %v46
  %v144 = vunpack.c.l.b16 %v47
  %v145 = vunpack.c.l.b16 %v48
  %v146 = vunpack.c.l.b16 %v49
  %v147 = vunpack.c.l.b16 %v50
  %v148 = vunpack.c.l.b16 %v51
  %v149 = vunpack.c.l.b16 %v52
  %v150 = vunpack.c.l.b16 %v53
  %v151 = vunpack.c.l.b16 %v54
  %v152 = vunpack.c.l.b16 %v55
  %v153 = vunpack.c.l.b16 %v56
  %v154 = vunpack.c.l.b16 %v57
  %v155 = vunpack.c.l.b16 %v58
  %v156 = vunpack.c.l.b16 %v59
  %v157 = vunpack.c.l.b16 %v60
  %v158 = vunpack.c.l.b16 %v61
  %v159 = vunpack.c.l.b16 %v62
  %v160 = vpack.c.b16 %v121, %v120
  %v161 = vpack.c.b16 %v123, %v122
  %v162 = vpack.c.b16 %v125, %v124
  %v163 = vpack.c.b16 %v127, %v126
  %v164 = vpack.c.b16 %v129, %v128
  %v165 = vpack.c.b16 %v131, %v130
  %v166 = vpack.c.b16 %v133, %v132
  %v167 = vpack.c.b16 %v135, %v134
  %v168 = vpack.c.b16 %v137, %v136
  %v169 = vpack.c.b16 %v139, %v138
  %v170 = vpack.c.b16 %v141, %v140
  %v171 = vpack.c.b16 %v143, %v142
  %v172 = vpack.c.b16 %v145, %v144
  %v173 = vpack.c.b16 %v147, %v146
  %v174 = vpack.c.b16 %v149, %v148
  %v175 = vpack.c.b16 %v151, %v150
  %v176 = vpack.c.b16 %v153, %v152
  %v177 = vpack.c.b16 %v155, %v154
  %v178 = vpack.c.b16 %v157, %v156
  %v179 = vpack.c.b16 %v159, %v158
  %vm200 = vcmask 523264
  %v202 = vsel %vm200, %v77, 0
  %204 = vmatprep.subr.bf16.mxu0 0
  %205 = vmatpush1.bf16.msra.mxu0 %v160
  %206 = vmatprep.subr.bf16.mxu0 0
  %207 = vmatpush1.bf16.msra.mxu0 %v161
  %208 = vmatprep.subr.bf16.mxu0 0
  %209 = vmatpush1.bf16.msra.mxu0 %v162
  %210 = vmatprep.subr.bf16.mxu0 0
  %211 = vmatpush1.bf16.msra.mxu0 %v163
  %212 = vmatprep.subr.bf16.mxu0 0
  %213 = vmatpush1.bf16.msra.mxu0 %v164
  %214 = vmatprep.subr.bf16.mxu0 0
  %215 = vmatpush1.bf16.msra.mxu0 %v165
  %216 = vmatprep.subr.bf16.mxu0 0
  %217 = vmatpush1.bf16.msra.mxu0 %v166
  %218 = vmatprep.subr.bf16.mxu0 0
  %219 = vmatpush1.bf16.msra.mxu0 %v167
  %220 = vmatprep.subr.bf16.mxu0 0
  %221 = vmatpush1.bf16.msra.mxu0 %v168
  %222 = vmatprep.subr.bf16.mxu0 0
  %223 = vmatpush1.bf16.msra.mxu0 %v169
  %224 = vmatprep.subr.bf16.mxu0 0
  %225 = vmatpush1.bf16.msra.mxu0 %v170
  %226 = vmatprep.subr.bf16.mxu0 0
  %227 = vmatpush1.bf16.msra.mxu0 %v171
  %228 = vmatprep.subr.bf16.mxu0 0
  %229 = vmatpush1.bf16.msra.mxu0 %v172
  %230 = vmatprep.subr.bf16.mxu0 0
  %231 = vmatpush1.bf16.msra.mxu0 %v173
  %232 = vmatprep.subr.bf16.mxu0 0
  %233 = vmatpush1.bf16.msra.mxu0 %v174
  %234 = vmatprep.subr.bf16.mxu0 0
  %235 = vmatpush1.bf16.msra.mxu0 %v175
  %236 = vmatprep.mubr.bf16.mxu0 %v76
  %237 = vmatmul.mubr.bf16.gmra.mrb[0].mxu0 %v75
  %v238 = vpop.f32.mrb[0].mxu0
  %v239 = vadd.f32 %v68, %v238
  %v240 = vpop.f32.mrb[0].mxu0
  %v241 = vpop.f32.mrb[0].mxu0
  %v242 = vpop.f32.mrb[0].mxu0
  %243 = vdwg.mxu0
  %244 = vmatprep.subr.bf16.mxu0 0
  %245 = vmatpush1.bf16.msra.mxu0 %v176
  %246 = vmatprep.subr.bf16.mxu0 0
  %247 = vmatpush1.bf16.msra.mxu0 %v177
  %248 = vmatprep.subr.bf16.mxu0 0
  %249 = vmatpush1.bf16.msra.mxu0 %v178
  %250 = vmatprep.subr.bf16.mxu0 0
  %251 = vmatpush1.bf16.msra.mxu0 %v179
  %252 = vmatprep.subr.bf16.mxu0 0
  %253 = vmatpush1.bf16.msra.mxu0 0
  %254 = vmatprep.subr.bf16.mxu0 0
  %255 = vmatpush1.bf16.msra.mxu0 0
  %256 = vmatprep.subr.bf16.mxu0 0
  %257 = vmatpush1.bf16.msra.mxu0 0
  %258 = vmatprep.subr.bf16.mxu0 0
  %259 = vmatpush1.bf16.msra.mxu0 0
  %260 = vmatprep.subr.bf16.mxu0 0
  %261 = vmatpush1.bf16.msra.mxu0 0
  %262 = vmatprep.subr.bf16.mxu0 0
  %263 = vmatpush1.bf16.msra.mxu0 0
  %264 = vmatprep.subr.bf16.mxu0 0
  %265 = vmatpush1.bf16.msra.mxu0 0
  %266 = vmatprep.subr.bf16.mxu0 0
  %267 = vmatpush1.bf16.msra.mxu0 0
  %268 = vmatprep.subr.bf16.mxu0 0
  %269 = vmatpush1.bf16.msra.mxu0 0
  %270 = vmatprep.subr.bf16.mxu0 0
  %271 = vmatpush1.bf16.msra.mxu0 0
  %272 = vmatprep.subr.bf16.mxu0 0
  %273 = vmatpush1.bf16.msra.mxu0 0
  %274 = vmatprep.subr.bf16.mxu0 0
  %275 = vmatpush1.bf16.msra.mxu0 0
  %276 = vmatprep.mubr.bf16.mxu0 0
  %277 = vmatmul.mubr.bf16.gmra.mrb[0].mxu0 %v202
  %v278 = vpop.f32.mrb[0].mxu0
  %v279 = vadd.f32 %v239, %v278
  %v280 = vpop.f32.mrb[0].mxu0
  %v281 = vpop.f32.mrb[0].mxu0
  %v282 = vpop.f32.mrb[0].mxu0
  %283 = vdwg.mxu0
  %v284 = vmax.f32 %v279, 0.0
  %v285 = vpack.c.bf16 %v284, %v284
  %v286 = vld [vmem:[%s3] sm:$0xf]
  %v287 = vld [vmem:[%s3 + $0x4] sm:$0xf]
  %v288 = vld [vmem:[%s3 + $0x8] sm:$0xf]
  %v289 = vld [vmem:[%s3 + $0xc] sm:$0xf]
  %v290 = vld [vmem:[%s3 + $0x10] sm:$0xf]
  %v291 = vld [vmem:[%s3 + $0x14] sm:$0xf]
  %v292 = vld [vmem:[%s3 + $0x18] sm:$0xf]
  %v293 = vld [vmem:[%s3 + $0x1c] sm:$0xf]
  %v294 = vld [vmem:[%s3 + $0x20] sm:$0xf]
  %v295 = vld [vmem:[%s3 + $0x24] sm:$0xf]
  %v296 = vld [vmem:[%s3 + $0x28] sm:$0xf]
  %v297 = vld [vmem:[%s3 + $0x2c] sm:$0xf]
  %v298 = vld [vmem:[%s3 + $0x30] sm:$0xf]
  %v299 = vld [vmem:[%s3 + $0x34] sm:$0xf]
  %v300 = vld [vmem:[%s3 + $0x38] sm:$0xf]
  %v301 = vld [vmem:[%s3 + $0x3c] sm:$0xf]
  %v302 = vld [vmem:[%s4] sm:$0x1]
  %v304 = vlaneseq
  %v305 = vshrl.u32 %v304, 7
  %v306 = vsub.s32 0, %v305
  %v307 = vrot.slane %v302, %v306
  %v325 = vunpack.c.l.b16 %v286
  %v326 = vunpack.c.l.b16 %v287
  %v327 = vunpack.c.l.b16 %v288
  %v328 = vunpack.c.l.b16 %v289
  %v329 = vunpack.c.l.b16 %v290
  %v330 = vunpack.c.l.b16 %v291
  %v331 = vunpack.c.l.b16 %v292
  %v332 = vunpack.c.l.b16 %v293
  %v333 = vunpack.c.l.b16 %v294
  %v334 = vunpack.c.l.b16 %v295
  %v335 = vunpack.c.l.b16 %v296
  %v336 = vunpack.c.l.b16 %v297
  %v337 = vunpack.c.l.b16 %v298
  %v338 = vunpack.c.l.b16 %v299
  %v339 = vunpack.c.l.b16 %v300
  %v340 = vunpack.c.l.b16 %v301
  %v341 = vpack.c.b16 %v326, %v325
  %v342 = vpack.c.b16 %v328, %v327
  %v343 = vpack.c.b16 %v330, %v329
  %v344 = vpack.c.b16 %v332, %v331
  %v345 = vpack.c.b16 %v334, %v333
  %v346 = vpack.c.b16 %v336, %v335
  %v347 = vpack.c.b16 %v338, %v337
  %v348 = vpack.c.b16 %v340, %v339
  %357 = vmatprep.subr.bf16.mxu0 0
  %358 = vmatpush1.bf16.msra.mxu0 %v341
  %359 = vmatprep.subr.bf16.mxu0 0
  %360 = vmatpush1.bf16.msra.mxu0 %v342
  %361 = vmatprep.subr.bf16.mxu0 0
  %362 = vmatpush1.bf16.msra.mxu0 %v343
  %363 = vmatprep.subr.bf16.mxu0 0
  %364 = vmatpush1.bf16.msra.mxu0 %v344
  %365 = vmatprep.subr.bf16.mxu0 0
  %366 = vmatpush1.bf16.msra.mxu0 %v345
  %367 = vmatprep.subr.bf16.mxu0 0
  %368 = vmatpush1.bf16.msra.mxu0 %v346
  %369 = vmatprep.subr.bf16.mxu0 0
  %370 = vmatpush1.bf16.msra.mxu0 %v347
  %371 = vmatprep.subr.bf16.mxu0 0
  %372 = vmatpush1.bf16.msra.mxu0 %v348
  %373 = vmatprep.subr.bf16.mxu0 0
  %374 = vmatpush1.bf16.msra.mxu0 0
  %375 = vmatprep.subr.bf16.mxu0 0
  %376 = vmatpush1.bf16.msra.mxu0 0
  %377 = vmatprep.subr.bf16.mxu0 0
  %378 = vmatpush1.bf16.msra.mxu0 0
  %379 = vmatprep.subr.bf16.mxu0 0
  %380 = vmatpush1.bf16.msra.mxu0 0
  %381 = vmatprep.subr.bf16.mxu0 0
  %382 = vmatpush1.bf16.msra.mxu0 0
  %383 = vmatprep.subr.bf16.mxu0 0
  %384 = vmatpush1.bf16.msra.mxu0 0
  %385 = vmatprep.subr.bf16.mxu0 0
  %386 = vmatpush1.bf16.msra.mxu0 0
  %387 = vmatprep.subr.bf16.mxu0 0
  %388 = vmatpush1.bf16.msra.mxu0 0
  %389 = vmatprep.mubr.bf16.mxu0 0
  %390 = vmatmul.mubr.bf16.gmra.mrb[0].mxu0 %v285
  %v391 = vpop.f32.mrb[0].mxu0
  %v392 = vadd.f32 %v307, %v391
  %v393 = vpop.f32.mrb[0].mxu0
  %v394 = vpop.f32.mrb[0].mxu0
  %v395 = vpop.f32.mrb[0].mxu0
  %396 = vdwg.mxu0
  %v397 = vlaneseq
  %v398 = vand.u32 %v397, 127
  %vm399 = vcmp.lt.s32.totalorder %v398, 10
  %v400 = vsel %vm399, %v392, -1e+30
  %401 = vmax.xlane.f32.xlu0 %v400
  %v402 = vpop.xlane.xlu0 %401
  %v403 = vsub.f32 %v400, %v402
  %v404 = vmul.f32 %v403, 1.442695
  %v405 = vpow.pop %v404
  %406 = vadd.xlane.f32.xlu0 %v405
  %v407 = vpop.xlane.xlu0 %406
  %v408 = vlog2.pop %v407
  %v409 = vmul.f32 %v408, 0.6931472
  %v410 = vsub.f32 %v403, %v409
  %411 = vst [vmem:[%s5] sm:$0xff] %v410
  // Predicated region
  $region22: #{_lambda_.13} parent=0 // pred_check
    _
  $region23: #{_lambda_.13} parent=0 // pred_check_branch
    %413 = sbr.rel (0) target = $region25
  $region24: #{_lambda_.13} parent=0 // pred_region
    _
  $region25: #{_lambda_.13} parent=0 // pred_fallthru
    _
  // Predicated region
  $region26: #{_lambda_.13} parent=0 // pred_check
    _
  $region27: #{_lambda_.13} parent=0 // pred_check_branch
    %415 = sbr.rel (0) target = $region29
  $region28: #{_lambda_.13} parent=0 // pred_region
    _
  $region29: #{_lambda_.13} parent=0 // pred_fallthru
    _

</llo_original>
